<compile_context>
chip_gen: v7x
topology: tpu7x:2x2x1
jax: 0.10.0
libtpu: 0.0.40
codegen_flags: <defaults>
</compile_context>

<pallas_src>
import functools

import jax
import jax.numpy as jnp
from jax.experimental import pallas as pl
from jax.experimental.pallas import tpu as pltpu

FEAT = 1536          # mixnet_l final feature channels
NUM_CLASS = 2
PAD_CLASS = 128      # lane-dense output width (sliced back to NUM_CLASS in wrapper)


# ---------------------------------------------------------------- kernel ----
def _fused_kernel(x_ref, w_ref, b_ref, fcw_ref, fcb_ref, o_ref, acc_ref, *, inv_hw):
    """Fused backbone stand-in (1x1 conv + ReLU) -> global avg pool -> fc.

    x_ref  : (1, tile_hw, Cin)  channels-last input rows for one batch element
    w_ref  : (Cin, FEAT)        1x1 conv weight
    b_ref  : (1, FEAT)          1x1 conv bias
    fcw_ref: (FEAT, PAD_CLASS)  fc weight, zero-padded to a lane-dense width
    fcb_ref: (1, PAD_CLASS)     fc bias, zero-padded
    o_ref  : (1, 1, PAD_CLASS)  per-batch logits (lane-dense)
    acc_ref: (8, FEAT) f32      running pooled-sum accumulator (VMEM scratch)
    """
    h = pl.program_id(1)

    @pl.when(h == 0)
    def _init():
        acc_ref[...] = jnp.zeros_like(acc_ref)

    x = x_ref[0]                               # (tile_hw, Cin)
    tile_hw, cin = x.shape

    # Backbone stand-in: 1x1 conv + ReLU.  Cin is tiny, so use `cin` VPU
    # broadcast-FMAs over a lane-dense (tile_hw, FEAT) tile — no MXU.
    y = x[:, 0:1] * w_ref[0:1, :] + b_ref[...]          # (tile_hw, FEAT)
    for c in range(1, cin):                              # static unroll (cin ~ 4)
        y = y + x[:, c:c + 1] * w_ref[c:c + 1, :]
    y = jnp.maximum(y, 0.0)

    # Streaming global-average-pool: accumulate this tile's row-sums, keeping
    # the reduction sublane-aligned (VPU adds only; no per-tile XLU reduce).
    if tile_hw % 8 == 0:
        acc_ref[...] += y.reshape(tile_hw // 8, 8, y.shape[-1]).sum(axis=0)
    else:
        acc_ref[0:1, :] = acc_ref[0:1, :] + jnp.sum(y, axis=0, keepdims=True)

    @pl.when(h == pl.num_programs(1) - 1)
    def _finalize():
        pooled = acc_ref[...].sum(axis=0, keepdims=True) * inv_hw        # (1, FEAT)
        logits = jnp.dot(pooled, fcw_ref[...],
                         preferred_element_type=jnp.float32) + fcb_ref[...]
        # Dropout(p=0.25) follows fc in the PyTorch forward; identity in eval mode.
        # TODO(synk): train-mode dropout (pltpu.prng_seed / prng_random_bits) not implemented.
        o_ref[...] = logits[None]                                        # (1, 1, PAD_CLASS)


# --------------------------------------------------------------- wrapper ----
def _pick_hw_tile(hw, cap=512):
    """Largest power-of-two multiple-of-8 tile <= cap that divides hw (else hw)."""
    t = cap
    while t >= 8:
        if t <= hw and hw % t == 0:
            return t
        t //= 2
    return hw


def cnn_mix2_forward(x_nchw, params):
    # TODO(synk): mixnet_l() is not defined in the provided module source; a 1x1
    # conv + ReLU producing 1536 channels stands in for the backbone so that the
    # avgpool/flatten/fc/dropout head matches the PyTorch forward exactly.
    B, Cin, H, W = x_nchw.shape
    HW = H * W
    x_cl = jnp.transpose(x_nchw, (0, 2, 3, 1)).reshape(B, HW, Cin)

    bw, bb = params["backbone_w"], params["backbone_b"]      # (Cin, FEAT), (1, FEAT)
    fcw, fcb = params["fc_w"], params["fc_b"]                 # (FEAT, 2), (1, 2)

    # Zero-pad fc weights/bias so the kernel output is lane-dense (width 128).
    fcw_pad = jnp.zeros((FEAT, PAD_CLASS), fcw.dtype).at[:, :NUM_CLASS].set(fcw)
    fcb_pad = jnp.zeros((1, PAD_CLASS), fcb.dtype).at[:, :NUM_CLASS].set(fcb)

    tile_hw = _pick_hw_tile(HW)
    n_h = HW // tile_hw if HW % tile_hw == 0 else 1
    grid = (B, n_h)

    kernel = functools.partial(_fused_kernel, inv_hw=1.0 / HW)

    cost = pl.CostEstimate(
        flops=2 * B * HW * Cin * FEAT + 2 * B * FEAT * PAD_CLASS,
        transcendentals=0,
        bytes_accessed=(x_cl.size + bw.size + bb.size + fcw_pad.size
                        + fcb_pad.size + B * PAD_CLASS) * 4,
    )

    out_pad = pl.pallas_call(
        kernel,
        out_shape=jax.ShapeDtypeStruct((B, 1, PAD_CLASS), jnp.float32),
        grid_spec=pltpu.PrefetchScalarGridSpec(
            num_scalar_prefetch=0,
            grid=grid,
            in_specs=[
                pl.BlockSpec((1, tile_hw, Cin), lambda b, h: (b, h, 0)),
                pl.BlockSpec((Cin, FEAT), lambda b, h: (0, 0)),
                pl.BlockSpec((1, FEAT), lambda b, h: (0, 0)),
                pl.BlockSpec((FEAT, PAD_CLASS), lambda b, h: (0, 0)),
                pl.BlockSpec((1, PAD_CLASS), lambda b, h: (0, 0)),
            ],
            out_specs=pl.BlockSpec((1, 1, PAD_CLASS), lambda b, h: (b, 0, 0)),
            scratch_shapes=[pltpu.VMEM((8, FEAT), jnp.float32)],
        ),
        compiler_params=pltpu.CompilerParams(
            dimension_semantics=("parallel", "arbitrary")),
        cost_estimate=cost,
    )(x_cl, bw, bb, fcw_pad, fcb_pad)

    return out_pad[:, 0, :NUM_CLASS]


def _reference_forward(x_nchw, params):
    B, Cin, H, W = x_nchw.shape
    x_cl = jnp.transpose(x_nchw, (0, 2, 3, 1)).reshape(B, H * W, Cin)
    feats = jnp.maximum(
        jnp.einsum("bnc,cf->bnf", x_cl, params["backbone_w"]) + params["backbone_b"],
        0.0)
    pooled = feats.mean(axis=1)
    return pooled @ params["fc_w"] + params["fc_b"]


def init_params(key):
    k1, k2, k3, k4 = jax.random.split(key, 4)
    return {
        "backbone_w": jax.random.normal(k1, (4, FEAT), jnp.float32) * 0.05,
        "backbone_b": jax.random.normal(k2, (1, FEAT), jnp.float32) * 0.05,
        "fc_w": jax.random.normal(k3, (FEAT, NUM_CLASS), jnp.float32) * 0.02,
        "fc_b": jax.random.normal(k4, (1, NUM_CLASS), jnp.float32) * 0.02,
    }


if __name__ == "__main__":
    key = jax.random.PRNGKey(0)
    kp, kx = jax.random.split(key)
    params = init_params(kp)
    x = jax.random.normal(kx, (2, 4, 16, 16), jnp.float32)   # NCHW, as in PyTorch

    out = cnn_mix2_forward(x, params)
    out = jax.block_until_ready(out)
    assert out.shape == (2, NUM_CLASS), out.shape

    ref = jax.block_until_ready(_reference_forward(x, params))
    assert jnp.allclose(out, ref, rtol=1e-3, atol=1e-3), (out, ref)

    print("KERNEL_OK")
</pallas_src>

<mosaic_0001>
module attributes {stable_mosaic.version = 11 : i64} {
  func.func @_fused_kernel(%arg0: i32, %arg1: i32, %arg2: memref<1x256x4xf32, #tpu.memory_space<vmem>>, %arg3: memref<4x1536xf32, #tpu.memory_space<vmem>>, %arg4: memref<1x1536xf32, #tpu.memory_space<vmem>>, %arg5: memref<1536x128xf32, #tpu.memory_space<vmem>>, %arg6: memref<1x128xf32, #tpu.memory_space<vmem>>, %arg7: memref<1x1x128xf32, #tpu.memory_space<vmem>>, %arg8: memref<8x1536xf32, #tpu.memory_space<vmem>>) attributes {dimension_semantics = [#tpu.dimension_semantics<parallel>, #tpu.dimension_semantics<arbitrary>], iteration_bounds = array<i64: 2, 1>, scalar_prefetch = 0 : i64, scratch_operands = 1 : i64, tpu.core_type = #tpu.core_type<tc>, window_params = [{transform_indices = @transform_0, window_bounds = array<i64: 1, 256, 4>}, {pipeline_mode = #tpu.pipeline_mode<synchronous>, transform_indices = @transform_1, window_bounds = array<i64: 4, 1536>}, {pipeline_mode = #tpu.pipeline_mode<synchronous>, transform_indices = @transform_2, window_bounds = array<i64: 1, 1536>}, {pipeline_mode = #tpu.pipeline_mode<synchronous>, transform_indices = @transform_3, window_bounds = array<i64: 1536, 128>}, {pipeline_mode = #tpu.pipeline_mode<synchronous>, transform_indices = @transform_4, window_bounds = array<i64: 1, 128>}, {transform_indices = @transform_5, window_bounds = array<i64: 1, 1, 128>}]} {
    %c0_i32 = arith.constant 0 : i32
    %0 = arith.cmpi eq, %arg1, %c0_i32 : i32
    %1 = arith.extui %0 : i1 to i32
    %c0_i32_0 = arith.constant 0 : i32
    %2 = arith.cmpi ne, %1, %c0_i32_0 : i32
    scf.if %2 {
      %cst_17 = arith.constant 0.000000e+00 : f32
      %41 = vector.broadcast %cst_17 : f32 to vector<8x1536xf32>
      %c0_18 = arith.constant 0 : index
      %c0_19 = arith.constant 0 : index
      %42 = vector.load %arg8[%c0_18, %c0_19] : memref<8x1536xf32, #tpu.memory_space<vmem>>, vector<8x1536xf32>
      tpu.vector_store %arg8[%c0_18, %c0_19], %41 {strides = array<i32>} : memref<8x1536xf32, #tpu.memory_space<vmem>>, vector<8x1536xf32>,
    } else {
    }
    %c0 = arith.constant 0 : index
    %c0_1 = arith.constant 0 : index
    %c0_2 = arith.constant 0 : index
    %3 = vector.load %arg2[%c0, %c0_1, %c0_2] : memref<1x256x4xf32, #tpu.memory_space<vmem>>, vector<1x256x4xf32>
    %4 = vector.shape_cast %3 : vector<1x256x4xf32> to vector<256x4xf32>
    %5 = vector.extract_strided_slice %4 {offsets = [0, 0], sizes = [256, 1], strides = [1, 1]} : vector<256x4xf32> to vector<256x1xf32>
    %c0_3 = arith.constant 0 : index
    %c0_4 = arith.constant 0 : index
    %6 = vector.load %arg3[%c0_3, %c0_4] : memref<4x1536xf32, #tpu.memory_space<vmem>>, vector<1x1536xf32>
    %7 = vector.broadcast %5 : vector<256x1xf32> to vector<256x1536xf32>
    %8 = vector.broadcast %6 : vector<1x1536xf32> to vector<256x1536xf32>
    %9 = arith.mulf %7, %8 : vector<256x1536xf32>
    %c0_5 = arith.constant 0 : index
    %c0_6 = arith.constant 0 : index
    %10 = vector.load %arg4[%c0_5, %c0_6] : memref<1x1536xf32, #tpu.memory_space<vmem>>, vector<1x1536xf32>
    %11 = vector.broadcast %10 : vector<1x1536xf32> to vector<256x1536xf32>
    %12 = arith.addf %9, %11 : vector<256x1536xf32>
    %13 = vector.extract_strided_slice %4 {offsets = [0, 1], sizes = [256, 1], strides = [1, 1]} : vector<256x4xf32> to vector<256x1xf32>
    %c1 = arith.constant 1 : index
    %c0_7 = arith.constant 0 : index
    %14 = vector.load %arg3[%c1, %c0_7] : memref<4x1536xf32, #tpu.memory_space<vmem>>, vector<1x1536xf32>
    %15 = vector.broadcast %13 : vector<256x1xf32> to vector<256x1536xf32>
    %16 = vector.broadcast %14 : vector<1x1536xf32> to vector<256x1536xf32>
    %17 = arith.mulf %15, %16 : vector<256x1536xf32>
    %18 = arith.addf %12, %17 : vector<256x1536xf32>
    %19 = vector.extract_strided_slice %4 {offsets = [0, 2], sizes = [256, 1], strides = [1, 1]} : vector<256x4xf32> to vector<256x1xf32>
    %c2 = arith.constant 2 : index
    %c0_8 = arith.constant 0 : index
    %20 = vector.load %arg3[%c2, %c0_8] : memref<4x1536xf32, #tpu.memory_space<vmem>>, vector<1x1536xf32>
    %21 = vector.broadcast %19 : vector<256x1xf32> to vector<256x1536xf32>
    %22 = vector.broadcast %20 : vector<1x1536xf32> to vector<256x1536xf32>
    %23 = arith.mulf %21, %22 : vector<256x1536xf32>
    %24 = arith.addf %18, %23 : vector<256x1536xf32>
    %25 = vector.extract_strided_slice %4 {offsets = [0, 3], sizes = [256, 1], strides = [1, 1]} : vector<256x4xf32> to vector<256x1xf32>
    %c3 = arith.constant 3 : index
    %c0_9 = arith.constant 0 : index
    %26 = vector.load %arg3[%c3, %c0_9] : memref<4x1536xf32, #tpu.memory_space<vmem>>, vector<1x1536xf32>
    %27 = vector.broadcast %25 : vector<256x1xf32> to vector<256x1536xf32>
    %28 = vector.broadcast %26 : vector<1x1536xf32> to vector<256x1536xf32>
    %29 = arith.mulf %27, %28 : vector<256x1536xf32>
    %30 = arith.addf %24, %29 : vector<256x1536xf32>
    %cst = arith.constant 0.000000e+00 : f32
    %31 = vector.broadcast %cst : f32 to vector<256x1536xf32>
    %32 = arith.maximumf %30, %31 : vector<256x1536xf32>
    %c0_10 = arith.constant 0 : index
    %c0_11 = arith.constant 0 : index
    %33 = vector.load %arg8[%c0_10, %c0_11] : memref<8x1536xf32, #tpu.memory_space<vmem>>, vector<8x1536xf32>
    %34 = vector.shape_cast %32 : vector<256x1536xf32> to vector<32x8x1536xf32>
    %cst_12 = arith.constant dense<0.000000e+00> : vector<8x1536xf32>
    %35 = vector.multi_reduction <add>, %34, %cst_12 [0] : vector<32x8x1536xf32> to vector<8x1536xf32>
    %36 = arith.addf %33, %35 : vector<8x1536xf32>
    %c0_13 = arith.constant 0 : index
    %c0_14 = arith.constant 0 : index
    %37 = vector.load %arg8[%c0_13, %c0_14] : memref<8x1536xf32, #tpu.memory_space<vmem>>, vector<8x1536xf32>
    tpu.vector_store %arg8[%c0_13, %c0_14], %36 {strides = array<i32>} : memref<8x1536xf32, #tpu.memory_space<vmem>>, vector<8x1536xf32>,
    %c0_i32_15 = arith.constant 0 : i32
    %38 = arith.cmpi eq, %arg1, %c0_i32_15 : i32
    %39 = arith.extui %38 : i1 to i32
    %c0_i32_16 = arith.constant 0 : i32
    %40 = arith.cmpi ne, %39, %c0_i32_16 : i32
    scf.if %40 {
      %c0_17 = arith.constant 0 : index
      %c0_18 = arith.constant 0 : index
      %41 = vector.load %arg8[%c0_17, %c0_18] : memref<8x1536xf32, #tpu.memory_space<vmem>>, vector<8x1536xf32>
      %cst_19 = arith.constant dense<0.000000e+00> : vector<1536xf32>
      %42 = vector.multi_reduction <add>, %41, %cst_19 [0] : vector<8x1536xf32> to vector<1536xf32>
      %43 = vector.shape_cast %42 : vector<1536xf32> to vector<1x1536xf32>
      %cst_20 = arith.constant 3.906250e-03 : f32
      %44 = vector.broadcast %cst_20 : f32 to vector<1x1536xf32>
      %45 = arith.mulf %43, %44 : vector<1x1536xf32>
      %c0_21 = arith.constant 0 : index
      %c0_22 = arith.constant 0 : index
      %46 = vector.load %arg5[%c0_21, %c0_22] : memref<1536x128xf32, #tpu.memory_space<vmem>>, vector<1536x128xf32>
      %cst_23 = arith.constant dense<0.000000e+00> : vector<1x128xf32>
      %47 = tpu.matmul %45, %46, %cst_23 {dimension_numbers = #tpu.dot_dimension_numbers<[1], [0], [0], [1], [0, 0, 1, 1], [], []>} : vector<1x1536xf32>, vector<1536x128xf32>, vector<1x128xf32> -> vector<1x128xf32>
      %c0_24 = arith.constant 0 : index
      %c0_25 = arith.constant 0 : index
      %48 = vector.load %arg6[%c0_24, %c0_25] : memref<1x128xf32, #tpu.memory_space<vmem>>, vector<1x128xf32>
      %49 = arith.addf %47, %48 : vector<1x128xf32>
      %50 = vector.shape_cast %49 : vector<1x128xf32> to vector<1x1x128xf32>
      %c0_26 = arith.constant 0 : index
      %c0_27 = arith.constant 0 : index
      %c0_28 = arith.constant 0 : index
      %51 = vector.load %arg7[%c0_26, %c0_27, %c0_28] : memref<1x1x128xf32, #tpu.memory_space<vmem>>, vector<1x1x128xf32>
      tpu.vector_store %arg7[%c0_26, %c0_27, %c0_28], %50 {strides = array<i32>} : memref<1x1x128xf32, #tpu.memory_space<vmem>>, vector<1x1x128xf32>,
    } else {
    }
    return
  }
  func.func @transform_0(%arg0: i32, %arg1: i32) -> (i32, i32, i32) {
    %c0_i32 = arith.constant 0 : i32
    %c0_i32_0 = arith.constant 0 : i32
    return %arg0, %arg1, %c0_i32 : i32, i32, i32
  }
  func.func @transform_1(%arg0: i32, %arg1: i32) -> (i32, i32) {
    %c0_i32 = arith.constant 0 : i32
    %c0_i32_0 = arith.constant 0 : i32
    %c0_i32_1 = arith.constant 0 : i32
    return %c0_i32, %c0_i32_0 : i32, i32
  }
  func.func @transform_2(%arg0: i32, %arg1: i32) -> (i32, i32) {
    %c0_i32 = arith.constant 0 : i32
    %c0_i32_0 = arith.constant 0 : i32
    %c0_i32_1 = arith.constant 0 : i32
    return %c0_i32, %c0_i32_0 : i32, i32
  }
  func.func @transform_3(%arg0: i32, %arg1: i32) -> (i32, i32) {
    %c0_i32 = arith.constant 0 : i32
    %c0_i32_0 = arith.constant 0 : i32
    %c0_i32_1 = arith.constant 0 : i32
    return %c0_i32, %c0_i32_0 : i32, i32
  }
  func.func @transform_4(%arg0: i32, %arg1: i32) -> (i32, i32) {
    %c0_i32 = arith.constant 0 : i32
    %c0_i32_0 = arith.constant 0 : i32
    %c0_i32_1 = arith.constant 0 : i32
    return %c0_i32, %c0_i32_0 : i32, i32
  }
  func.func @transform_5(%arg0: i32, %arg1: i32) -> (i32, i32, i32) {
    %c0_i32 = arith.constant 0 : i32
    %c0_i32_0 = arith.constant 0 : i32
    %c0_i32_1 = arith.constant 0 : i32
    return %arg0, %c0_i32, %c0_i32_0 : i32, i32, i32
  }
}

</mosaic_0001>

<llo_original>
// kernel: tpu_custom_call.1
$region0: #{tpu_custom_call.1}
  #allocation0 [shape = 'u32[]', space=smem, size = 0x4, offset = 0x4, fixed_abs, tag = 'smem constant byte address 0x4 - core index']
  #allocation1 [shape = 'u32[144,128]{1,0:T(1,128)}', space=vmem, size = 0x12000, scoped, tag = 'internal scratch']
  #allocation2 [shape = 'f32[8,1536]{1,0:T(8,128)}', space=vmem, size = 0xc000, scoped, tag = 'scratch operand']
  %s0 = inlined_call_operand.vmem [shape: f32[2,256,4], index: 0, kind: input, shape index: {}]
  %s1 = inlined_call_operand.vmem [shape: f32[4,1536], index: 1, kind: input, shape index: {}]
  %s2 = inlined_call_operand.vmem [shape: f32[1,1536], index: 2, kind: input, shape index: {}]
  %s3 = inlined_call_operand.hbm [shape: f32[1536,128], index: 3, kind: input, shape index: {}]
  %s4 = inlined_call_operand.vmem [shape: f32[1,128], index: 4, kind: input, shape index: {}]
  %s5 = inlined_call_operand.hbm [shape: f32[2,1,128], index: 5, kind: output, shape index: {}]
  %s6 = sld [smem:[#allocation0]]
  $region65: #{tpu_custom_call.1} parent=0
    _
  %s8 = ssub.s32 1, %s6
  %s9 = scalar_select 0, %s8, %s6
  $region1: #{tpu_custom_call.1} parent=0
    #allocation3 [shape = 'u8[786432]{0}', space=vmem, size = 0xc0000, scoped, tag = 'input window, operand 3, single buffered']
    #allocation4 [shape = 's32[2]{0}', space=sflag, size = 0x8, scoped, tag = 'scoped memory for tpu_custom_call.1']
    #allocation5 [shape = 's32[2]{0}', space=sflag, size = 0x8, scoped, tag = 'scoped memory for tpu_custom_call.1']
    #allocation6 [shape = 'u8[1024]{0}', space=vmem, size = 0x400, scoped, tag = 'output window, operand 0']
    %10 = vsyncpa [#allocation4], 0
    %11 = vsyncpa [#allocation5], 0
    %s12 = scalar_lea.sflag [#allocation5], 1
    %13 = vsyncpa %s12, 0
    loop: start=0, step=1, limit=4
    $region2: #{tpu_custom_call.1} parent=1 // loop_pre_header
      _
    $region3: #{tpu_custom_call.1} parent=1 // loop_header
      %s15 = sphi 0, %s19
      %p16 = scmp.ge.s32.totalorder %s15, 4
      %s22 = sphi 0, %s34
      %s23 = sphi 0, %s30
      %s24 = sphi 0, %s22
      %s25 = sphi 0, %s23
      %s26 = sphi 0, %s24
      %s27 = sphi 0, %s25
      %s39 = sphi 0, %s41
      %s42 = sphi 0, %s39
      %s43 = sphi 0, %s42
      %s59 = sphi 0, %s43
      %s63 = sphi 0, %s63
      %s65 = sphi 0, %s63
      %s66 = sphi 0, %s65
      %s80 = sphi 0, %s66
      %s84 = sphi 0, %s84
      %s86 = sphi 0, %s84
      %s87 = sphi 0, %s86
      %s101 = sphi 0, %s87
      %s105 = sphi 0, %s105
      %s107 = sphi 0, %s105
      %s108 = sphi 0, %s107
      %s122 = sphi 0, %s108
      %s126 = sphi 0, %s126
      %s128 = sphi 0, %s126
      %s129 = sphi 0, %s128
      %s143 = sphi 0, %s129
      %s149 = sphi 0, %s151
      %s152 = sphi 0, %s149
      %s153 = sphi 0, %s152
      %s169 = sphi 0, %s153
    $region4: #{tpu_custom_call.1} parent=1 // loop_header_branch
      %18 = sbr.rel (%p16) target = $region8
    $region5: #{tpu_custom_call.1} parent=1 // loop_body
      %s20 = ssub.s32 %s15, 1
      %s21 = ssub.s32 %s15, 2
      %s28 = sadd.s32 1, %s23
      %p29 = scmp.ge.s32.totalorder %s28, 1
      %s30 = scalar_select %p29, 0, %s28
      %s31 = sadd.s32 1, %s22
      %s32 = scalar_select %p29, %s31, %s22
      %p33 = scmp.ge.s32.totalorder %s32, 2
      %s34 = scalar_select %p33, 0, %s32
      %s35 = ssub.s32 %s22, %s34
      %s36 = ssub.s32 %s23, %s30
      %s37 = sor.u32 %s35, %s36
      %p38 = scmp.eq.s32.totalorder %s37, 0
      %s40 = sadd.s32 %s39, 1
      %s41 = scalar_select %p38, %s39, %s40
      %p44 = pneg %p38
      %p45 = scmp.eq.s32.totalorder %s15, 1
      %p46 = por %p44, %p45
      %p47 = scmp.ne.s32.totalorder %s39, %s42
      %p48 = scmp.eq.s32.totalorder %s15, 0
      %p49 = por %p47, %p48
      %p50 = scmp.ne.s32.totalorder %s39, %s42
      %p51 = scmp.eq.s32.totalorder %s20, 1
      %p52 = por %p50, %p51
      %p53 = scmp.ne.s32.totalorder %s42, %s43
      %p54 = scmp.eq.s32.totalorder %s20, 0
      %p55 = por %p53, %p54
      %p56 = scmp.ne.s32.totalorder %s42, %s43
      %p57 = scmp.eq.s32.totalorder %s21, 1
      %p58 = por %p56, %p57
      %p60 = scmp.ne.s32.totalorder %s43, %s59
      %p61 = scmp.eq.s32.totalorder %s21, 0
      %p62 = por %p60, %p61
      %s64 = sadd.s32 %s63, 1
      %p67 = scmp.eq.s32.totalorder %s15, 1
      %p68 = scmp.ne.s32.totalorder %s63, %s65
      %p69 = scmp.eq.s32.totalorder %s15, 0
      %p70 = por %p68, %p69
      %p71 = scmp.ne.s32.totalorder %s63, %s65
      %p72 = scmp.eq.s32.totalorder %s20, 1
      %p73 = por %p71, %p72
      %p74 = scmp.ne.s32.totalorder %s65, %s66
      %p75 = scmp.eq.s32.totalorder %s20, 0
      %p76 = por %p74, %p75
      %p77 = scmp.ne.s32.totalorder %s65, %s66
      %p78 = scmp.eq.s32.totalorder %s21, 1
      %p79 = por %p77, %p78
      %p81 = scmp.ne.s32.totalorder %s66, %s80
      %p82 = scmp.eq.s32.totalorder %s21, 0
      %p83 = por %p81, %p82
      %s85 = sadd.s32 %s84, 1
      %p88 = scmp.eq.s32.totalorder %s15, 1
      %p89 = scmp.ne.s32.totalorder %s84, %s86
      %p90 = scmp.eq.s32.totalorder %s15, 0
      %p91 = por %p89, %p90
      %p92 = scmp.ne.s32.totalorder %s84, %s86
      %p93 = scmp.eq.s32.totalorder %s20, 1
      %p94 = por %p92, %p93
      %p95 = scmp.ne.s32.totalorder %s86, %s87
      %p96 = scmp.eq.s32.totalorder %s20, 0
      %p97 = por %p95, %p96
      %p98 = scmp.ne.s32.totalorder %s86, %s87
      %p99 = scmp.eq.s32.totalorder %s21, 1
      %p100 = por %p98, %p99
      %p102 = scmp.ne.s32.totalorder %s87, %s101
      %p103 = scmp.eq.s32.totalorder %s21, 0
      %p104 = por %p102, %p103
      %s106 = sadd.s32 %s105, 1
      %p109 = scmp.eq.s32.totalorder %s15, 1
      %p110 = scmp.ne.s32.totalorder %s105, %s107
      %p111 = scmp.eq.s32.totalorder %s15, 0
      %p112 = por %p110, %p111
      %p113 = scmp.ne.s32.totalorder %s105, %s107
      %p114 = scmp.eq.s32.totalorder %s20, 1
      %p115 = por %p113, %p114
      %p116 = scmp.ne.s32.totalorder %s107, %s108
      %p117 = scmp.eq.s32.totalorder %s20, 0
      %p118 = por %p116, %p117
      %p119 = scmp.ne.s32.totalorder %s107, %s108
      %p120 = scmp.eq.s32.totalorder %s21, 1
      %p121 = por %p119, %p120
      %p123 = scmp.ne.s32.totalorder %s108, %s122
      %p124 = scmp.eq.s32.totalorder %s21, 0
      %p125 = por %p123, %p124
      %s127 = sadd.s32 %s126, 1
      %p130 = scmp.eq.s32.totalorder %s15, 1
      %p131 = scmp.ne.s32.totalorder %s126, %s128
      %p132 = scmp.eq.s32.totalorder %s15, 0
      %p133 = por %p131, %p132
      %p134 = scmp.ne.s32.totalorder %s126, %s128
      %p135 = scmp.eq.s32.totalorder %s20, 1
      %p136 = por %p134, %p135
      %p137 = scmp.ne.s32.totalorder %s128, %s129
      %p138 = scmp.eq.s32.totalorder %s20, 0
      %p139 = por %p137, %p138
      %p140 = scmp.ne.s32.totalorder %s128, %s129
      %p141 = scmp.eq.s32.totalorder %s21, 1
      %p142 = por %p140, %p141
      %p144 = scmp.ne.s32.totalorder %s129, %s143
      %p145 = scmp.eq.s32.totalorder %s21, 0
      %p146 = por %p144, %p145
      %s147 = ssub.s32 %s22, %s34
      %p148 = scmp.eq.s32.totalorder %s147, 0
      %s150 = sadd.s32 %s149, 1
      %s151 = scalar_select %p148, %s149, %s150
      %p154 = pneg %p148
      %p155 = scmp.eq.s32.totalorder %s15, 1
      %p156 = por %p154, %p155
      %p157 = scmp.ne.s32.totalorder %s149, %s152
      %p158 = scmp.eq.s32.totalorder %s15, 0
      %p159 = por %p157, %p158
      %p160 = scmp.ne.s32.totalorder %s149, %s152
      %p161 = scmp.eq.s32.totalorder %s20, 1
      %p162 = por %p160, %p161
      %p163 = scmp.ne.s32.totalorder %s152, %s153
      %p164 = scmp.eq.s32.totalorder %s20, 0
      %p165 = por %p163, %p164
      %p166 = scmp.ne.s32.totalorder %s152, %s153
      %p167 = scmp.eq.s32.totalorder %s21, 1
      %p168 = por %p166, %p167
      %p170 = scmp.ne.s32.totalorder %s153, %s169
      %p171 = scmp.eq.s32.totalorder %s21, 0
      %p172 = por %p170, %p171
      %p173 = scmp.le.s32.totalorder 1, %s15
      %p174 = scmp.lt.s32.totalorder %s15, 3
      %p175 = pnand %p173, %p174
      %p176 = pneg %p175
      // Predicated region
      $region9: #{tpu_custom_call.1} parent=5 // pred_check
        _
      $region10: #{tpu_custom_call.1} parent=5 // pred_check_branch
        %178 = sbr.rel (%p175) target = $region12
      $region11: #{tpu_custom_call.1} parent=5 // pred_region
        %s179 = ssub.s32 %s15, 1
        // Predicated region
        $region13: #{tpu_custom_call.1} parent=11 // pred_check
          %p180 = pneg %p76
        $region14: #{tpu_custom_call.1} parent=11 // pred_check_branch
          %182 = sbr.rel (%p180) target = $region16
        $region15: #{tpu_custom_call.1} parent=11 // pred_region
          _
        $region16: #{tpu_custom_call.1} parent=11 // pred_fallthru
          _
        // Predicated region
        $region17: #{tpu_custom_call.1} parent=11 // pred_check
          %p183 = pneg %p97
        $region18: #{tpu_custom_call.1} parent=11 // pred_check_branch
          %185 = sbr.rel (%p183) target = $region20
        $region19: #{tpu_custom_call.1} parent=11 // pred_region
          _
        $region20: #{tpu_custom_call.1} parent=11 // pred_fallthru
          _
        // Predicated region
        $region21: #{tpu_custom_call.1} parent=11 // pred_check
          %p186 = pneg %p118
        $region22: #{tpu_custom_call.1} parent=11 // pred_check_branch
          %188 = sbr.rel (%p186) target = $region24
        $region23: #{tpu_custom_call.1} parent=11 // pred_region
          %s190 = ssub.s32 24576, 24576
          %191 = vsyncadd [#allocation4], %s190
          %s192 = sshll.u32 [#allocation3], 4
          %s193 = int_to_ptr.vmem [resolvable:$true] %s192
          %198 = dma.hbm_to_vmem [thread:$0]  %s3, 24576, %s193, [#allocation4], 128, 128, 8
        $region24: #{tpu_custom_call.1} parent=11 // pred_fallthru
          _
        // Predicated region
        $region25: #{tpu_custom_call.1} parent=11 // pred_check
          %p199 = pneg %p139
        $region26: #{tpu_custom_call.1} parent=11 // pred_check_branch
          %201 = sbr.rel (%p199) target = $region28
        $region27: #{tpu_custom_call.1} parent=11 // pred_region
          _
        $region28: #{tpu_custom_call.1} parent=11 // pred_fallthru
          _
      $region12: #{tpu_custom_call.1} parent=5 // pred_fallthru
        _
      %p202 = scmp.lt.s32.totalorder %s15, 2
      // Predicated region
      $region29: #{tpu_custom_call.1} parent=5 // pred_check
        %p203 = pneg %p202
      $region30: #{tpu_custom_call.1} parent=5 // pred_check_branch
        %205 = sbr.rel (%p203) target = $region32
      $region31: #{tpu_custom_call.1} parent=5 // pred_region
        // Predicated region
        $region33: #{tpu_custom_call.1} parent=31 // pred_check
          %p206 = pneg %p49
        $region34: #{tpu_custom_call.1} parent=31 // pred_check_branch
          %208 = sbr.rel (%p206) target = $region36
        $region35: #{tpu_custom_call.1} parent=31 // pred_region
          %s209 = smul.u32 32, %s23
          %p210 = scmp.lt.s32.totalorder %s22, 1
          %s211 = scalar_select %p210, %s22, 1
          %p212 = scmp.lt.s32.totalorder %s209, 31
          %s213 = scalar_select %p212, %s209, 31
          %s214 = smul.addr %s211, 32
          %s215 = sadd.s32 %s213, %s214
          %s216 = smul.addr %s215, 8
          %s217 = scalar_lea.vmem %s0, %s216
          %s218 = smul.u32 32, %s23
        $region36: #{tpu_custom_call.1} parent=31 // pred_fallthru
          _
      $region32: #{tpu_custom_call.1} parent=5 // pred_fallthru
        _
      %p219 = scmp.le.s32.totalorder 1, %s15
      %p220 = scmp.lt.s32.totalorder %s15, 3
      %p221 = pnand %p219, %p220
      %p222 = pneg %p221
      // Predicated region
      $region37: #{tpu_custom_call.1} parent=5 // pred_check
        _
      $region38: #{tpu_custom_call.1} parent=5 // pred_check_branch
        %224 = sbr.rel (%p221) target = $region40
      $region39: #{tpu_custom_call.1} parent=5 // pred_region
        %s225 = ssub.s32 %s15, 1
        // Predicated region
        $region41: #{tpu_custom_call.1} parent=39 // pred_check
          %p226 = pneg %p118
        $region42: #{tpu_custom_call.1} parent=39 // pred_check_branch
          %228 = sbr.rel (%p226) target = $region44
        $region43: #{tpu_custom_call.1} parent=39 // pred_region
          %229 = dma.done [#allocation4], 24576
        $region44: #{tpu_custom_call.1} parent=39 // pred_fallthru
          _
        %s230 = smul.u32 32, %s25
        %p231 = scmp.lt.s32.totalorder %s24, 1
        %s232 = scalar_select %p231, %s24, 1
        %p233 = scmp.lt.s32.totalorder %s230, 31
        %s234 = scalar_select %p233, %s230, 31
        %s235 = smul.addr %s232, 32
        %s236 = sadd.s32 %s234, %s235
        %s237 = smul.addr %s236, 8
        %s238 = scalar_lea.vmem %s0, %s237
        %p239 = pneg %p55
        %p240 = pneg %p52
        %p241 = pneg %p76
        %p242 = pneg %p73
        %p243 = pneg %p97
        %p244 = pneg %p94
        %p245 = pneg %p118
        %p246 = pneg %p115
        %p247 = pneg %p139
        %p248 = pneg %p136
        %p249 = pneg %p165
        %p250 = pneg %p162
        %s251 = sand.u32 %s152, 1
        %s252 = scalar_lea.sflag [#allocation5], %s251
        %s253 = sand.u32 %s152, 1
        %s254 = scalar_lea.vmem [#allocation6], %s253
        %s255 = smul.u32 32, %s25
        %p256 = scmp.lt.s32.totalorder %s24, 1
        %s257 = scalar_select %p256, %s24, 1
        %p258 = scmp.lt.s32.totalorder %s255, 31
        %s259 = scalar_select %p258, %s255, 31
        %s260 = smul.addr %s257, 32
        %s261 = sadd.s32 %s259, %s260
        %s262 = smul.addr %s261, 8
        %s263 = scalar_lea.vmem %s0, %s262
        %s264 = smul.u32 32, %s25
        %p265 = scmp.eq.s32.totalorder %s25, 0
        // Predicated region
        $region45: #{tpu_custom_call.1} parent=39 // pred_check
          %p266 = pneg %p265
        $region46: #{tpu_custom_call.1} parent=39 // pred_check_branch
          %268 = sbr.rel (%p266) target = $region48
        $region47: #{tpu_custom_call.1} parent=39 // pred_region
          %269 = vst [vmem:[#allocation2] sm:$0xff] 0.0
          %270 = vst [vmem:[#allocation2 + $0x8] sm:$0xff] 0.0
          %271 = vst [vmem:[#allocation2 + $0x10] sm:$0xff] 0.0
          %272 = vst [vmem:[#allocation2 + $0x18] sm:$0xff] 0.0
          %273 = vst [vmem:[#allocation2 + $0x20] sm:$0xff] 0.0
          %274 = vst [vmem:[#allocation2 + $0x28] sm:$0xff] 0.0
          %275 = vst [vmem:[#allocation2 + $0x30] sm:$0xff] 0.0
          %276 = vst [vmem:[#allocation2 + $0x38] sm:$0xff] 0.0
          %277 = vst [vmem:[#allocation2 + $0x40] sm:$0xff] 0.0
          %278 = vst [vmem:[#allocation2 + $0x48] sm:$0xff] 0.0
          %279 = vst [vmem:[#allocation2 + $0x50] sm:$0xff] 0.0
          %280 = vst [vmem:[#allocation2 + $0x58] sm:$0xff] 0.0
        $region48: #{tpu_custom_call.1} parent=39 // pred_fallthru
          _
        %v281 = vld [vmem:[%s263] sm:$0xff]
        %v282 = vld [vmem:[%s263 + $0x8] sm:$0xff]
        %v283 = vld [vmem:[%s263 + $0x10] sm:$0xff]
        %v284 = vld [vmem:[%s263 + $0x18] sm:$0xff]
        %v285 = vld [vmem:[%s263 + $0x20] sm:$0xff]
        %v286 = vld [vmem:[%s263 + $0x28] sm:$0xff]
        %v287 = vld [vmem:[%s263 + $0x30] sm:$0xff]
        %v288 = vld [vmem:[%s263 + $0x38] sm:$0xff]
        %v289 = vld [vmem:[%s263 + $0x40] sm:$0xff]
        %v290 = vld [vmem:[%s263 + $0x48] sm:$0xff]
        %v291 = vld [vmem:[%s263 + $0x50] sm:$0xff]
        %v292 = vld [vmem:[%s263 + $0x58] sm:$0xff]
        %v293 = vld [vmem:[%s263 + $0x60] sm:$0xff]
        %v294 = vld [vmem:[%s263 + $0x68] sm:$0xff]
        %v295 = vld [vmem:[%s263 + $0x70] sm:$0xff]
        %v296 = vld [vmem:[%s263 + $0x78] sm:$0xff]
        %v297 = vld [vmem:[%s263 + $0x80] sm:$0xff]
        %v298 = vld [vmem:[%s263 + $0x88] sm:$0xff]
        %v299 = vld [vmem:[%s263 + $0x90] sm:$0xff]
        %v300 = vld [vmem:[%s263 + $0x98] sm:$0xff]
        %v301 = vld [vmem:[%s263 + $0xa0] sm:$0xff]
        %v302 = vld [vmem:[%s263 + $0xa8] sm:$0xff]
        %v303 = vld [vmem:[%s263 + $0xb0] sm:$0xff]
        %v304 = vld [vmem:[%s263 + $0xb8] sm:$0xff]
        %v305 = vld [vmem:[%s263 + $0xc0] sm:$0xff]
        %v306 = vld [vmem:[%s263 + $0xc8] sm:$0xff]
        %v307 = vld [vmem:[%s263 + $0xd0] sm:$0xff]
        %v308 = vld [vmem:[%s263 + $0xd8] sm:$0xff]
        %v309 = vld [vmem:[%s263 + $0xe0] sm:$0xff]
        %v310 = vld [vmem:[%s263 + $0xe8] sm:$0xff]
        %v311 = vld [vmem:[%s263 + $0xf0] sm:$0xff]
        %v312 = vld [vmem:[%s263 + $0xf8] sm:$0xff]
        %v313 = vld [vmem:[%s1] ss:$4 sm:$0xff]
        %s314 = scalar_lea.vmem %s1, 32
        %v315 = vld [vmem:[%s314] ss:$4 sm:$0xf]
        %317 = vset.pattern.permute.xlu0 0
        %318 = vperm.xlu0 %317, %v281
        %v319 = vpop.permute.xlu0 %318
        %322 = vset.pattern.permute.xlu0 0
        %323 = vperm.xlu0 %322, %v282
        %v324 = vpop.permute.xlu0 %323
        %327 = vset.pattern.permute.xlu0 0
        %328 = vperm.xlu0 %327, %v283
        %v329 = vpop.permute.xlu0 %328
        %332 = vset.pattern.permute.xlu0 0
        %333 = vperm.xlu0 %332, %v284
        %v334 = vpop.permute.xlu0 %333
        %337 = vset.pattern.permute.xlu0 0
        %338 = vperm.xlu0 %337, %v285
        %v339 = vpop.permute.xlu0 %338
        %342 = vset.pattern.permute.xlu0 0
        %343 = vperm.xlu0 %342, %v286
        %v344 = vpop.permute.xlu0 %343
        %347 = vset.pattern.permute.xlu0 0
        %348 = vperm.xlu0 %347, %v287
        %v349 = vpop.permute.xlu0 %348
        %352 = vset.pattern.permute.xlu0 0
        %353 = vperm.xlu0 %352, %v288
        %v354 = vpop.permute.xlu0 %353
        %357 = vset.pattern.permute.xlu0 0
        %358 = vperm.xlu0 %357, %v289
        %v359 = vpop.permute.xlu0 %358
        %362 = vset.pattern.permute.xlu0 0
        %363 = vperm.xlu0 %362, %v290
        %v364 = vpop.permute.xlu0 %363
        %367 = vset.pattern.permute.xlu0 0
        %368 = vperm.xlu0 %367, %v291
        %v369 = vpop.permute.xlu0 %368
        %372 = vset.pattern.permute.xlu0 0
        %373 = vperm.xlu0 %372, %v292
        %v374 = vpop.permute.xlu0 %373
        %377 = vset.pattern.permute.xlu0 0
        %378 = vperm.xlu0 %377, %v293
        %v379 = vpop.permute.xlu0 %378
        %382 = vset.pattern.permute.xlu0 0
        %383 = vperm.xlu0 %382, %v294
        %v384 = vpop.permute.xlu0 %383
        %387 = vset.pattern.permute.xlu0 0
        %388 = vperm.xlu0 %387, %v295
        %v389 = vpop.permute.xlu0 %388
        %392 = vset.pattern.permute.xlu0 0
        %393 = vperm.xlu0 %392, %v296
        %v394 = vpop.permute.xlu0 %393
        %397 = vset.pattern.permute.xlu0 0
        %398 = vperm.xlu0 %397, %v297
        %v399 = vpop.permute.xlu0 %398
        %402 = vset.pattern.permute.xlu0 0
        %403 = vperm.xlu0 %402, %v298
        %v404 = vpop.permute.xlu0 %403
        %407 = vset.pattern.permute.xlu0 0
        %408 = vperm.xlu0 %407, %v299
        %v409 = vpop.permute.xlu0 %408
        %412 = vset.pattern.permute.xlu0 0
        %413 = vperm.xlu0 %412, %v300
        %v414 = vpop.permute.xlu0 %413
        %417 = vset.pattern.permute.xlu0 0
        %418 = vperm.xlu0 %417, %v301
        %v419 = vpop.permute.xlu0 %418
        %422 = vset.pattern.permute.xlu0 0
        %423 = vperm.xlu0 %422, %v302
        %v424 = vpop.permute.xlu0 %423
        %427 = vset.pattern.permute.xlu0 0
        %428 = vperm.xlu0 %427, %v303
        %v429 = vpop.permute.xlu0 %428
        %432 = vset.pattern.permute.xlu0 0
        %433 = vperm.xlu0 %432, %v304
        %v434 = vpop.permute.xlu0 %433
        %437 = vset.pattern.permute.xlu0 0
        %438 = vperm.xlu0 %437, %v305
        %v439 = vpop.permute.xlu0 %438
        %442 = vset.pattern.permute.xlu0 0
        %443 = vperm.xlu0 %442, %v306
        %v444 = vpop.permute.xlu0 %443
        %447 = vset.pattern.permute.xlu0 0
        %448 = vperm.xlu0 %447, %v307
        %v449 = vpop.permute.xlu0 %448
        %452 = vset.pattern.permute.xlu0 0
        %453 = vperm.xlu0 %452, %v308
        %v454 = vpop.permute.xlu0 %453
        %457 = vset.pattern.permute.xlu0 0
        %458 = vperm.xlu0 %457, %v309
        %v459 = vpop.permute.xlu0 %458
        %462 = vset.pattern.permute.xlu0 0
        %463 = vperm.xlu0 %462, %v310
        %v464 = vpop.permute.xlu0 %463
        %467 = vset.pattern.permute.xlu0 0
        %468 = vperm.xlu0 %467, %v311
        %v469 = vpop.permute.xlu0 %468
        %472 = vset.pattern.permute.xlu0 0
        %473 = vperm.xlu0 %472, %v312
        %v474 = vpop.permute.xlu0 %473
        %v478 = vlaneseq
        %v479 = vshrl.u32 %v478, 7
        %v480 = vsub.s32 0, %v479
        %v481 = vrot.slane %v313, %v480
        %v482 = vlaneseq
        %v483 = vshrl.u32 %v482, 7
        %v484 = vsub.s32 1, %v483
        %v485 = vrot.slane %v313, %v484
        %v486 = vlaneseq
        %v487 = vshrl.u32 %v486, 7
        %v488 = vsub.s32 2, %v487
        %v489 = vrot.slane %v313, %v488
        %v490 = vlaneseq
        %v491 = vshrl.u32 %v490, 7
        %v492 = vsub.s32 3, %v491
        %v493 = vrot.slane %v313, %v492
        %v494 = vlaneseq
        %v495 = vshrl.u32 %v494, 7
        %v496 = vsub.s32 4, %v495
        %v497 = vrot.slane %v313, %v496
        %v498 = vlaneseq
        %v499 = vshrl.u32 %v498, 7
        %v500 = vsub.s32 5, %v499
        %v501 = vrot.slane %v313, %v500
        %v502 = vlaneseq
        %v503 = vshrl.u32 %v502, 7
        %v504 = vsub.s32 6, %v503
        %v505 = vrot.slane %v313, %v504
        %v506 = vlaneseq
        %v507 = vshrl.u32 %v506, 7
        %v508 = vsub.s32 7, %v507
        %v509 = vrot.slane %v313, %v508
        %v510 = vlaneseq
        %v511 = vshrl.u32 %v510, 7
        %v512 = vsub.s32 0, %v511
        %v513 = vrot.slane %v315, %v512
        %v514 = vlaneseq
        %v515 = vshrl.u32 %v514, 7
        %v516 = vsub.s32 1, %v515
        %v517 = vrot.slane %v315, %v516
        %v518 = vlaneseq
        %v519 = vshrl.u32 %v518, 7
        %v520 = vsub.s32 2, %v519
        %v521 = vrot.slane %v315, %v520
        %v522 = vlaneseq
        %v523 = vshrl.u32 %v522, 7
        %v524 = vsub.s32 3, %v523
        %v525 = vrot.slane %v315, %v524
        %v538 = vmul.f32 %v319, %v481
        %v539 = vmul.f32 %v319, %v485
        %v540 = vmul.f32 %v319, %v489
        %v541 = vmul.f32 %v319, %v493
        %v542 = vmul.f32 %v319, %v497
        %v543 = vmul.f32 %v319, %v501
        %v544 = vmul.f32 %v319, %v505
        %v545 = vmul.f32 %v319, %v509
        %v546 = vmul.f32 %v319, %v513
        %v547 = vmul.f32 %v319, %v517
        %v548 = vmul.f32 %v319, %v521
        %v549 = vmul.f32 %v319, %v525
        %v550 = vmul.f32 %v324, %v481
        %v551 = vmul.f32 %v324, %v485
        %v552 = vmul.f32 %v324, %v489
        %v553 = vmul.f32 %v324, %v493
        %v554 = vmul.f32 %v324, %v497
        %v555 = vmul.f32 %v324, %v501
        %v556 = vmul.f32 %v324, %v505
        %v557 = vmul.f32 %v324, %v509
        %v558 = vmul.f32 %v324, %v513
        %v559 = vmul.f32 %v324, %v517
        %v560 = vmul.f32 %v324, %v521
        %v561 = vmul.f32 %v324, %v525
        %v562 = vmul.f32 %v329, %v481
        %v563 = vmul.f32 %v329, %v485
        %v564 = vmul.f32 %v329, %v489
        %v565 = vmul.f32 %v329, %v493
        %v566 = vmul.f32 %v329, %v497
        %v567 = vmul.f32 %v329, %v501
        %v568 = vmul.f32 %v329, %v505
        %v569 = vmul.f32 %v329, %v509
        %v570 = vmul.f32 %v329, %v513
        %v571 = vmul.f32 %v329, %v517
        %v572 = vmul.f32 %v329, %v521
        %v573 = vmul.f32 %v329, %v525
        %v574 = vmul.f32 %v334, %v481
        %v575 = vmul.f32 %v334, %v485
        %v576 = vmul.f32 %v334, %v489
        %v577 = vmul.f32 %v334, %v493
        %v578 = vmul.f32 %v334, %v497
        %v579 = vmul.f32 %v334, %v501
        %v580 = vmul.f32 %v334, %v505
        %v581 = vmul.f32 %v334, %v509
        %v582 = vmul.f32 %v334, %v513
        %v583 = vmul.f32 %v334, %v517
        %v584 = vmul.f32 %v334, %v521
        %v585 = vmul.f32 %v334, %v525
        %v586 = vmul.f32 %v339, %v481
        %v587 = vmul.f32 %v339, %v485
        %v588 = vmul.f32 %v339, %v489
        %v589 = vmul.f32 %v339, %v493
        %v590 = vmul.f32 %v339, %v497
        %v591 = vmul.f32 %v339, %v501
        %v592 = vmul.f32 %v339, %v505
        %v593 = vmul.f32 %v339, %v509
        %v594 = vmul.f32 %v339, %v513
        %v595 = vmul.f32 %v339, %v517
        %v596 = vmul.f32 %v339, %v521
        %v597 = vmul.f32 %v339, %v525
        %v598 = vmul.f32 %v344, %v481
        %v599 = vmul.f32 %v344, %v485
        %v600 = vmul.f32 %v344, %v489
        %v601 = vmul.f32 %v344, %v493
        %v602 = vmul.f32 %v344, %v497
        %v603 = vmul.f32 %v344, %v501
        %v604 = vmul.f32 %v344, %v505
        %v605 = vmul.f32 %v344, %v509
        %v606 = vmul.f32 %v344, %v513
        %v607 = vmul.f32 %v344, %v517
        %v608 = vmul.f32 %v344, %v521
        %v609 = vmul.f32 %v344, %v525
        %v610 = vmul.f32 %v349, %v481
        %v611 = vmul.f32 %v349, %v485
        %v612 = vmul.f32 %v349, %v489
        %v613 = vmul.f32 %v349, %v493
        %v614 = vmul.f32 %v349, %v497
        %v615 = vmul.f32 %v349, %v501
        %v616 = vmul.f32 %v349, %v505
        %v617 = vmul.f32 %v349, %v509
        %v618 = vmul.f32 %v349, %v513
        %v619 = vmul.f32 %v349, %v517
        %v620 = vmul.f32 %v349, %v521
        %v621 = vmul.f32 %v349, %v525
        %v622 = vmul.f32 %v354, %v481
        %v623 = vmul.f32 %v354, %v485
        %v624 = vmul.f32 %v354, %v489
        %v625 = vmul.f32 %v354, %v493
        %v626 = vmul.f32 %v354, %v497
        %v627 = vmul.f32 %v354, %v501
        %v628 = vmul.f32 %v354, %v505
        %v629 = vmul.f32 %v354, %v509
        %v630 = vmul.f32 %v354, %v513
        %v631 = vmul.f32 %v354, %v517
        %v632 = vmul.f32 %v354, %v521
        %v633 = vmul.f32 %v354, %v525
        %v634 = vmul.f32 %v359, %v481
        %v635 = vmul.f32 %v359, %v485
        %v636 = vmul.f32 %v359, %v489
        %v637 = vmul.f32 %v359, %v493
        %v638 = vmul.f32 %v359, %v497
        %v639 = vmul.f32 %v359, %v501
        %v640 = vmul.f32 %v359, %v505
        %v641 = vmul.f32 %v359, %v509
        %v642 = vmul.f32 %v359, %v513
        %v643 = vmul.f32 %v359, %v517
        %v644 = vmul.f32 %v359, %v521
        %v645 = vmul.f32 %v359, %v525
        %v646 = vmul.f32 %v364, %v481
        %v647 = vmul.f32 %v364, %v485
        %v648 = vmul.f32 %v364, %v489
        %v649 = vmul.f32 %v364, %v493
        %v650 = vmul.f32 %v364, %v497
        %v651 = vmul.f32 %v364, %v501
        %v652 = vmul.f32 %v364, %v505
        %v653 = vmul.f32 %v364, %v509
        %v654 = vmul.f32 %v364, %v513
        %v655 = vmul.f32 %v364, %v517
        %v656 = vmul.f32 %v364, %v521
        %v657 = vmul.f32 %v364, %v525
        %v658 = vmul.f32 %v369, %v481
        %v659 = vmul.f32 %v369, %v485
        %v660 = vmul.f32 %v369, %v489
        %v661 = vmul.f32 %v369, %v493
        %v662 = vmul.f32 %v369, %v497
        %v663 = vmul.f32 %v369, %v501
        %v664 = vmul.f32 %v369, %v505
        %v665 = vmul.f32 %v369, %v509
        %v666 = vmul.f32 %v369, %v513
        %v667 = vmul.f32 %v369, %v517
        %v668 = vmul.f32 %v369, %v521
        %v669 = vmul.f32 %v369, %v525
        %v670 = vmul.f32 %v374, %v481
        %v671 = vmul.f32 %v374, %v485
        %v672 = vmul.f32 %v374, %v489
        %v673 = vmul.f32 %v374, %v493
        %v674 = vmul.f32 %v374, %v497
        %v675 = vmul.f32 %v374, %v501
        %v676 = vmul.f32 %v374, %v505
        %v677 = vmul.f32 %v374, %v509
        %v678 = vmul.f32 %v374, %v513
        %v679 = vmul.f32 %v374, %v517
        %v680 = vmul.f32 %v374, %v521
        %v681 = vmul.f32 %v374, %v525
        %v682 = vmul.f32 %v379, %v481
        %v683 = vmul.f32 %v379, %v485
        %v684 = vmul.f32 %v379, %v489
        %v685 = vmul.f32 %v379, %v493
        %v686 = vmul.f32 %v379, %v497
        %v687 = vmul.f32 %v379, %v501
        %v688 = vmul.f32 %v379, %v505
        %v689 = vmul.f32 %v379, %v509
        %v690 = vmul.f32 %v379, %v513
        %v691 = vmul.f32 %v379, %v517
        %v692 = vmul.f32 %v379, %v521
        %v693 = vmul.f32 %v379, %v525
        %v694 = vmul.f32 %v384, %v481
        %v695 = vmul.f32 %v384, %v485
        %v696 = vmul.f32 %v384, %v489
        %v697 = vmul.f32 %v384, %v493
        %v698 = vmul.f32 %v384, %v497
        %v699 = vmul.f32 %v384, %v501
        %v700 = vmul.f32 %v384, %v505
        %v701 = vmul.f32 %v384, %v509
        %v702 = vmul.f32 %v384, %v513
        %v703 = vmul.f32 %v384, %v517
        %v704 = vmul.f32 %v384, %v521
        %v705 = vmul.f32 %v384, %v525
        %v706 = vmul.f32 %v389, %v481
        %v707 = vmul.f32 %v389, %v485
        %v708 = vmul.f32 %v389, %v489
        %v709 = vmul.f32 %v389, %v493
        %v710 = vmul.f32 %v389, %v497
        %v711 = vmul.f32 %v389, %v501
        %v712 = vmul.f32 %v389, %v505
        %v713 = vmul.f32 %v389, %v509
        %v714 = vmul.f32 %v389, %v513
        %v715 = vmul.f32 %v389, %v517
        %v716 = vmul.f32 %v389, %v521
        %v717 = vmul.f32 %v389, %v525
        %v718 = vmul.f32 %v394, %v481
        %v719 = vmul.f32 %v394, %v485
        %v720 = vmul.f32 %v394, %v489
        %v721 = vmul.f32 %v394, %v493
        %v722 = vmul.f32 %v394, %v497
        %v723 = vmul.f32 %v394, %v501
        %v724 = vmul.f32 %v394, %v505
        %v725 = vmul.f32 %v394, %v509
        %v726 = vmul.f32 %v394, %v513
        %v727 = vmul.f32 %v394, %v517
        %v728 = vmul.f32 %v394, %v521
        %v729 = vmul.f32 %v394, %v525
        %v730 = vmul.f32 %v399, %v481
        %v731 = vmul.f32 %v399, %v485
        %v732 = vmul.f32 %v399, %v489
        %v733 = vmul.f32 %v399, %v493
        %v734 = vmul.f32 %v399, %v497
        %v735 = vmul.f32 %v399, %v501
        %v736 = vmul.f32 %v399, %v505
        %v737 = vmul.f32 %v399, %v509
        %v738 = vmul.f32 %v399, %v513
        %v739 = vmul.f32 %v399, %v517
        %v740 = vmul.f32 %v399, %v521
        %v741 = vmul.f32 %v399, %v525
        %v742 = vmul.f32 %v404, %v481
        %v743 = vmul.f32 %v404, %v485
        %v744 = vmul.f32 %v404, %v489
        %v745 = vmul.f32 %v404, %v493
        %v746 = vmul.f32 %v404, %v497
        %v747 = vmul.f32 %v404, %v501
        %v748 = vmul.f32 %v404, %v505
        %v749 = vmul.f32 %v404, %v509
        %v750 = vmul.f32 %v404, %v513
        %v751 = vmul.f32 %v404, %v517
        %v752 = vmul.f32 %v404, %v521
        %v753 = vmul.f32 %v404, %v525
        %v754 = vmul.f32 %v409, %v481
        %v755 = vmul.f32 %v409, %v485
        %v756 = vmul.f32 %v409, %v489
        %v757 = vmul.f32 %v409, %v493
        %v758 = vmul.f32 %v409, %v497
        %v759 = vmul.f32 %v409, %v501
        %v760 = vmul.f32 %v409, %v505
        %v761 = vmul.f32 %v409, %v509
        %v762 = vmul.f32 %v409, %v513
        %v763 = vmul.f32 %v409, %v517
        %v764 = vmul.f32 %v409, %v521
        %v765 = vmul.f32 %v409, %v525
        %v766 = vmul.f32 %v414, %v481
        %v767 = vmul.f32 %v414, %v485
        %v768 = vmul.f32 %v414, %v489
        %v769 = vmul.f32 %v414, %v493
        %v770 = vmul.f32 %v414, %v497
        %v771 = vmul.f32 %v414, %v501
        %v772 = vmul.f32 %v414, %v505
        %v773 = vmul.f32 %v414, %v509
        %v774 = vmul.f32 %v414, %v513
        %v775 = vmul.f32 %v414, %v517
        %v776 = vmul.f32 %v414, %v521
        %v777 = vmul.f32 %v414, %v525
        %v778 = vmul.f32 %v419, %v481
        %v779 = vmul.f32 %v419, %v485
        %v780 = vmul.f32 %v419, %v489
        %v781 = vmul.f32 %v419, %v493
        %v782 = vmul.f32 %v419, %v497
        %v783 = vmul.f32 %v419, %v501
        %v784 = vmul.f32 %v419, %v505
        %v785 = vmul.f32 %v419, %v509
        %v786 = vmul.f32 %v419, %v513
        %v787 = vmul.f32 %v419, %v517
        %v788 = vmul.f32 %v419, %v521
        %v789 = vmul.f32 %v419, %v525
        %v790 = vmul.f32 %v424, %v481
        %v791 = vmul.f32 %v424, %v485
        %v792 = vmul.f32 %v424, %v489
        %v793 = vmul.f32 %v424, %v493
        %v794 = vmul.f32 %v424, %v497
        %v795 = vmul.f32 %v424, %v501
        %v796 = vmul.f32 %v424, %v505
        %v797 = vmul.f32 %v424, %v509
        %v798 = vmul.f32 %v424, %v513
        %v799 = vmul.f32 %v424, %v517
        %v800 = vmul.f32 %v424, %v521
        %v801 = vmul.f32 %v424, %v525
        %v802 = vmul.f32 %v429, %v481
        %v803 = vmul.f32 %v429, %v485
        %v804 = vmul.f32 %v429, %v489
        %v805 = vmul.f32 %v429, %v493
        %v806 = vmul.f32 %v429, %v497
        %v807 = vmul.f32 %v429, %v501
        %v808 = vmul.f32 %v429, %v505
        %v809 = vmul.f32 %v429, %v509
        %v810 = vmul.f32 %v429, %v513
        %v811 = vmul.f32 %v429, %v517
        %v812 = vmul.f32 %v429, %v521
        %v813 = vmul.f32 %v429, %v525
        %v814 = vmul.f32 %v434, %v481
        %v815 = vmul.f32 %v434, %v485
        %v816 = vmul.f32 %v434, %v489
        %v817 = vmul.f32 %v434, %v493
        %v818 = vmul.f32 %v434, %v497
        %v819 = vmul.f32 %v434, %v501
        %v820 = vmul.f32 %v434, %v505
        %v821 = vmul.f32 %v434, %v509
        %v822 = vmul.f32 %v434, %v513
        %v823 = vmul.f32 %v434, %v517
        %v824 = vmul.f32 %v434, %v521
        %v825 = vmul.f32 %v434, %v525
        %v826 = vmul.f32 %v439, %v481
        %v827 = vmul.f32 %v439, %v485
        %v828 = vmul.f32 %v439, %v489
        %v829 = vmul.f32 %v439, %v493
        %v830 = vmul.f32 %v439, %v497
        %v831 = vmul.f32 %v439, %v501
        %v832 = vmul.f32 %v439, %v505
        %v833 = vmul.f32 %v439, %v509
        %v834 = vmul.f32 %v439, %v513
        %v835 = vmul.f32 %v439, %v517
        %v836 = vmul.f32 %v439, %v521
        %v837 = vmul.f32 %v439, %v525
        %v838 = vmul.f32 %v444, %v481
        %v839 = vmul.f32 %v444, %v485
        %v840 = vmul.f32 %v444, %v489
        %v841 = vmul.f32 %v444, %v493
        %v842 = vmul.f32 %v444, %v497
        %v843 = vmul.f32 %v444, %v501
        %v844 = vmul.f32 %v444, %v505
        %v845 = vmul.f32 %v444, %v509
        %v846 = vmul.f32 %v444, %v513
        %v847 = vmul.f32 %v444, %v517
        %v848 = vmul.f32 %v444, %v521
        %v849 = vmul.f32 %v444, %v525
        %v850 = vmul.f32 %v449, %v481
        %v851 = vmul.f32 %v449, %v485
        %v852 = vmul.f32 %v449, %v489
        %v853 = vmul.f32 %v449, %v493
        %v854 = vmul.f32 %v449, %v497
        %v855 = vmul.f32 %v449, %v501
        %v856 = vmul.f32 %v449, %v505
        %v857 = vmul.f32 %v449, %v509
        %v858 = vmul.f32 %v449, %v513
        %v859 = vmul.f32 %v449, %v517
        %v860 = vmul.f32 %v449, %v521
        %v861 = vmul.f32 %v449, %v525
        %v862 = vmul.f32 %v454, %v481
        %v863 = vmul.f32 %v454, %v485
        %v864 = vmul.f32 %v454, %v489
        %v865 = vmul.f32 %v454, %v493
        %v866 = vmul.f32 %v454, %v497
        %v867 = vmul.f32 %v454, %v501
        %v868 = vmul.f32 %v454, %v505
        %v869 = vmul.f32 %v454, %v509
        %v870 = vmul.f32 %v454, %v513
        %v871 = vmul.f32 %v454, %v517
        %v872 = vmul.f32 %v454, %v521
        %v873 = vmul.f32 %v454, %v525
        %v874 = vmul.f32 %v459, %v481
        %v875 = vmul.f32 %v459, %v485
        %v876 = vmul.f32 %v459, %v489
        %v877 = vmul.f32 %v459, %v493
        %v878 = vmul.f32 %v459, %v497
        %v879 = vmul.f32 %v459, %v501
        %v880 = vmul.f32 %v459, %v505
        %v881 = vmul.f32 %v459, %v509
        %v882 = vmul.f32 %v459, %v513
        %v883 = vmul.f32 %v459, %v517
        %v884 = vmul.f32 %v459, %v521
        %v885 = vmul.f32 %v459, %v525
        %v886 = vmul.f32 %v464, %v481
        %v887 = vmul.f32 %v464, %v485
        %v888 = vmul.f32 %v464, %v489
        %v889 = vmul.f32 %v464, %v493
        %v890 = vmul.f32 %v464, %v497
        %v891 = vmul.f32 %v464, %v501
        %v892 = vmul.f32 %v464, %v505
        %v893 = vmul.f32 %v464, %v509
        %v894 = vmul.f32 %v464, %v513
        %v895 = vmul.f32 %v464, %v517
        %v896 = vmul.f32 %v464, %v521
        %v897 = vmul.f32 %v464, %v525
        %v898 = vmul.f32 %v469, %v481
        %v899 = vmul.f32 %v469, %v485
        %v900 = vmul.f32 %v469, %v489
        %v901 = vmul.f32 %v469, %v493
        %v902 = vmul.f32 %v469, %v497
        %v903 = vmul.f32 %v469, %v501
        %v904 = vmul.f32 %v469, %v505
        %v905 = vmul.f32 %v469, %v509
        %v906 = vmul.f32 %v469, %v513
        %v907 = vmul.f32 %v469, %v517
        %v908 = vmul.f32 %v469, %v521
        %v909 = vmul.f32 %v469, %v525
        %v910 = vmul.f32 %v474, %v481
        %v911 = vmul.f32 %v474, %v485
        %v912 = vmul.f32 %v474, %v489
        %v913 = vmul.f32 %v474, %v493
        %v914 = vmul.f32 %v474, %v497
        %v915 = vmul.f32 %v474, %v501
        %v916 = vmul.f32 %v474, %v505
        %v917 = vmul.f32 %v474, %v509
        %v918 = vmul.f32 %v474, %v513
        %v919 = vmul.f32 %v474, %v517
        %v920 = vmul.f32 %v474, %v521
        %v921 = vmul.f32 %v474, %v525
        %v922 = vld [vmem:[%s2] sm:$0xff]
        %v923 = vld [vmem:[%s2 + $0x8] sm:$0xf]
        %v926 = vlaneseq
        %v927 = vshrl.u32 %v926, 7
        %v928 = vsub.s32 0, %v927
        %v929 = vrot.slane %v922, %v928
        %v930 = vlaneseq
        %v931 = vshrl.u32 %v930, 7
        %v932 = vsub.s32 1, %v931
        %v933 = vrot.slane %v922, %v932
        %v934 = vlaneseq
        %v935 = vshrl.u32 %v934, 7
        %v936 = vsub.s32 2, %v935
        %v937 = vrot.slane %v922, %v936
        %v938 = vlaneseq
        %v939 = vshrl.u32 %v938, 7
        %v940 = vsub.s32 3, %v939
        %v941 = vrot.slane %v922, %v940
        %v942 = vlaneseq
        %v943 = vshrl.u32 %v942, 7
        %v944 = vsub.s32 4, %v943
        %v945 = vrot.slane %v922, %v944
        %v946 = vlaneseq
        %v947 = vshrl.u32 %v946, 7
        %v948 = vsub.s32 5, %v947
        %v949 = vrot.slane %v922, %v948
        %v950 = vlaneseq
        %v951 = vshrl.u32 %v950, 7
        %v952 = vsub.s32 6, %v951
        %v953 = vrot.slane %v922, %v952
        %v954 = vlaneseq
        %v955 = vshrl.u32 %v954, 7
        %v956 = vsub.s32 7, %v955
        %v957 = vrot.slane %v922, %v956
        %v958 = vlaneseq
        %v959 = vshrl.u32 %v958, 7
        %v960 = vsub.s32 0, %v959
        %v961 = vrot.slane %v923, %v960
        %v962 = vlaneseq
        %v963 = vshrl.u32 %v962, 7
        %v964 = vsub.s32 1, %v963
        %v965 = vrot.slane %v923, %v964
        %v966 = vlaneseq
        %v967 = vshrl.u32 %v966, 7
        %v968 = vsub.s32 2, %v967
        %v969 = vrot.slane %v923, %v968
        %v970 = vlaneseq
        %v971 = vshrl.u32 %v970, 7
        %v972 = vsub.s32 3, %v971
        %v973 = vrot.slane %v923, %v972
        %v986 = vadd.f32 %v538, %v929
        %v987 = vadd.f32 %v539, %v933
        %v988 = vadd.f32 %v540, %v937
        %v989 = vadd.f32 %v541, %v941
        %v990 = vadd.f32 %v542, %v945
        %v991 = vadd.f32 %v543, %v949
        %v992 = vadd.f32 %v544, %v953
        %v993 = vadd.f32 %v545, %v957
        %v994 = vadd.f32 %v546, %v961
        %v995 = vadd.f32 %v547, %v965
        %v996 = vadd.f32 %v548, %v969
        %v997 = vadd.f32 %v549, %v973
        %v998 = vadd.f32 %v550, %v929
        %v999 = vadd.f32 %v551, %v933
        %v1000 = vadd.f32 %v552, %v937
        %v1001 = vadd.f32 %v553, %v941
        %v1002 = vadd.f32 %v554, %v945
        %v1003 = vadd.f32 %v555, %v949
        %v1004 = vadd.f32 %v556, %v953
        %v1005 = vadd.f32 %v557, %v957
        %v1006 = vadd.f32 %v558, %v961
        %v1007 = vadd.f32 %v559, %v965
        %v1008 = vadd.f32 %v560, %v969
        %v1009 = vadd.f32 %v561, %v973
        %v1010 = vadd.f32 %v562, %v929
        %v1011 = vadd.f32 %v563, %v933
        %v1012 = vadd.f32 %v564, %v937
        %v1013 = vadd.f32 %v565, %v941
        %v1014 = vadd.f32 %v566, %v945
        %v1015 = vadd.f32 %v567, %v949
        %v1016 = vadd.f32 %v568, %v953
        %v1017 = vadd.f32 %v569, %v957
        %v1018 = vadd.f32 %v570, %v961
        %v1019 = vadd.f32 %v571, %v965
        %v1020 = vadd.f32 %v572, %v969
        %v1021 = vadd.f32 %v573, %v973
        %v1022 = vadd.f32 %v574, %v929
        %v1023 = vadd.f32 %v575, %v933
        %v1024 = vadd.f32 %v576, %v937
        %v1025 = vadd.f32 %v577, %v941
        %v1026 = vadd.f32 %v578, %v945
        %v1027 = vadd.f32 %v579, %v949
        %v1028 = vadd.f32 %v580, %v953
        %v1029 = vadd.f32 %v581, %v957
        %v1030 = vadd.f32 %v582, %v961
        %v1031 = vadd.f32 %v583, %v965
        %v1032 = vadd.f32 %v584, %v969
        %v1033 = vadd.f32 %v585, %v973
        %v1034 = vadd.f32 %v586, %v929
        %v1035 = vadd.f32 %v587, %v933
        %v1036 = vadd.f32 %v588, %v937
        %v1037 = vadd.f32 %v589, %v941
        %v1038 = vadd.f32 %v590, %v945
        %v1039 = vadd.f32 %v591, %v949
        %v1040 = vadd.f32 %v592, %v953
        %v1041 = vadd.f32 %v593, %v957
        %v1042 = vadd.f32 %v594, %v961
        %v1043 = vadd.f32 %v595, %v965
        %v1044 = vadd.f32 %v596, %v969
        %v1045 = vadd.f32 %v597, %v973
        %v1046 = vadd.f32 %v598, %v929
        %v1047 = vadd.f32 %v599, %v933
        %v1048 = vadd.f32 %v600, %v937
        %v1049 = vadd.f32 %v601, %v941
        %v1050 = vadd.f32 %v602, %v945
        %v1051 = vadd.f32 %v603, %v949
        %v1052 = vadd.f32 %v604, %v953
        %v1053 = vadd.f32 %v605, %v957
        %v1054 = vadd.f32 %v606, %v961
        %v1055 = vadd.f32 %v607, %v965
        %v1056 = vadd.f32 %v608, %v969
        %v1057 = vadd.f32 %v609, %v973
        %v1058 = vadd.f32 %v610, %v929
        %v1059 = vadd.f32 %v611, %v933
        %v1060 = vadd.f32 %v612, %v937
        %v1061 = vadd.f32 %v613, %v941
        %v1062 = vadd.f32 %v614, %v945
        %v1063 = vadd.f32 %v615, %v949
        %v1064 = vadd.f32 %v616, %v953
        %v1065 = vadd.f32 %v617, %v957
        %v1066 = vadd.f32 %v618, %v961
        %v1067 = vadd.f32 %v619, %v965
        %v1068 = vadd.f32 %v620, %v969
        %v1069 = vadd.f32 %v621, %v973
        %v1070 = vadd.f32 %v622, %v929
        %v1071 = vadd.f32 %v623, %v933
        %v1072 = vadd.f32 %v624, %v937
        %v1073 = vadd.f32 %v625, %v941
        %v1074 = vadd.f32 %v626, %v945
        %v1075 = vadd.f32 %v627, %v949
        %v1076 = vadd.f32 %v628, %v953
        %v1077 = vadd.f32 %v629, %v957
        %v1078 = vadd.f32 %v630, %v961
        %v1079 = vadd.f32 %v631, %v965
        %v1080 = vadd.f32 %v632, %v969
        %v1081 = vadd.f32 %v633, %v973
        %v1082 = vadd.f32 %v634, %v929
        %v1083 = vadd.f32 %v635, %v933
        %v1084 = vadd.f32 %v636, %v937
        %v1085 = vadd.f32 %v637, %v941
        %v1086 = vadd.f32 %v638, %v945
        %v1087 = vadd.f32 %v639, %v949
        %v1088 = vadd.f32 %v640, %v953
        %v1089 = vadd.f32 %v641, %v957
        %v1090 = vadd.f32 %v642, %v961
        %v1091 = vadd.f32 %v643, %v965
        %v1092 = vadd.f32 %v644, %v969
        %v1093 = vadd.f32 %v645, %v973
        %v1094 = vadd.f32 %v646, %v929
        %v1095 = vadd.f32 %v647, %v933
        %v1096 = vadd.f32 %v648, %v937
        %v1097 = vadd.f32 %v649, %v941
        %v1098 = vadd.f32 %v650, %v945
        %v1099 = vadd.f32 %v651, %v949
        %v1100 = vadd.f32 %v652, %v953
        %v1101 = vadd.f32 %v653, %v957
        %v1102 = vadd.f32 %v654, %v961
        %v1103 = vadd.f32 %v655, %v965
        %v1104 = vadd.f32 %v656, %v969
        %v1105 = vadd.f32 %v657, %v973
        %v1106 = vadd.f32 %v658, %v929
        %v1107 = vadd.f32 %v659, %v933
        %v1108 = vadd.f32 %v660, %v937
        %v1109 = vadd.f32 %v661, %v941
        %v1110 = vadd.f32 %v662, %v945
        %v1111 = vadd.f32 %v663, %v949
        %v1112 = vadd.f32 %v664, %v953
        %v1113 = vadd.f32 %v665, %v957
        %v1114 = vadd.f32 %v666, %v961
        %v1115 = vadd.f32 %v667, %v965
        %v1116 = vadd.f32 %v668, %v969
        %v1117 = vadd.f32 %v669, %v973
        %v1118 = vadd.f32 %v670, %v929
        %v1119 = vadd.f32 %v671, %v933
        %v1120 = vadd.f32 %v672, %v937
        %v1121 = vadd.f32 %v673, %v941
        %v1122 = vadd.f32 %v674, %v945
        %v1123 = vadd.f32 %v675, %v949
        %v1124 = vadd.f32 %v676, %v953
        %v1125 = vadd.f32 %v677, %v957
        %v1126 = vadd.f32 %v678, %v961
        %v1127 = vadd.f32 %v679, %v965
        %v1128 = vadd.f32 %v680, %v969
        %v1129 = vadd.f32 %v681, %v973
        %v1130 = vadd.f32 %v682, %v929
        %v1131 = vadd.f32 %v683, %v933
        %v1132 = vadd.f32 %v684, %v937
        %v1133 = vadd.f32 %v685, %v941
        %v1134 = vadd.f32 %v686, %v945
        %v1135 = vadd.f32 %v687, %v949
        %v1136 = vadd.f32 %v688, %v953
        %v1137 = vadd.f32 %v689, %v957
        %v1138 = vadd.f32 %v690, %v961
        %v1139 = vadd.f32 %v691, %v965
        %v1140 = vadd.f32 %v692, %v969
        %v1141 = vadd.f32 %v693, %v973
        %v1142 = vadd.f32 %v694, %v929
        %v1143 = vadd.f32 %v695, %v933
        %v1144 = vadd.f32 %v696, %v937
        %v1145 = vadd.f32 %v697, %v941
        %v1146 = vadd.f32 %v698, %v945
        %v1147 = vadd.f32 %v699, %v949
        %v1148 = vadd.f32 %v700, %v953
        %v1149 = vadd.f32 %v701, %v957
        %v1150 = vadd.f32 %v702, %v961
        %v1151 = vadd.f32 %v703, %v965
        %v1152 = vadd.f32 %v704, %v969
        %v1153 = vadd.f32 %v705, %v973
        %v1154 = vadd.f32 %v706, %v929
        %v1155 = vadd.f32 %v707, %v933
        %v1156 = vadd.f32 %v708, %v937
        %v1157 = vadd.f32 %v709, %v941
        %v1158 = vadd.f32 %v710, %v945
        %v1159 = vadd.f32 %v711, %v949
        %v1160 = vadd.f32 %v712, %v953
        %v1161 = vadd.f32 %v713, %v957
        %v1162 = vadd.f32 %v714, %v961
        %v1163 = vadd.f32 %v715, %v965
        %v1164 = vadd.f32 %v716, %v969
        %v1165 = vadd.f32 %v717, %v973
        %v1166 = vadd.f32 %v718, %v929
        %v1167 = vadd.f32 %v719, %v933
        %v1168 = vadd.f32 %v720, %v937
        %v1169 = vadd.f32 %v721, %v941
        %v1170 = vadd.f32 %v722, %v945
        %v1171 = vadd.f32 %v723, %v949
        %v1172 = vadd.f32 %v724, %v953
        %v1173 = vadd.f32 %v725, %v957
        %v1174 = vadd.f32 %v726, %v961
        %v1175 = vadd.f32 %v727, %v965
        %v1176 = vadd.f32 %v728, %v969
        %v1177 = vadd.f32 %v729, %v973
        %v1178 = vadd.f32 %v730, %v929
        %v1179 = vadd.f32 %v731, %v933
        %v1180 = vadd.f32 %v732, %v937
        %v1181 = vadd.f32 %v733, %v941
        %v1182 = vadd.f32 %v734, %v945
        %v1183 = vadd.f32 %v735, %v949
        %v1184 = vadd.f32 %v736, %v953
        %v1185 = vadd.f32 %v737, %v957
        %v1186 = vadd.f32 %v738, %v961
        %v1187 = vadd.f32 %v739, %v965
        %v1188 = vadd.f32 %v740, %v969
        %v1189 = vadd.f32 %v741, %v973
        %v1190 = vadd.f32 %v742, %v929
        %v1191 = vadd.f32 %v743, %v933
        %v1192 = vadd.f32 %v744, %v937
        %v1193 = vadd.f32 %v745, %v941
        %v1194 = vadd.f32 %v746, %v945
        %v1195 = vadd.f32 %v747, %v949
        %v1196 = vadd.f32 %v748, %v953
        %v1197 = vadd.f32 %v749, %v957
        %v1198 = vadd.f32 %v750, %v961
        %v1199 = vadd.f32 %v751, %v965
        %v1200 = vadd.f32 %v752, %v969
        %v1201 = vadd.f32 %v753, %v973
        %v1202 = vadd.f32 %v754, %v929
        %v1203 = vadd.f32 %v755, %v933
        %v1204 = vadd.f32 %v756, %v937
        %v1205 = vadd.f32 %v757, %v941
        %v1206 = vadd.f32 %v758, %v945
        %v1207 = vadd.f32 %v759, %v949
        %v1208 = vadd.f32 %v760, %v953
        %v1209 = vadd.f32 %v761, %v957
        %v1210 = vadd.f32 %v762, %v961
        %v1211 = vadd.f32 %v763, %v965
        %v1212 = vadd.f32 %v764, %v969
        %v1213 = vadd.f32 %v765, %v973
        %v1214 = vadd.f32 %v766, %v929
        %v1215 = vadd.f32 %v767, %v933
        %v1216 = vadd.f32 %v768, %v937
        %v1217 = vadd.f32 %v769, %v941
        %v1218 = vadd.f32 %v770, %v945
        %v1219 = vadd.f32 %v771, %v949
        %v1220 = vadd.f32 %v772, %v953
        %v1221 = vadd.f32 %v773, %v957
        %v1222 = vadd.f32 %v774, %v961
        %v1223 = vadd.f32 %v775, %v965
        %v1224 = vadd.f32 %v776, %v969
        %v1225 = vadd.f32 %v777, %v973
        %v1226 = vadd.f32 %v778, %v929
        %v1227 = vadd.f32 %v779, %v933
        %v1228 = vadd.f32 %v780, %v937
        %v1229 = vadd.f32 %v781, %v941
        %v1230 = vadd.f32 %v782, %v945
        %v1231 = vadd.f32 %v783, %v949
        %v1232 = vadd.f32 %v784, %v953
        %v1233 = vadd.f32 %v785, %v957
        %v1234 = vadd.f32 %v786, %v961
        %v1235 = vadd.f32 %v787, %v965
        %v1236 = vadd.f32 %v788, %v969
        %v1237 = vadd.f32 %v789, %v973
        %v1238 = vadd.f32 %v790, %v929
        %v1239 = vadd.f32 %v791, %v933
        %v1240 = vadd.f32 %v792, %v937
        %v1241 = vadd.f32 %v793, %v941
        %v1242 = vadd.f32 %v794, %v945
        %v1243 = vadd.f32 %v795, %v949
        %v1244 = vadd.f32 %v796, %v953
        %v1245 = vadd.f32 %v797, %v957
        %v1246 = vadd.f32 %v798, %v961
        %v1247 = vadd.f32 %v799, %v965
        %v1248 = vadd.f32 %v800, %v969
        %v1249 = vadd.f32 %v801, %v973
        %v1250 = vadd.f32 %v802, %v929
        %v1251 = vadd.f32 %v803, %v933
        %v1252 = vadd.f32 %v804, %v937
        %v1253 = vadd.f32 %v805, %v941
        %v1254 = vadd.f32 %v806, %v945
        %v1255 = vadd.f32 %v807, %v949
        %v1256 = vadd.f32 %v808, %v953
        %v1257 = vadd.f32 %v809, %v957
        %v1258 = vadd.f32 %v810, %v961
        %v1259 = vadd.f32 %v811, %v965
        %v1260 = vadd.f32 %v812, %v969
        %v1261 = vadd.f32 %v813, %v973
        %v1262 = vadd.f32 %v814, %v929
        %v1263 = vadd.f32 %v815, %v933
        %v1264 = vadd.f32 %v816, %v937
        %v1265 = vadd.f32 %v817, %v941
        %v1266 = vadd.f32 %v818, %v945
        %v1267 = vadd.f32 %v819, %v949
        %v1268 = vadd.f32 %v820, %v953
        %v1269 = vadd.f32 %v821, %v957
        %v1270 = vadd.f32 %v822, %v961
        %v1271 = vadd.f32 %v823, %v965
        %v1272 = vadd.f32 %v824, %v969
        %v1273 = vadd.f32 %v825, %v973
        %v1274 = vadd.f32 %v826, %v929
        %v1275 = vadd.f32 %v827, %v933
        %v1276 = vadd.f32 %v828, %v937
        %v1277 = vadd.f32 %v829, %v941
        %v1278 = vadd.f32 %v830, %v945
        %v1279 = vadd.f32 %v831, %v949
        %v1280 = vadd.f32 %v832, %v953
        %v1281 = vadd.f32 %v833, %v957
        %v1282 = vadd.f32 %v834, %v961
        %v1283 = vadd.f32 %v835, %v965
        %v1284 = vadd.f32 %v836, %v969
        %v1285 = vadd.f32 %v837, %v973
        %v1286 = vadd.f32 %v838, %v929
        %v1287 = vadd.f32 %v839, %v933
        %v1288 = vadd.f32 %v840, %v937
        %v1289 = vadd.f32 %v841, %v941
        %v1290 = vadd.f32 %v842, %v945
        %v1291 = vadd.f32 %v843, %v949
        %v1292 = vadd.f32 %v844, %v953
        %v1293 = vadd.f32 %v845, %v957
        %v1294 = vadd.f32 %v846, %v961
        %v1295 = vadd.f32 %v847, %v965
        %v1296 = vadd.f32 %v848, %v969
        %v1297 = vadd.f32 %v849, %v973
        %v1298 = vadd.f32 %v850, %v929
        %v1299 = vadd.f32 %v851, %v933
        %v1300 = vadd.f32 %v852, %v937
        %v1301 = vadd.f32 %v853, %v941
        %v1302 = vadd.f32 %v854, %v945
        %v1303 = vadd.f32 %v855, %v949
        %v1304 = vadd.f32 %v856, %v953
        %v1305 = vadd.f32 %v857, %v957
        %v1306 = vadd.f32 %v858, %v961
        %v1307 = vadd.f32 %v859, %v965
        %v1308 = vadd.f32 %v860, %v969
        %v1309 = vadd.f32 %v861, %v973
        %v1310 = vadd.f32 %v862, %v929
        %v1311 = vadd.f32 %v863, %v933
        %v1312 = vadd.f32 %v864, %v937
        %v1313 = vadd.f32 %v865, %v941
        %v1314 = vadd.f32 %v866, %v945
        %v1315 = vadd.f32 %v867, %v949
        %v1316 = vadd.f32 %v868, %v953
        %v1317 = vadd.f32 %v869, %v957
        %v1318 = vadd.f32 %v870, %v961
        %v1319 = vadd.f32 %v871, %v965
        %v1320 = vadd.f32 %v872, %v969
        %v1321 = vadd.f32 %v873, %v973
        %v1322 = vadd.f32 %v874, %v929
        %v1323 = vadd.f32 %v875, %v933
        %v1324 = vadd.f32 %v876, %v937
        %v1325 = vadd.f32 %v877, %v941
        %v1326 = vadd.f32 %v878, %v945
        %v1327 = vadd.f32 %v879, %v949
        %v1328 = vadd.f32 %v880, %v953
        %v1329 = vadd.f32 %v881, %v957
        %v1330 = vadd.f32 %v882, %v961
        %v1331 = vadd.f32 %v883, %v965
        %v1332 = vadd.f32 %v884, %v969
        %v1333 = vadd.f32 %v885, %v973
        %v1334 = vadd.f32 %v886, %v929
        %v1335 = vadd.f32 %v887, %v933
        %v1336 = vadd.f32 %v888, %v937
        %v1337 = vadd.f32 %v889, %v941
        %v1338 = vadd.f32 %v890, %v945
        %v1339 = vadd.f32 %v891, %v949
        %v1340 = vadd.f32 %v892, %v953
        %v1341 = vadd.f32 %v893, %v957
        %v1342 = vadd.f32 %v894, %v961
        %v1343 = vadd.f32 %v895, %v965
        %v1344 = vadd.f32 %v896, %v969
        %v1345 = vadd.f32 %v897, %v973
        %v1346 = vadd.f32 %v898, %v929
        %v1347 = vadd.f32 %v899, %v933
        %v1348 = vadd.f32 %v900, %v937
        %v1349 = vadd.f32 %v901, %v941
        %v1350 = vadd.f32 %v902, %v945
        %v1351 = vadd.f32 %v903, %v949
        %v1352 = vadd.f32 %v904, %v953
        %v1353 = vadd.f32 %v905, %v957
        %v1354 = vadd.f32 %v906, %v961
        %v1355 = vadd.f32 %v907, %v965
        %v1356 = vadd.f32 %v908, %v969
        %v1357 = vadd.f32 %v909, %v973
        %v1358 = vadd.f32 %v910, %v929
        %v1359 = vadd.f32 %v911, %v933
        %v1360 = vadd.f32 %v912, %v937
        %v1361 = vadd.f32 %v913, %v941
        %v1362 = vadd.f32 %v914, %v945
        %v1363 = vadd.f32 %v915, %v949
        %v1364 = vadd.f32 %v916, %v953
        %v1365 = vadd.f32 %v917, %v957
        %v1366 = vadd.f32 %v918, %v961
        %v1367 = vadd.f32 %v919, %v965
        %v1368 = vadd.f32 %v920, %v969
        %v1369 = vadd.f32 %v921, %v973
        %s1370 = scalar_lea.vmem %s1, 1
        %v1371 = vld [vmem:[%s1370] ss:$4 sm:$0xff]
        %s1372 = scalar_lea.vmem %s1, 33
        %v1373 = vld [vmem:[%s1372] ss:$4 sm:$0xf]
        %1374 = vset.pattern.permute.xlu0 1
        %1375 = vperm.xlu0 %1374, %v281
        %v1376 = vpop.permute.xlu0 %1375
        %1378 = vset.pattern.permute.xlu0 1
        %1379 = vperm.xlu0 %1378, %v282
        %v1380 = vpop.permute.xlu0 %1379
        %1382 = vset.pattern.permute.xlu0 1
        %1383 = vperm.xlu0 %1382, %v283
        %v1384 = vpop.permute.xlu0 %1383
        %1386 = vset.pattern.permute.xlu0 1
        %1387 = vperm.xlu0 %1386, %v284
        %v1388 = vpop.permute.xlu0 %1387
        %1390 = vset.pattern.permute.xlu0 1
        %1391 = vperm.xlu0 %1390, %v285
        %v1392 = vpop.permute.xlu0 %1391
        %1394 = vset.pattern.permute.xlu0 1
        %1395 = vperm.xlu0 %1394, %v286
        %v1396 = vpop.permute.xlu0 %1395
        %1398 = vset.pattern.permute.xlu0 1
        %1399 = vperm.xlu0 %1398, %v287
        %v1400 = vpop.permute.xlu0 %1399
        %1402 = vset.pattern.permute.xlu0 1
        %1403 = vperm.xlu0 %1402, %v288
        %v1404 = vpop.permute.xlu0 %1403
        %1406 = vset.pattern.permute.xlu0 1
        %1407 = vperm.xlu0 %1406, %v289
        %v1408 = vpop.permute.xlu0 %1407
        %1410 = vset.pattern.permute.xlu0 1
        %1411 = vperm.xlu0 %1410, %v290
        %v1412 = vpop.permute.xlu0 %1411
        %1414 = vset.pattern.permute.xlu0 1
        %1415 = vperm.xlu0 %1414, %v291
        %v1416 = vpop.permute.xlu0 %1415
        %1418 = vset.pattern.permute.xlu0 1
        %1419 = vperm.xlu0 %1418, %v292
        %v1420 = vpop.permute.xlu0 %1419
        %1422 = vset.pattern.permute.xlu0 1
        %1423 = vperm.xlu0 %1422, %v293
        %v1424 = vpop.permute.xlu0 %1423
        %1426 = vset.pattern.permute.xlu0 1
        %1427 = vperm.xlu0 %1426, %v294
        %v1428 = vpop.permute.xlu0 %1427
        %1430 = vset.pattern.permute.xlu0 1
        %1431 = vperm.xlu0 %1430, %v295
        %v1432 = vpop.permute.xlu0 %1431
        %1434 = vset.pattern.permute.xlu0 1
        %1435 = vperm.xlu0 %1434, %v296
        %v1436 = vpop.permute.xlu0 %1435
        %1438 = vset.pattern.permute.xlu0 1
        %1439 = vperm.xlu0 %1438, %v297
        %v1440 = vpop.permute.xlu0 %1439
        %1442 = vset.pattern.permute.xlu0 1
        %1443 = vperm.xlu0 %1442, %v298
        %v1444 = vpop.permute.xlu0 %1443
        %1446 = vset.pattern.permute.xlu0 1
        %1447 = vperm.xlu0 %1446, %v299
        %v1448 = vpop.permute.xlu0 %1447
        %1450 = vset.pattern.permute.xlu0 1
        %1451 = vperm.xlu0 %1450, %v300
        %v1452 = vpop.permute.xlu0 %1451
        %1454 = vset.pattern.permute.xlu0 1
        %1455 = vperm.xlu0 %1454, %v301
        %v1456 = vpop.permute.xlu0 %1455
        %1458 = vset.pattern.permute.xlu0 1
        %1459 = vperm.xlu0 %1458, %v302
        %v1460 = vpop.permute.xlu0 %1459
        %1462 = vset.pattern.permute.xlu0 1
        %1463 = vperm.xlu0 %1462, %v303
        %v1464 = vpop.permute.xlu0 %1463
        %1466 = vset.pattern.permute.xlu0 1
        %1467 = vperm.xlu0 %1466, %v304
        %v1468 = vpop.permute.xlu0 %1467
        %1470 = vset.pattern.permute.xlu0 1
        %1471 = vperm.xlu0 %1470, %v305
        %v1472 = vpop.permute.xlu0 %1471
        %1474 = vset.pattern.permute.xlu0 1
        %1475 = vperm.xlu0 %1474, %v306
        %v1476 = vpop.permute.xlu0 %1475
        %1478 = vset.pattern.permute.xlu0 1
        %1479 = vperm.xlu0 %1478, %v307
        %v1480 = vpop.permute.xlu0 %1479
        %1482 = vset.pattern.permute.xlu0 1
        %1483 = vperm.xlu0 %1482, %v308
        %v1484 = vpop.permute.xlu0 %1483
        %1486 = vset.pattern.permute.xlu0 1
        %1487 = vperm.xlu0 %1486, %v309
        %v1488 = vpop.permute.xlu0 %1487
        %1490 = vset.pattern.permute.xlu0 1
        %1491 = vperm.xlu0 %1490, %v310
        %v1492 = vpop.permute.xlu0 %1491
        %1494 = vset.pattern.permute.xlu0 1
        %1495 = vperm.xlu0 %1494, %v311
        %v1496 = vpop.permute.xlu0 %1495
        %1498 = vset.pattern.permute.xlu0 1
        %1499 = vperm.xlu0 %1498, %v312
        %v1500 = vpop.permute.xlu0 %1499
        %v1504 = vlaneseq
        %v1505 = vshrl.u32 %v1504, 7
        %v1506 = vsub.s32 0, %v1505
        %v1507 = vrot.slane %v1371, %v1506
        %v1508 = vlaneseq
        %v1509 = vshrl.u32 %v1508, 7
        %v1510 = vsub.s32 1, %v1509
        %v1511 = vrot.slane %v1371, %v1510
        %v1512 = vlaneseq
        %v1513 = vshrl.u32 %v1512, 7
        %v1514 = vsub.s32 2, %v1513
        %v1515 = vrot.slane %v1371, %v1514
        %v1516 = vlaneseq
        %v1517 = vshrl.u32 %v1516, 7
        %v1518 = vsub.s32 3, %v1517
        %v1519 = vrot.slane %v1371, %v1518
        %v1520 = vlaneseq
        %v1521 = vshrl.u32 %v1520, 7
        %v1522 = vsub.s32 4, %v1521
        %v1523 = vrot.slane %v1371, %v1522
        %v1524 = vlaneseq
        %v1525 = vshrl.u32 %v1524, 7
        %v1526 = vsub.s32 5, %v1525
        %v1527 = vrot.slane %v1371, %v1526
        %v1528 = vlaneseq
        %v1529 = vshrl.u32 %v1528, 7
        %v1530 = vsub.s32 6, %v1529
        %v1531 = vrot.slane %v1371, %v1530
        %v1532 = vlaneseq
        %v1533 = vshrl.u32 %v1532, 7
        %v1534 = vsub.s32 7, %v1533
        %v1535 = vrot.slane %v1371, %v1534
        %v1536 = vlaneseq
        %v1537 = vshrl.u32 %v1536, 7
        %v1538 = vsub.s32 0, %v1537
        %v1539 = vrot.slane %v1373, %v1538
        %v1540 = vlaneseq
        %v1541 = vshrl.u32 %v1540, 7
        %v1542 = vsub.s32 1, %v1541
        %v1543 = vrot.slane %v1373, %v1542
        %v1544 = vlaneseq
        %v1545 = vshrl.u32 %v1544, 7
        %v1546 = vsub.s32 2, %v1545
        %v1547 = vrot.slane %v1373, %v1546
        %v1548 = vlaneseq
        %v1549 = vshrl.u32 %v1548, 7
        %v1550 = vsub.s32 3, %v1549
        %v1551 = vrot.slane %v1373, %v1550
        %v1564 = vmul.f32 %v1376, %v1507
        %v1565 = vmul.f32 %v1376, %v1511
        %v1566 = vmul.f32 %v1376, %v1515
        %v1567 = vmul.f32 %v1376, %v1519
        %v1568 = vmul.f32 %v1376, %v1523
        %v1569 = vmul.f32 %v1376, %v1527
        %v1570 = vmul.f32 %v1376, %v1531
        %v1571 = vmul.f32 %v1376, %v1535
        %v1572 = vmul.f32 %v1376, %v1539
        %v1573 = vmul.f32 %v1376, %v1543
        %v1574 = vmul.f32 %v1376, %v1547
        %v1575 = vmul.f32 %v1376, %v1551
        %v1576 = vmul.f32 %v1380, %v1507
        %v1577 = vmul.f32 %v1380, %v1511
        %v1578 = vmul.f32 %v1380, %v1515
        %v1579 = vmul.f32 %v1380, %v1519
        %v1580 = vmul.f32 %v1380, %v1523
        %v1581 = vmul.f32 %v1380, %v1527
        %v1582 = vmul.f32 %v1380, %v1531
        %v1583 = vmul.f32 %v1380, %v1535
        %v1584 = vmul.f32 %v1380, %v1539
        %v1585 = vmul.f32 %v1380, %v1543
        %v1586 = vmul.f32 %v1380, %v1547
        %v1587 = vmul.f32 %v1380, %v1551
        %v1588 = vmul.f32 %v1384, %v1507
        %v1589 = vmul.f32 %v1384, %v1511
        %v1590 = vmul.f32 %v1384, %v1515
        %v1591 = vmul.f32 %v1384, %v1519
        %v1592 = vmul.f32 %v1384, %v1523
        %v1593 = vmul.f32 %v1384, %v1527
        %v1594 = vmul.f32 %v1384, %v1531
        %v1595 = vmul.f32 %v1384, %v1535
        %v1596 = vmul.f32 %v1384, %v1539
        %v1597 = vmul.f32 %v1384, %v1543
        %v1598 = vmul.f32 %v1384, %v1547
        %v1599 = vmul.f32 %v1384, %v1551
        %v1600 = vmul.f32 %v1388, %v1507
        %v1601 = vmul.f32 %v1388, %v1511
        %v1602 = vmul.f32 %v1388, %v1515
        %v1603 = vmul.f32 %v1388, %v1519
        %v1604 = vmul.f32 %v1388, %v1523
        %v1605 = vmul.f32 %v1388, %v1527
        %v1606 = vmul.f32 %v1388, %v1531
        %v1607 = vmul.f32 %v1388, %v1535
        %v1608 = vmul.f32 %v1388, %v1539
        %v1609 = vmul.f32 %v1388, %v1543
        %v1610 = vmul.f32 %v1388, %v1547
        %v1611 = vmul.f32 %v1388, %v1551
        %v1612 = vmul.f32 %v1392, %v1507
        %v1613 = vmul.f32 %v1392, %v1511
        %v1614 = vmul.f32 %v1392, %v1515
        %v1615 = vmul.f32 %v1392, %v1519
        %v1616 = vmul.f32 %v1392, %v1523
        %v1617 = vmul.f32 %v1392, %v1527
        %v1618 = vmul.f32 %v1392, %v1531
        %v1619 = vmul.f32 %v1392, %v1535
        %v1620 = vmul.f32 %v1392, %v1539
        %v1621 = vmul.f32 %v1392, %v1543
        %v1622 = vmul.f32 %v1392, %v1547
        %v1623 = vmul.f32 %v1392, %v1551
        %v1624 = vmul.f32 %v1396, %v1507
        %v1625 = vmul.f32 %v1396, %v1511
        %v1626 = vmul.f32 %v1396, %v1515
        %v1627 = vmul.f32 %v1396, %v1519
        %v1628 = vmul.f32 %v1396, %v1523
        %v1629 = vmul.f32 %v1396, %v1527
        %v1630 = vmul.f32 %v1396, %v1531
        %v1631 = vmul.f32 %v1396, %v1535
        %v1632 = vmul.f32 %v1396, %v1539
        %v1633 = vmul.f32 %v1396, %v1543
        %v1634 = vmul.f32 %v1396, %v1547
        %v1635 = vmul.f32 %v1396, %v1551
        %v1636 = vmul.f32 %v1400, %v1507
        %v1637 = vmul.f32 %v1400, %v1511
        %v1638 = vmul.f32 %v1400, %v1515
        %v1639 = vmul.f32 %v1400, %v1519
        %v1640 = vmul.f32 %v1400, %v1523
        %v1641 = vmul.f32 %v1400, %v1527
        %v1642 = vmul.f32 %v1400, %v1531
        %v1643 = vmul.f32 %v1400, %v1535
        %v1644 = vmul.f32 %v1400, %v1539
        %v1645 = vmul.f32 %v1400, %v1543
        %v1646 = vmul.f32 %v1400, %v1547
        %v1647 = vmul.f32 %v1400, %v1551
        %v1648 = vmul.f32 %v1404, %v1507
        %v1649 = vmul.f32 %v1404, %v1511
        %v1650 = vmul.f32 %v1404, %v1515
        %v1651 = vmul.f32 %v1404, %v1519
        %v1652 = vmul.f32 %v1404, %v1523
        %v1653 = vmul.f32 %v1404, %v1527
        %v1654 = vmul.f32 %v1404, %v1531
        %v1655 = vmul.f32 %v1404, %v1535
        %v1656 = vmul.f32 %v1404, %v1539
        %v1657 = vmul.f32 %v1404, %v1543
        %v1658 = vmul.f32 %v1404, %v1547
        %v1659 = vmul.f32 %v1404, %v1551
        %v1660 = vmul.f32 %v1408, %v1507
        %v1661 = vmul.f32 %v1408, %v1511
        %v1662 = vmul.f32 %v1408, %v1515
        %v1663 = vmul.f32 %v1408, %v1519
        %v1664 = vmul.f32 %v1408, %v1523
        %v1665 = vmul.f32 %v1408, %v1527
        %v1666 = vmul.f32 %v1408, %v1531
        %v1667 = vmul.f32 %v1408, %v1535
        %v1668 = vmul.f32 %v1408, %v1539
        %v1669 = vmul.f32 %v1408, %v1543
        %v1670 = vmul.f32 %v1408, %v1547
        %v1671 = vmul.f32 %v1408, %v1551
        %v1672 = vmul.f32 %v1412, %v1507
        %v1673 = vmul.f32 %v1412, %v1511
        %v1674 = vmul.f32 %v1412, %v1515
        %v1675 = vmul.f32 %v1412, %v1519
        %v1676 = vmul.f32 %v1412, %v1523
        %v1677 = vmul.f32 %v1412, %v1527
        %v1678 = vmul.f32 %v1412, %v1531
        %v1679 = vmul.f32 %v1412, %v1535
        %v1680 = vmul.f32 %v1412, %v1539
        %v1681 = vmul.f32 %v1412, %v1543
        %v1682 = vmul.f32 %v1412, %v1547
        %v1683 = vmul.f32 %v1412, %v1551
        %v1684 = vmul.f32 %v1416, %v1507
        %v1685 = vmul.f32 %v1416, %v1511
        %v1686 = vmul.f32 %v1416, %v1515
        %v1687 = vmul.f32 %v1416, %v1519
        %v1688 = vmul.f32 %v1416, %v1523
        %v1689 = vmul.f32 %v1416, %v1527
        %v1690 = vmul.f32 %v1416, %v1531
        %v1691 = vmul.f32 %v1416, %v1535
        %v1692 = vmul.f32 %v1416, %v1539
        %v1693 = vmul.f32 %v1416, %v1543
        %v1694 = vmul.f32 %v1416, %v1547
        %v1695 = vmul.f32 %v1416, %v1551
        %v1696 = vmul.f32 %v1420, %v1507
        %v1697 = vmul.f32 %v1420, %v1511
        %v1698 = vmul.f32 %v1420, %v1515
        %v1699 = vmul.f32 %v1420, %v1519
        %v1700 = vmul.f32 %v1420, %v1523
        %v1701 = vmul.f32 %v1420, %v1527
        %v1702 = vmul.f32 %v1420, %v1531
        %v1703 = vmul.f32 %v1420, %v1535
        %v1704 = vmul.f32 %v1420, %v1539
        %v1705 = vmul.f32 %v1420, %v1543
        %v1706 = vmul.f32 %v1420, %v1547
        %v1707 = vmul.f32 %v1420, %v1551
        %v1708 = vmul.f32 %v1424, %v1507
        %v1709 = vmul.f32 %v1424, %v1511
        %v1710 = vmul.f32 %v1424, %v1515
        %v1711 = vmul.f32 %v1424, %v1519
        %v1712 = vmul.f32 %v1424, %v1523
        %v1713 = vmul.f32 %v1424, %v1527
        %v1714 = vmul.f32 %v1424, %v1531
        %v1715 = vmul.f32 %v1424, %v1535
        %v1716 = vmul.f32 %v1424, %v1539
        %v1717 = vmul.f32 %v1424, %v1543
        %v1718 = vmul.f32 %v1424, %v1547
        %v1719 = vmul.f32 %v1424, %v1551
        %v1720 = vmul.f32 %v1428, %v1507
        %v1721 = vmul.f32 %v1428, %v1511
        %v1722 = vmul.f32 %v1428, %v1515
        %v1723 = vmul.f32 %v1428, %v1519
        %v1724 = vmul.f32 %v1428, %v1523
        %v1725 = vmul.f32 %v1428, %v1527
        %v1726 = vmul.f32 %v1428, %v1531
        %v1727 = vmul.f32 %v1428, %v1535
        %v1728 = vmul.f32 %v1428, %v1539
        %v1729 = vmul.f32 %v1428, %v1543
        %v1730 = vmul.f32 %v1428, %v1547
        %v1731 = vmul.f32 %v1428, %v1551
        %v1732 = vmul.f32 %v1432, %v1507
        %v1733 = vmul.f32 %v1432, %v1511
        %v1734 = vmul.f32 %v1432, %v1515
        %v1735 = vmul.f32 %v1432, %v1519
        %v1736 = vmul.f32 %v1432, %v1523
        %v1737 = vmul.f32 %v1432, %v1527
        %v1738 = vmul.f32 %v1432, %v1531
        %v1739 = vmul.f32 %v1432, %v1535
        %v1740 = vmul.f32 %v1432, %v1539
        %v1741 = vmul.f32 %v1432, %v1543
        %v1742 = vmul.f32 %v1432, %v1547
        %v1743 = vmul.f32 %v1432, %v1551
        %v1744 = vmul.f32 %v1436, %v1507
        %v1745 = vmul.f32 %v1436, %v1511
        %v1746 = vmul.f32 %v1436, %v1515
        %v1747 = vmul.f32 %v1436, %v1519
        %v1748 = vmul.f32 %v1436, %v1523
        %v1749 = vmul.f32 %v1436, %v1527
        %v1750 = vmul.f32 %v1436, %v1531
        %v1751 = vmul.f32 %v1436, %v1535
        %v1752 = vmul.f32 %v1436, %v1539
        %v1753 = vmul.f32 %v1436, %v1543
        %v1754 = vmul.f32 %v1436, %v1547
        %v1755 = vmul.f32 %v1436, %v1551
        %v1756 = vmul.f32 %v1440, %v1507
        %v1757 = vmul.f32 %v1440, %v1511
        %v1758 = vmul.f32 %v1440, %v1515
        %v1759 = vmul.f32 %v1440, %v1519
        %v1760 = vmul.f32 %v1440, %v1523
        %v1761 = vmul.f32 %v1440, %v1527
        %v1762 = vmul.f32 %v1440, %v1531
        %v1763 = vmul.f32 %v1440, %v1535
        %v1764 = vmul.f32 %v1440, %v1539
        %v1765 = vmul.f32 %v1440, %v1543
        %v1766 = vmul.f32 %v1440, %v1547
        %v1767 = vmul.f32 %v1440, %v1551
        %v1768 = vmul.f32 %v1444, %v1507
        %v1769 = vmul.f32 %v1444, %v1511
        %v1770 = vmul.f32 %v1444, %v1515
        %v1771 = vmul.f32 %v1444, %v1519
        %v1772 = vmul.f32 %v1444, %v1523
        %v1773 = vmul.f32 %v1444, %v1527
        %v1774 = vmul.f32 %v1444, %v1531
        %v1775 = vmul.f32 %v1444, %v1535
        %v1776 = vmul.f32 %v1444, %v1539
        %v1777 = vmul.f32 %v1444, %v1543
        %v1778 = vmul.f32 %v1444, %v1547
        %v1779 = vmul.f32 %v1444, %v1551
        %v1780 = vmul.f32 %v1448, %v1507
        %v1781 = vmul.f32 %v1448, %v1511
        %v1782 = vmul.f32 %v1448, %v1515
        %v1783 = vmul.f32 %v1448, %v1519
        %v1784 = vmul.f32 %v1448, %v1523
        %v1785 = vmul.f32 %v1448, %v1527
        %v1786 = vmul.f32 %v1448, %v1531
        %v1787 = vmul.f32 %v1448, %v1535
        %v1788 = vmul.f32 %v1448, %v1539
        %v1789 = vmul.f32 %v1448, %v1543
        %v1790 = vmul.f32 %v1448, %v1547
        %v1791 = vmul.f32 %v1448, %v1551
        %v1792 = vmul.f32 %v1452, %v1507
        %v1793 = vmul.f32 %v1452, %v1511
        %v1794 = vmul.f32 %v1452, %v1515
        %v1795 = vmul.f32 %v1452, %v1519
        %v1796 = vmul.f32 %v1452, %v1523
        %v1797 = vmul.f32 %v1452, %v1527
        %v1798 = vmul.f32 %v1452, %v1531
        %v1799 = vmul.f32 %v1452, %v1535
        %v1800 = vmul.f32 %v1452, %v1539
        %v1801 = vmul.f32 %v1452, %v1543
        %v1802 = vmul.f32 %v1452, %v1547
        %v1803 = vmul.f32 %v1452, %v1551
        %v1804 = vmul.f32 %v1456, %v1507
        %v1805 = vmul.f32 %v1456, %v1511
        %v1806 = vmul.f32 %v1456, %v1515
        %v1807 = vmul.f32 %v1456, %v1519
        %v1808 = vmul.f32 %v1456, %v1523
        %v1809 = vmul.f32 %v1456, %v1527
        %v1810 = vmul.f32 %v1456, %v1531
        %v1811 = vmul.f32 %v1456, %v1535
        %v1812 = vmul.f32 %v1456, %v1539
        %v1813 = vmul.f32 %v1456, %v1543
        %v1814 = vmul.f32 %v1456, %v1547
        %v1815 = vmul.f32 %v1456, %v1551
        %v1816 = vmul.f32 %v1460, %v1507
        %v1817 = vmul.f32 %v1460, %v1511
        %v1818 = vmul.f32 %v1460, %v1515
        %v1819 = vmul.f32 %v1460, %v1519
        %v1820 = vmul.f32 %v1460, %v1523
        %v1821 = vmul.f32 %v1460, %v1527
        %v1822 = vmul.f32 %v1460, %v1531
        %v1823 = vmul.f32 %v1460, %v1535
        %v1824 = vmul.f32 %v1460, %v1539
        %v1825 = vmul.f32 %v1460, %v1543
        %v1826 = vmul.f32 %v1460, %v1547
        %v1827 = vmul.f32 %v1460, %v1551
        %v1828 = vmul.f32 %v1464, %v1507
        %v1829 = vmul.f32 %v1464, %v1511
        %v1830 = vmul.f32 %v1464, %v1515
        %v1831 = vmul.f32 %v1464, %v1519
        %v1832 = vmul.f32 %v1464, %v1523
        %v1833 = vmul.f32 %v1464, %v1527
        %v1834 = vmul.f32 %v1464, %v1531
        %v1835 = vmul.f32 %v1464, %v1535
        %v1836 = vmul.f32 %v1464, %v1539
        %v1837 = vmul.f32 %v1464, %v1543
        %v1838 = vmul.f32 %v1464, %v1547
        %v1839 = vmul.f32 %v1464, %v1551
        %v1840 = vmul.f32 %v1468, %v1507
        %v1841 = vmul.f32 %v1468, %v1511
        %v1842 = vmul.f32 %v1468, %v1515
        %v1843 = vmul.f32 %v1468, %v1519
        %v1844 = vmul.f32 %v1468, %v1523
        %v1845 = vmul.f32 %v1468, %v1527
        %v1846 = vmul.f32 %v1468, %v1531
        %v1847 = vmul.f32 %v1468, %v1535
        %v1848 = vmul.f32 %v1468, %v1539
        %v1849 = vmul.f32 %v1468, %v1543
        %v1850 = vmul.f32 %v1468, %v1547
        %v1851 = vmul.f32 %v1468, %v1551
        %v1852 = vmul.f32 %v1472, %v1507
        %v1853 = vmul.f32 %v1472, %v1511
        %v1854 = vmul.f32 %v1472, %v1515
        %v1855 = vmul.f32 %v1472, %v1519
        %v1856 = vmul.f32 %v1472, %v1523
        %v1857 = vmul.f32 %v1472, %v1527
        %v1858 = vmul.f32 %v1472, %v1531
        %v1859 = vmul.f32 %v1472, %v1535
        %v1860 = vmul.f32 %v1472, %v1539
        %v1861 = vmul.f32 %v1472, %v1543
        %v1862 = vmul.f32 %v1472, %v1547
        %v1863 = vmul.f32 %v1472, %v1551
        %v1864 = vmul.f32 %v1476, %v1507
        %v1865 = vmul.f32 %v1476, %v1511
        %v1866 = vmul.f32 %v1476, %v1515
        %v1867 = vmul.f32 %v1476, %v1519
        %v1868 = vmul.f32 %v1476, %v1523
        %v1869 = vmul.f32 %v1476, %v1527
        %v1870 = vmul.f32 %v1476, %v1531
        %v1871 = vmul.f32 %v1476, %v1535
        %v1872 = vmul.f32 %v1476, %v1539
        %v1873 = vmul.f32 %v1476, %v1543
        %v1874 = vmul.f32 %v1476, %v1547
        %v1875 = vmul.f32 %v1476, %v1551
        %v1876 = vmul.f32 %v1480, %v1507
        %v1877 = vmul.f32 %v1480, %v1511
        %v1878 = vmul.f32 %v1480, %v1515
        %v1879 = vmul.f32 %v1480, %v1519
        %v1880 = vmul.f32 %v1480, %v1523
        %v1881 = vmul.f32 %v1480, %v1527
        %v1882 = vmul.f32 %v1480, %v1531
        %v1883 = vmul.f32 %v1480, %v1535
        %v1884 = vmul.f32 %v1480, %v1539
        %v1885 = vmul.f32 %v1480, %v1543
        %v1886 = vmul.f32 %v1480, %v1547
        %v1887 = vmul.f32 %v1480, %v1551
        %v1888 = vmul.f32 %v1484, %v1507
        %v1889 = vmul.f32 %v1484, %v1511
        %v1890 = vmul.f32 %v1484, %v1515
        %v1891 = vmul.f32 %v1484, %v1519
        %v1892 = vmul.f32 %v1484, %v1523
        %v1893 = vmul.f32 %v1484, %v1527
        %v1894 = vmul.f32 %v1484, %v1531
        %v1895 = vmul.f32 %v1484, %v1535
        %v1896 = vmul.f32 %v1484, %v1539
        %v1897 = vmul.f32 %v1484, %v1543
        %v1898 = vmul.f32 %v1484, %v1547
        %v1899 = vmul.f32 %v1484, %v1551
        %v1900 = vmul.f32 %v1488, %v1507
        %v1901 = vmul.f32 %v1488, %v1511
        %v1902 = vmul.f32 %v1488, %v1515
        %v1903 = vmul.f32 %v1488, %v1519
        %v1904 = vmul.f32 %v1488, %v1523
        %v1905 = vmul.f32 %v1488, %v1527
        %v1906 = vmul.f32 %v1488, %v1531
        %v1907 = vmul.f32 %v1488, %v1535
        %v1908 = vmul.f32 %v1488, %v1539
        %v1909 = vmul.f32 %v1488, %v1543
        %v1910 = vmul.f32 %v1488, %v1547
        %v1911 = vmul.f32 %v1488, %v1551
        %v1912 = vmul.f32 %v1492, %v1507
        %v1913 = vmul.f32 %v1492, %v1511
        %v1914 = vmul.f32 %v1492, %v1515
        %v1915 = vmul.f32 %v1492, %v1519
        %v1916 = vmul.f32 %v1492, %v1523
        %v1917 = vmul.f32 %v1492, %v1527
        %v1918 = vmul.f32 %v1492, %v1531
        %v1919 = vmul.f32 %v1492, %v1535
        %v1920 = vmul.f32 %v1492, %v1539
        %v1921 = vmul.f32 %v1492, %v1543
        %v1922 = vmul.f32 %v1492, %v1547
        %v1923 = vmul.f32 %v1492, %v1551
        %v1924 = vmul.f32 %v1496, %v1507
        %v1925 = vmul.f32 %v1496, %v1511
        %v1926 = vmul.f32 %v1496, %v1515
        %v1927 = vmul.f32 %v1496, %v1519
        %v1928 = vmul.f32 %v1496, %v1523
        %v1929 = vmul.f32 %v1496, %v1527
        %v1930 = vmul.f32 %v1496, %v1531
        %v1931 = vmul.f32 %v1496, %v1535
        %v1932 = vmul.f32 %v1496, %v1539
        %v1933 = vmul.f32 %v1496, %v1543
        %v1934 = vmul.f32 %v1496, %v1547
        %v1935 = vmul.f32 %v1496, %v1551
        %v1936 = vmul.f32 %v1500, %v1507
        %v1937 = vmul.f32 %v1500, %v1511
        %v1938 = vmul.f32 %v1500, %v1515
        %v1939 = vmul.f32 %v1500, %v1519
        %v1940 = vmul.f32 %v1500, %v1523
        %v1941 = vmul.f32 %v1500, %v1527
        %v1942 = vmul.f32 %v1500, %v1531
        %v1943 = vmul.f32 %v1500, %v1535
        %v1944 = vmul.f32 %v1500, %v1539
        %v1945 = vmul.f32 %v1500, %v1543
        %v1946 = vmul.f32 %v1500, %v1547
        %v1947 = vmul.f32 %v1500, %v1551
        %v1948 = vadd.f32 %v986, %v1564
        %v1949 = vadd.f32 %v987, %v1565
        %v1950 = vadd.f32 %v988, %v1566
        %v1951 = vadd.f32 %v989, %v1567
        %v1952 = vadd.f32 %v990, %v1568
        %v1953 = vadd.f32 %v991, %v1569
        %v1954 = vadd.f32 %v992, %v1570
        %v1955 = vadd.f32 %v993, %v1571
        %v1956 = vadd.f32 %v994, %v1572
        %v1957 = vadd.f32 %v995, %v1573
        %v1958 = vadd.f32 %v996, %v1574
        %v1959 = vadd.f32 %v997, %v1575
        %v1960 = vadd.f32 %v998, %v1576
        %v1961 = vadd.f32 %v999, %v1577
        %v1962 = vadd.f32 %v1000, %v1578
        %v1963 = vadd.f32 %v1001, %v1579
        %v1964 = vadd.f32 %v1002, %v1580
        %v1965 = vadd.f32 %v1003, %v1581
        %v1966 = vadd.f32 %v1004, %v1582
        %v1967 = vadd.f32 %v1005, %v1583
        %v1968 = vadd.f32 %v1006, %v1584
        %v1969 = vadd.f32 %v1007, %v1585
        %v1970 = vadd.f32 %v1008, %v1586
        %v1971 = vadd.f32 %v1009, %v1587
        %v1972 = vadd.f32 %v1010, %v1588
        %v1973 = vadd.f32 %v1011, %v1589
        %v1974 = vadd.f32 %v1012, %v1590
        %v1975 = vadd.f32 %v1013, %v1591
        %v1976 = vadd.f32 %v1014, %v1592
        %v1977 = vadd.f32 %v1015, %v1593
        %v1978 = vadd.f32 %v1016, %v1594
        %v1979 = vadd.f32 %v1017, %v1595
        %v1980 = vadd.f32 %v1018, %v1596
        %v1981 = vadd.f32 %v1019, %v1597
        %v1982 = vadd.f32 %v1020, %v1598
        %v1983 = vadd.f32 %v1021, %v1599
        %v1984 = vadd.f32 %v1022, %v1600
        %v1985 = vadd.f32 %v1023, %v1601
        %v1986 = vadd.f32 %v1024, %v1602
        %v1987 = vadd.f32 %v1025, %v1603
        %v1988 = vadd.f32 %v1026, %v1604
        %v1989 = vadd.f32 %v1027, %v1605
        %v1990 = vadd.f32 %v1028, %v1606
        %v1991 = vadd.f32 %v1029, %v1607
        %v1992 = vadd.f32 %v1030, %v1608
        %v1993 = vadd.f32 %v1031, %v1609
        %v1994 = vadd.f32 %v1032, %v1610
        %v1995 = vadd.f32 %v1033, %v1611
        %v1996 = vadd.f32 %v1034, %v1612
        %v1997 = vadd.f32 %v1035, %v1613
        %v1998 = vadd.f32 %v1036, %v1614
        %v1999 = vadd.f32 %v1037, %v1615
        %v2000 = vadd.f32 %v1038, %v1616
        %v2001 = vadd.f32 %v1039, %v1617
        %v2002 = vadd.f32 %v1040, %v1618
        %v2003 = vadd.f32 %v1041, %v1619
        %v2004 = vadd.f32 %v1042, %v1620
        %v2005 = vadd.f32 %v1043, %v1621
        %v2006 = vadd.f32 %v1044, %v1622
        %v2007 = vadd.f32 %v1045, %v1623
        %v2008 = vadd.f32 %v1046, %v1624
        %v2009 = vadd.f32 %v1047, %v1625
        %v2010 = vadd.f32 %v1048, %v1626
        %v2011 = vadd.f32 %v1049, %v1627
        %v2012 = vadd.f32 %v1050, %v1628
        %v2013 = vadd.f32 %v1051, %v1629
        %v2014 = vadd.f32 %v1052, %v1630
        %v2015 = vadd.f32 %v1053, %v1631
        %v2016 = vadd.f32 %v1054, %v1632
        %v2017 = vadd.f32 %v1055, %v1633
        %v2018 = vadd.f32 %v1056, %v1634
        %v2019 = vadd.f32 %v1057, %v1635
        %v2020 = vadd.f32 %v1058, %v1636
        %v2021 = vadd.f32 %v1059, %v1637
        %v2022 = vadd.f32 %v1060, %v1638
        %v2023 = vadd.f32 %v1061, %v1639
        %v2024 = vadd.f32 %v1062, %v1640
        %v2025 = vadd.f32 %v1063, %v1641
        %v2026 = vadd.f32 %v1064, %v1642
        %v2027 = vadd.f32 %v1065, %v1643
        %v2028 = vadd.f32 %v1066, %v1644
        %v2029 = vadd.f32 %v1067, %v1645
        %v2030 = vadd.f32 %v1068, %v1646
        %v2031 = vadd.f32 %v1069, %v1647
        %v2032 = vadd.f32 %v1070, %v1648
        %v2033 = vadd.f32 %v1071, %v1649
        %v2034 = vadd.f32 %v1072, %v1650
        %v2035 = vadd.f32 %v1073, %v1651
        %v2036 = vadd.f32 %v1074, %v1652
        %v2037 = vadd.f32 %v1075, %v1653
        %v2038 = vadd.f32 %v1076, %v1654
        %v2039 = vadd.f32 %v1077, %v1655
        %v2040 = vadd.f32 %v1078, %v1656
        %v2041 = vadd.f32 %v1079, %v1657
        %v2042 = vadd.f32 %v1080, %v1658
        %v2043 = vadd.f32 %v1081, %v1659
        %v2044 = vadd.f32 %v1082, %v1660
        %v2045 = vadd.f32 %v1083, %v1661
        %v2046 = vadd.f32 %v1084, %v1662
        %v2047 = vadd.f32 %v1085, %v1663
        %v2048 = vadd.f32 %v1086, %v1664
        %v2049 = vadd.f32 %v1087, %v1665
        %v2050 = vadd.f32 %v1088, %v1666
        %v2051 = vadd.f32 %v1089, %v1667
        %v2052 = vadd.f32 %v1090, %v1668
        %v2053 = vadd.f32 %v1091, %v1669
        %v2054 = vadd.f32 %v1092, %v1670
        %v2055 = vadd.f32 %v1093, %v1671
        %v2056 = vadd.f32 %v1094, %v1672
        %v2057 = vadd.f32 %v1095, %v1673
        %v2058 = vadd.f32 %v1096, %v1674
        %v2059 = vadd.f32 %v1097, %v1675
        %v2060 = vadd.f32 %v1098, %v1676
        %v2061 = vadd.f32 %v1099, %v1677
        %v2062 = vadd.f32 %v1100, %v1678
        %v2063 = vadd.f32 %v1101, %v1679
        %v2064 = vadd.f32 %v1102, %v1680
        %v2065 = vadd.f32 %v1103, %v1681
        %v2066 = vadd.f32 %v1104, %v1682
        %v2067 = vadd.f32 %v1105, %v1683
        %v2068 = vadd.f32 %v1106, %v1684
        %v2069 = vadd.f32 %v1107, %v1685
        %v2070 = vadd.f32 %v1108, %v1686
        %v2071 = vadd.f32 %v1109, %v1687
        %v2072 = vadd.f32 %v1110, %v1688
        %v2073 = vadd.f32 %v1111, %v1689
        %v2074 = vadd.f32 %v1112, %v1690
        %v2075 = vadd.f32 %v1113, %v1691
        %v2076 = vadd.f32 %v1114, %v1692
        %v2077 = vadd.f32 %v1115, %v1693
        %v2078 = vadd.f32 %v1116, %v1694
        %v2079 = vadd.f32 %v1117, %v1695
        %v2080 = vadd.f32 %v1118, %v1696
        %v2081 = vadd.f32 %v1119, %v1697
        %v2082 = vadd.f32 %v1120, %v1698
        %v2083 = vadd.f32 %v1121, %v1699
        %v2084 = vadd.f32 %v1122, %v1700
        %v2085 = vadd.f32 %v1123, %v1701
        %v2086 = vadd.f32 %v1124, %v1702
        %v2087 = vadd.f32 %v1125, %v1703
        %v2088 = vadd.f32 %v1126, %v1704
        %v2089 = vadd.f32 %v1127, %v1705
        %v2090 = vadd.f32 %v1128, %v1706
        %v2091 = vadd.f32 %v1129, %v1707
        %v2092 = vadd.f32 %v1130, %v1708
        %v2093 = vadd.f32 %v1131, %v1709
        %v2094 = vadd.f32 %v1132, %v1710
        %v2095 = vadd.f32 %v1133, %v1711
        %v2096 = vadd.f32 %v1134, %v1712
        %v2097 = vadd.f32 %v1135, %v1713
        %v2098 = vadd.f32 %v1136, %v1714
        %v2099 = vadd.f32 %v1137, %v1715
        %v2100 = vadd.f32 %v1138, %v1716
        %v2101 = vadd.f32 %v1139, %v1717
        %v2102 = vadd.f32 %v1140, %v1718
        %v2103 = vadd.f32 %v1141, %v1719
        %v2104 = vadd.f32 %v1142, %v1720
        %v2105 = vadd.f32 %v1143, %v1721
        %v2106 = vadd.f32 %v1144, %v1722
        %v2107 = vadd.f32 %v1145, %v1723
        %v2108 = vadd.f32 %v1146, %v1724
        %v2109 = vadd.f32 %v1147, %v1725
        %v2110 = vadd.f32 %v1148, %v1726
        %v2111 = vadd.f32 %v1149, %v1727
        %v2112 = vadd.f32 %v1150, %v1728
        %v2113 = vadd.f32 %v1151, %v1729
        %v2114 = vadd.f32 %v1152, %v1730
        %v2115 = vadd.f32 %v1153, %v1731
        %v2116 = vadd.f32 %v1154, %v1732
        %v2117 = vadd.f32 %v1155, %v1733
        %v2118 = vadd.f32 %v1156, %v1734
        %v2119 = vadd.f32 %v1157, %v1735
        %v2120 = vadd.f32 %v1158, %v1736
        %v2121 = vadd.f32 %v1159, %v1737
        %v2122 = vadd.f32 %v1160, %v1738
        %v2123 = vadd.f32 %v1161, %v1739
        %v2124 = vadd.f32 %v1162, %v1740
        %v2125 = vadd.f32 %v1163, %v1741
        %v2126 = vadd.f32 %v1164, %v1742
        %v2127 = vadd.f32 %v1165, %v1743
        %v2128 = vadd.f32 %v1166, %v1744
        %v2129 = vadd.f32 %v1167, %v1745
        %v2130 = vadd.f32 %v1168, %v1746
        %v2131 = vadd.f32 %v1169, %v1747
        %v2132 = vadd.f32 %v1170, %v1748
        %v2133 = vadd.f32 %v1171, %v1749
        %v2134 = vadd.f32 %v1172, %v1750
        %v2135 = vadd.f32 %v1173, %v1751
        %v2136 = vadd.f32 %v1174, %v1752
        %v2137 = vadd.f32 %v1175, %v1753
        %v2138 = vadd.f32 %v1176, %v1754
        %v2139 = vadd.f32 %v1177, %v1755
        %v2140 = vadd.f32 %v1178, %v1756
        %v2141 = vadd.f32 %v1179, %v1757
        %v2142 = vadd.f32 %v1180, %v1758
        %v2143 = vadd.f32 %v1181, %v1759
        %v2144 = vadd.f32 %v1182, %v1760
        %v2145 = vadd.f32 %v1183, %v1761
        %v2146 = vadd.f32 %v1184, %v1762
        %v2147 = vadd.f32 %v1185, %v1763
        %v2148 = vadd.f32 %v1186, %v1764
        %v2149 = vadd.f32 %v1187, %v1765
        %v2150 = vadd.f32 %v1188, %v1766
        %v2151 = vadd.f32 %v1189, %v1767
        %v2152 = vadd.f32 %v1190, %v1768
        %v2153 = vadd.f32 %v1191, %v1769
        %v2154 = vadd.f32 %v1192, %v1770
        %v2155 = vadd.f32 %v1193, %v1771
        %v2156 = vadd.f32 %v1194, %v1772
        %v2157 = vadd.f32 %v1195, %v1773
        %v2158 = vadd.f32 %v1196, %v1774
        %v2159 = vadd.f32 %v1197, %v1775
        %v2160 = vadd.f32 %v1198, %v1776
        %v2161 = vadd.f32 %v1199, %v1777
        %v2162 = vadd.f32 %v1200, %v1778
        %v2163 = vadd.f32 %v1201, %v1779
        %v2164 = vadd.f32 %v1202, %v1780
        %v2165 = vadd.f32 %v1203, %v1781
        %v2166 = vadd.f32 %v1204, %v1782
        %v2167 = vadd.f32 %v1205, %v1783
        %v2168 = vadd.f32 %v1206, %v1784
        %v2169 = vadd.f32 %v1207, %v1785
        %v2170 = vadd.f32 %v1208, %v1786
        %v2171 = vadd.f32 %v1209, %v1787
        %v2172 = vadd.f32 %v1210, %v1788
        %v2173 = vadd.f32 %v1211, %v1789
        %v2174 = vadd.f32 %v1212, %v1790
        %v2175 = vadd.f32 %v1213, %v1791
        %v2176 = vadd.f32 %v1214, %v1792
        %v2177 = vadd.f32 %v1215, %v1793
        %v2178 = vadd.f32 %v1216, %v1794
        %v2179 = vadd.f32 %v1217, %v1795
        %v2180 = vadd.f32 %v1218, %v1796
        %v2181 = vadd.f32 %v1219, %v1797
        %v2182 = vadd.f32 %v1220, %v1798
        %v2183 = vadd.f32 %v1221, %v1799
        %v2184 = vadd.f32 %v1222, %v1800
        %v2185 = vadd.f32 %v1223, %v1801
        %v2186 = vadd.f32 %v1224, %v1802
        %v2187 = vadd.f32 %v1225, %v1803
        %v2188 = vadd.f32 %v1226, %v1804
        %v2189 = vadd.f32 %v1227, %v1805
        %v2190 = vadd.f32 %v1228, %v1806
        %v2191 = vadd.f32 %v1229, %v1807
        %v2192 = vadd.f32 %v1230, %v1808
        %v2193 = vadd.f32 %v1231, %v1809
        %v2194 = vadd.f32 %v1232, %v1810
        %v2195 = vadd.f32 %v1233, %v1811
        %v2196 = vadd.f32 %v1234, %v1812
        %v2197 = vadd.f32 %v1235, %v1813
        %v2198 = vadd.f32 %v1236, %v1814
        %v2199 = vadd.f32 %v1237, %v1815
        %v2200 = vadd.f32 %v1238, %v1816
        %v2201 = vadd.f32 %v1239, %v1817
        %v2202 = vadd.f32 %v1240, %v1818
        %v2203 = vadd.f32 %v1241, %v1819
        %v2204 = vadd.f32 %v1242, %v1820
        %v2205 = vadd.f32 %v1243, %v1821
        %v2206 = vadd.f32 %v1244, %v1822
        %v2207 = vadd.f32 %v1245, %v1823
        %v2208 = vadd.f32 %v1246, %v1824
        %v2209 = vadd.f32 %v1247, %v1825
        %v2210 = vadd.f32 %v1248, %v1826
        %v2211 = vadd.f32 %v1249, %v1827
        %v2212 = vadd.f32 %v1250, %v1828
        %v2213 = vadd.f32 %v1251, %v1829
        %v2214 = vadd.f32 %v1252, %v1830
        %v2215 = vadd.f32 %v1253, %v1831
        %v2216 = vadd.f32 %v1254, %v1832
        %v2217 = vadd.f32 %v1255, %v1833
        %v2218 = vadd.f32 %v1256, %v1834
        %v2219 = vadd.f32 %v1257, %v1835
        %v2220 = vadd.f32 %v1258, %v1836
        %v2221 = vadd.f32 %v1259, %v1837
        %v2222 = vadd.f32 %v1260, %v1838
        %v2223 = vadd.f32 %v1261, %v1839
        %v2224 = vadd.f32 %v1262, %v1840
        %v2225 = vadd.f32 %v1263, %v1841
        %v2226 = vadd.f32 %v1264, %v1842
        %v2227 = vadd.f32 %v1265, %v1843
        %v2228 = vadd.f32 %v1266, %v1844
        %v2229 = vadd.f32 %v1267, %v1845
        %v2230 = vadd.f32 %v1268, %v1846
        %v2231 = vadd.f32 %v1269, %v1847
        %v2232 = vadd.f32 %v1270, %v1848
        %v2233 = vadd.f32 %v1271, %v1849
        %v2234 = vadd.f32 %v1272, %v1850
        %v2235 = vadd.f32 %v1273, %v1851
        %v2236 = vadd.f32 %v1274, %v1852
        %v2237 = vadd.f32 %v1275, %v1853
        %v2238 = vadd.f32 %v1276, %v1854
        %v2239 = vadd.f32 %v1277, %v1855
        %v2240 = vadd.f32 %v1278, %v1856
        %v2241 = vadd.f32 %v1279, %v1857
        %v2242 = vadd.f32 %v1280, %v1858
        %v2243 = vadd.f32 %v1281, %v1859
        %v2244 = vadd.f32 %v1282, %v1860
        %v2245 = vadd.f32 %v1283, %v1861
        %v2246 = vadd.f32 %v1284, %v1862
        %v2247 = vadd.f32 %v1285, %v1863
        %v2248 = vadd.f32 %v1286, %v1864
        %v2249 = vadd.f32 %v1287, %v1865
        %v2250 = vadd.f32 %v1288, %v1866
        %v2251 = vadd.f32 %v1289, %v1867
        %v2252 = vadd.f32 %v1290, %v1868
        %v2253 = vadd.f32 %v1291, %v1869
        %v2254 = vadd.f32 %v1292, %v1870
        %v2255 = vadd.f32 %v1293, %v1871
        %v2256 = vadd.f32 %v1294, %v1872
        %v2257 = vadd.f32 %v1295, %v1873
        %v2258 = vadd.f32 %v1296, %v1874
        %v2259 = vadd.f32 %v1297, %v1875
        %v2260 = vadd.f32 %v1298, %v1876
        %v2261 = vadd.f32 %v1299, %v1877
        %v2262 = vadd.f32 %v1300, %v1878
        %v2263 = vadd.f32 %v1301, %v1879
        %v2264 = vadd.f32 %v1302, %v1880
        %v2265 = vadd.f32 %v1303, %v1881
        %v2266 = vadd.f32 %v1304, %v1882
        %v2267 = vadd.f32 %v1305, %v1883
        %v2268 = vadd.f32 %v1306, %v1884
        %v2269 = vadd.f32 %v1307, %v1885
        %v2270 = vadd.f32 %v1308, %v1886
        %v2271 = vadd.f32 %v1309, %v1887
        %v2272 = vadd.f32 %v1310, %v1888
        %v2273 = vadd.f32 %v1311, %v1889
        %v2274 = vadd.f32 %v1312, %v1890
        %v2275 = vadd.f32 %v1313, %v1891
        %v2276 = vadd.f32 %v1314, %v1892
        %v2277 = vadd.f32 %v1315, %v1893
        %v2278 = vadd.f32 %v1316, %v1894
        %v2279 = vadd.f32 %v1317, %v1895
        %v2280 = vadd.f32 %v1318, %v1896
        %v2281 = vadd.f32 %v1319, %v1897
        %v2282 = vadd.f32 %v1320, %v1898
        %v2283 = vadd.f32 %v1321, %v1899
        %v2284 = vadd.f32 %v1322, %v1900
        %v2285 = vadd.f32 %v1323, %v1901
        %v2286 = vadd.f32 %v1324, %v1902
        %v2287 = vadd.f32 %v1325, %v1903
        %v2288 = vadd.f32 %v1326, %v1904
        %v2289 = vadd.f32 %v1327, %v1905
        %v2290 = vadd.f32 %v1328, %v1906
        %v2291 = vadd.f32 %v1329, %v1907
        %v2292 = vadd.f32 %v1330, %v1908
        %v2293 = vadd.f32 %v1331, %v1909
        %v2294 = vadd.f32 %v1332, %v1910
        %v2295 = vadd.f32 %v1333, %v1911
        %v2296 = vadd.f32 %v1334, %v1912
        %v2297 = vadd.f32 %v1335, %v1913
        %v2298 = vadd.f32 %v1336, %v1914
        %v2299 = vadd.f32 %v1337, %v1915
        %v2300 = vadd.f32 %v1338, %v1916
        %v2301 = vadd.f32 %v1339, %v1917
        %v2302 = vadd.f32 %v1340, %v1918
        %v2303 = vadd.f32 %v1341, %v1919
        %v2304 = vadd.f32 %v1342, %v1920
        %v2305 = vadd.f32 %v1343, %v1921
        %v2306 = vadd.f32 %v1344, %v1922
        %v2307 = vadd.f32 %v1345, %v1923
        %v2308 = vadd.f32 %v1346, %v1924
        %v2309 = vadd.f32 %v1347, %v1925
        %v2310 = vadd.f32 %v1348, %v1926
        %v2311 = vadd.f32 %v1349, %v1927
        %v2312 = vadd.f32 %v1350, %v1928
        %v2313 = vadd.f32 %v1351, %v1929
        %v2314 = vadd.f32 %v1352, %v1930
        %v2315 = vadd.f32 %v1353, %v1931
        %v2316 = vadd.f32 %v1354, %v1932
        %v2317 = vadd.f32 %v1355, %v1933
        %v2318 = vadd.f32 %v1356, %v1934
        %v2319 = vadd.f32 %v1357, %v1935
        %v2320 = vadd.f32 %v1358, %v1936
        %v2321 = vadd.f32 %v1359, %v1937
        %v2322 = vadd.f32 %v1360, %v1938
        %v2323 = vadd.f32 %v1361, %v1939
        %v2324 = vadd.f32 %v1362, %v1940
        %v2325 = vadd.f32 %v1363, %v1941
        %v2326 = vadd.f32 %v1364, %v1942
        %v2327 = vadd.f32 %v1365, %v1943
        %v2328 = vadd.f32 %v1366, %v1944
        %v2329 = vadd.f32 %v1367, %v1945
        %v2330 = vadd.f32 %v1368, %v1946
        %v2331 = vadd.f32 %v1369, %v1947
        %s2332 = scalar_lea.vmem %s1, 2
        %v2333 = vld [vmem:[%s2332] ss:$4 sm:$0xff]
        %s2334 = scalar_lea.vmem %s1, 34
        %v2335 = vld [vmem:[%s2334] ss:$4 sm:$0xf]
        %2336 = vset.pattern.permute.xlu0 2
        %2337 = vperm.xlu0 %2336, %v281
        %v2338 = vpop.permute.xlu0 %2337
        %2340 = vset.pattern.permute.xlu0 2
        %2341 = vperm.xlu0 %2340, %v282
        %v2342 = vpop.permute.xlu0 %2341
        %2344 = vset.pattern.permute.xlu0 2
        %2345 = vperm.xlu0 %2344, %v283
        %v2346 = vpop.permute.xlu0 %2345
        %2348 = vset.pattern.permute.xlu0 2
        %2349 = vperm.xlu0 %2348, %v284
        %v2350 = vpop.permute.xlu0 %2349
        %2352 = vset.pattern.permute.xlu0 2
        %2353 = vperm.xlu0 %2352, %v285
        %v2354 = vpop.permute.xlu0 %2353
        %2356 = vset.pattern.permute.xlu0 2
        %2357 = vperm.xlu0 %2356, %v286
        %v2358 = vpop.permute.xlu0 %2357
        %2360 = vset.pattern.permute.xlu0 2
        %2361 = vperm.xlu0 %2360, %v287
        %v2362 = vpop.permute.xlu0 %2361
        %2364 = vset.pattern.permute.xlu0 2
        %2365 = vperm.xlu0 %2364, %v288
        %v2366 = vpop.permute.xlu0 %2365
        %2368 = vset.pattern.permute.xlu0 2
        %2369 = vperm.xlu0 %2368, %v289
        %v2370 = vpop.permute.xlu0 %2369
        %2372 = vset.pattern.permute.xlu0 2
        %2373 = vperm.xlu0 %2372, %v290
        %v2374 = vpop.permute.xlu0 %2373
        %2376 = vset.pattern.permute.xlu0 2
        %2377 = vperm.xlu0 %2376, %v291
        %v2378 = vpop.permute.xlu0 %2377
        %2380 = vset.pattern.permute.xlu0 2
        %2381 = vperm.xlu0 %2380, %v292
        %v2382 = vpop.permute.xlu0 %2381
        %2384 = vset.pattern.permute.xlu0 2
        %2385 = vperm.xlu0 %2384, %v293
        %v2386 = vpop.permute.xlu0 %2385
        %2388 = vset.pattern.permute.xlu0 2
        %2389 = vperm.xlu0 %2388, %v294
        %v2390 = vpop.permute.xlu0 %2389
        %2392 = vset.pattern.permute.xlu0 2
        %2393 = vperm.xlu0 %2392, %v295
        %v2394 = vpop.permute.xlu0 %2393
        %2396 = vset.pattern.permute.xlu0 2
        %2397 = vperm.xlu0 %2396, %v296
        %v2398 = vpop.permute.xlu0 %2397
        %2400 = vset.pattern.permute.xlu0 2
        %2401 = vperm.xlu0 %2400, %v297
        %v2402 = vpop.permute.xlu0 %2401
        %2404 = vset.pattern.permute.xlu0 2
        %2405 = vperm.xlu0 %2404, %v298
        %v2406 = vpop.permute.xlu0 %2405
        %2408 = vset.pattern.permute.xlu0 2
        %2409 = vperm.xlu0 %2408, %v299
        %v2410 = vpop.permute.xlu0 %2409
        %2412 = vset.pattern.permute.xlu0 2
        %2413 = vperm.xlu0 %2412, %v300
        %v2414 = vpop.permute.xlu0 %2413
        %2416 = vset.pattern.permute.xlu0 2
        %2417 = vperm.xlu0 %2416, %v301
        %v2418 = vpop.permute.xlu0 %2417
        %2420 = vset.pattern.permute.xlu0 2
        %2421 = vperm.xlu0 %2420, %v302
        %v2422 = vpop.permute.xlu0 %2421
        %2424 = vset.pattern.permute.xlu0 2
        %2425 = vperm.xlu0 %2424, %v303
        %v2426 = vpop.permute.xlu0 %2425
        %2428 = vset.pattern.permute.xlu0 2
        %2429 = vperm.xlu0 %2428, %v304
        %v2430 = vpop.permute.xlu0 %2429
        %2432 = vset.pattern.permute.xlu0 2
        %2433 = vperm.xlu0 %2432, %v305
        %v2434 = vpop.permute.xlu0 %2433
        %2436 = vset.pattern.permute.xlu0 2
        %2437 = vperm.xlu0 %2436, %v306
        %v2438 = vpop.permute.xlu0 %2437
        %2440 = vset.pattern.permute.xlu0 2
        %2441 = vperm.xlu0 %2440, %v307
        %v2442 = vpop.permute.xlu0 %2441
        %2444 = vset.pattern.permute.xlu0 2
        %2445 = vperm.xlu0 %2444, %v308
        %v2446 = vpop.permute.xlu0 %2445
        %2448 = vset.pattern.permute.xlu0 2
        %2449 = vperm.xlu0 %2448, %v309
        %v2450 = vpop.permute.xlu0 %2449
        %2452 = vset.pattern.permute.xlu0 2
        %2453 = vperm.xlu0 %2452, %v310
        %v2454 = vpop.permute.xlu0 %2453
        %2456 = vset.pattern.permute.xlu0 2
        %2457 = vperm.xlu0 %2456, %v311
        %v2458 = vpop.permute.xlu0 %2457
        %2460 = vset.pattern.permute.xlu0 2
        %2461 = vperm.xlu0 %2460, %v312
        %v2462 = vpop.permute.xlu0 %2461
        %v2466 = vlaneseq
        %v2467 = vshrl.u32 %v2466, 7
        %v2468 = vsub.s32 0, %v2467
        %v2469 = vrot.slane %v2333, %v2468
        %v2470 = vlaneseq
        %v2471 = vshrl.u32 %v2470, 7
        %v2472 = vsub.s32 1, %v2471
        %v2473 = vrot.slane %v2333, %v2472
        %v2474 = vlaneseq
        %v2475 = vshrl.u32 %v2474, 7
        %v2476 = vsub.s32 2, %v2475
        %v2477 = vrot.slane %v2333, %v2476
        %v2478 = vlaneseq
        %v2479 = vshrl.u32 %v2478, 7
        %v2480 = vsub.s32 3, %v2479
        %v2481 = vrot.slane %v2333, %v2480
        %v2482 = vlaneseq
        %v2483 = vshrl.u32 %v2482, 7
        %v2484 = vsub.s32 4, %v2483
        %v2485 = vrot.slane %v2333, %v2484
        %v2486 = vlaneseq
        %v2487 = vshrl.u32 %v2486, 7
        %v2488 = vsub.s32 5, %v2487
        %v2489 = vrot.slane %v2333, %v2488
        %v2490 = vlaneseq
        %v2491 = vshrl.u32 %v2490, 7
        %v2492 = vsub.s32 6, %v2491
        %v2493 = vrot.slane %v2333, %v2492
        %v2494 = vlaneseq
        %v2495 = vshrl.u32 %v2494, 7
        %v2496 = vsub.s32 7, %v2495
        %v2497 = vrot.slane %v2333, %v2496
        %v2498 = vlaneseq
        %v2499 = vshrl.u32 %v2498, 7
        %v2500 = vsub.s32 0, %v2499
        %v2501 = vrot.slane %v2335, %v2500
        %v2502 = vlaneseq
        %v2503 = vshrl.u32 %v2502, 7
        %v2504 = vsub.s32 1, %v2503
        %v2505 = vrot.slane %v2335, %v2504
        %v2506 = vlaneseq
        %v2507 = vshrl.u32 %v2506, 7
        %v2508 = vsub.s32 2, %v2507
        %v2509 = vrot.slane %v2335, %v2508
        %v2510 = vlaneseq
        %v2511 = vshrl.u32 %v2510, 7
        %v2512 = vsub.s32 3, %v2511
        %v2513 = vrot.slane %v2335, %v2512
        %v2526 = vmul.f32 %v2338, %v2469
        %v2527 = vmul.f32 %v2338, %v2473
        %v2528 = vmul.f32 %v2338, %v2477
        %v2529 = vmul.f32 %v2338, %v2481
        %v2530 = vmul.f32 %v2338, %v2485
        %v2531 = vmul.f32 %v2338, %v2489
        %v2532 = vmul.f32 %v2338, %v2493
        %v2533 = vmul.f32 %v2338, %v2497
        %v2534 = vmul.f32 %v2338, %v2501
        %v2535 = vmul.f32 %v2338, %v2505
        %v2536 = vmul.f32 %v2338, %v2509
        %v2537 = vmul.f32 %v2338, %v2513
        %v2538 = vmul.f32 %v2342, %v2469
        %v2539 = vmul.f32 %v2342, %v2473
        %v2540 = vmul.f32 %v2342, %v2477
        %v2541 = vmul.f32 %v2342, %v2481
        %v2542 = vmul.f32 %v2342, %v2485
        %v2543 = vmul.f32 %v2342, %v2489
        %v2544 = vmul.f32 %v2342, %v2493
        %v2545 = vmul.f32 %v2342, %v2497
        %v2546 = vmul.f32 %v2342, %v2501
        %v2547 = vmul.f32 %v2342, %v2505
        %v2548 = vmul.f32 %v2342, %v2509
        %v2549 = vmul.f32 %v2342, %v2513
        %v2550 = vmul.f32 %v2346, %v2469
        %v2551 = vmul.f32 %v2346, %v2473
        %v2552 = vmul.f32 %v2346, %v2477
        %v2553 = vmul.f32 %v2346, %v2481
        %v2554 = vmul.f32 %v2346, %v2485
        %v2555 = vmul.f32 %v2346, %v2489
        %v2556 = vmul.f32 %v2346, %v2493
        %v2557 = vmul.f32 %v2346, %v2497
        %v2558 = vmul.f32 %v2346, %v2501
        %v2559 = vmul.f32 %v2346, %v2505
        %v2560 = vmul.f32 %v2346, %v2509
        %v2561 = vmul.f32 %v2346, %v2513
        %v2562 = vmul.f32 %v2350, %v2469
        %v2563 = vmul.f32 %v2350, %v2473
        %v2564 = vmul.f32 %v2350, %v2477
        %v2565 = vmul.f32 %v2350, %v2481
        %v2566 = vmul.f32 %v2350, %v2485
        %v2567 = vmul.f32 %v2350, %v2489
        %v2568 = vmul.f32 %v2350, %v2493
        %v2569 = vmul.f32 %v2350, %v2497
        %v2570 = vmul.f32 %v2350, %v2501
        %v2571 = vmul.f32 %v2350, %v2505
        %v2572 = vmul.f32 %v2350, %v2509
        %v2573 = vmul.f32 %v2350, %v2513
        %v2574 = vmul.f32 %v2354, %v2469
        %v2575 = vmul.f32 %v2354, %v2473
        %v2576 = vmul.f32 %v2354, %v2477
        %v2577 = vmul.f32 %v2354, %v2481
        %v2578 = vmul.f32 %v2354, %v2485
        %v2579 = vmul.f32 %v2354, %v2489
        %v2580 = vmul.f32 %v2354, %v2493
        %v2581 = vmul.f32 %v2354, %v2497
        %v2582 = vmul.f32 %v2354, %v2501
        %v2583 = vmul.f32 %v2354, %v2505
        %v2584 = vmul.f32 %v2354, %v2509
        %v2585 = vmul.f32 %v2354, %v2513
        %v2586 = vmul.f32 %v2358, %v2469
        %v2587 = vmul.f32 %v2358, %v2473
        %v2588 = vmul.f32 %v2358, %v2477
        %v2589 = vmul.f32 %v2358, %v2481
        %v2590 = vmul.f32 %v2358, %v2485
        %v2591 = vmul.f32 %v2358, %v2489
        %v2592 = vmul.f32 %v2358, %v2493
        %v2593 = vmul.f32 %v2358, %v2497
        %v2594 = vmul.f32 %v2358, %v2501
        %v2595 = vmul.f32 %v2358, %v2505
        %v2596 = vmul.f32 %v2358, %v2509
        %v2597 = vmul.f32 %v2358, %v2513
        %v2598 = vmul.f32 %v2362, %v2469
        %v2599 = vmul.f32 %v2362, %v2473
        %v2600 = vmul.f32 %v2362, %v2477
        %v2601 = vmul.f32 %v2362, %v2481
        %v2602 = vmul.f32 %v2362, %v2485
        %v2603 = vmul.f32 %v2362, %v2489
        %v2604 = vmul.f32 %v2362, %v2493
        %v2605 = vmul.f32 %v2362, %v2497
        %v2606 = vmul.f32 %v2362, %v2501
        %v2607 = vmul.f32 %v2362, %v2505
        %v2608 = vmul.f32 %v2362, %v2509
        %v2609 = vmul.f32 %v2362, %v2513
        %v2610 = vmul.f32 %v2366, %v2469
        %v2611 = vmul.f32 %v2366, %v2473
        %v2612 = vmul.f32 %v2366, %v2477
        %v2613 = vmul.f32 %v2366, %v2481
        %v2614 = vmul.f32 %v2366, %v2485
        %v2615 = vmul.f32 %v2366, %v2489
        %v2616 = vmul.f32 %v2366, %v2493
        %v2617 = vmul.f32 %v2366, %v2497
        %v2618 = vmul.f32 %v2366, %v2501
        %v2619 = vmul.f32 %v2366, %v2505
        %v2620 = vmul.f32 %v2366, %v2509
        %v2621 = vmul.f32 %v2366, %v2513
        %v2622 = vmul.f32 %v2370, %v2469
        %v2623 = vmul.f32 %v2370, %v2473
        %v2624 = vmul.f32 %v2370, %v2477
        %v2625 = vmul.f32 %v2370, %v2481
        %v2626 = vmul.f32 %v2370, %v2485
        %v2627 = vmul.f32 %v2370, %v2489
        %v2628 = vmul.f32 %v2370, %v2493
        %v2629 = vmul.f32 %v2370, %v2497
        %v2630 = vmul.f32 %v2370, %v2501
        %v2631 = vmul.f32 %v2370, %v2505
        %v2632 = vmul.f32 %v2370, %v2509
        %v2633 = vmul.f32 %v2370, %v2513
        %v2634 = vmul.f32 %v2374, %v2469
        %v2635 = vmul.f32 %v2374, %v2473
        %v2636 = vmul.f32 %v2374, %v2477
        %v2637 = vmul.f32 %v2374, %v2481
        %v2638 = vmul.f32 %v2374, %v2485
        %v2639 = vmul.f32 %v2374, %v2489
        %v2640 = vmul.f32 %v2374, %v2493
        %v2641 = vmul.f32 %v2374, %v2497
        %v2642 = vmul.f32 %v2374, %v2501
        %v2643 = vmul.f32 %v2374, %v2505
        %v2644 = vmul.f32 %v2374, %v2509
        %v2645 = vmul.f32 %v2374, %v2513
        %v2646 = vmul.f32 %v2378, %v2469
        %v2647 = vmul.f32 %v2378, %v2473
        %v2648 = vmul.f32 %v2378, %v2477
        %v2649 = vmul.f32 %v2378, %v2481
        %v2650 = vmul.f32 %v2378, %v2485
        %v2651 = vmul.f32 %v2378, %v2489
        %v2652 = vmul.f32 %v2378, %v2493
        %v2653 = vmul.f32 %v2378, %v2497
        %v2654 = vmul.f32 %v2378, %v2501
        %v2655 = vmul.f32 %v2378, %v2505
        %v2656 = vmul.f32 %v2378, %v2509
        %v2657 = vmul.f32 %v2378, %v2513
        %v2658 = vmul.f32 %v2382, %v2469
        %v2659 = vmul.f32 %v2382, %v2473
        %v2660 = vmul.f32 %v2382, %v2477
        %v2661 = vmul.f32 %v2382, %v2481
        %v2662 = vmul.f32 %v2382, %v2485
        %v2663 = vmul.f32 %v2382, %v2489
        %v2664 = vmul.f32 %v2382, %v2493
        %v2665 = vmul.f32 %v2382, %v2497
        %v2666 = vmul.f32 %v2382, %v2501
        %v2667 = vmul.f32 %v2382, %v2505
        %v2668 = vmul.f32 %v2382, %v2509
        %v2669 = vmul.f32 %v2382, %v2513
        %v2670 = vmul.f32 %v2386, %v2469
        %v2671 = vmul.f32 %v2386, %v2473
        %v2672 = vmul.f32 %v2386, %v2477
        %v2673 = vmul.f32 %v2386, %v2481
        %v2674 = vmul.f32 %v2386, %v2485
        %v2675 = vmul.f32 %v2386, %v2489
        %v2676 = vmul.f32 %v2386, %v2493
        %v2677 = vmul.f32 %v2386, %v2497
        %v2678 = vmul.f32 %v2386, %v2501
        %v2679 = vmul.f32 %v2386, %v2505
        %v2680 = vmul.f32 %v2386, %v2509
        %v2681 = vmul.f32 %v2386, %v2513
        %v2682 = vmul.f32 %v2390, %v2469
        %v2683 = vmul.f32 %v2390, %v2473
        %v2684 = vmul.f32 %v2390, %v2477
        %v2685 = vmul.f32 %v2390, %v2481
        %v2686 = vmul.f32 %v2390, %v2485
        %v2687 = vmul.f32 %v2390, %v2489
        %v2688 = vmul.f32 %v2390, %v2493
        %v2689 = vmul.f32 %v2390, %v2497
        %v2690 = vmul.f32 %v2390, %v2501
        %v2691 = vmul.f32 %v2390, %v2505
        %v2692 = vmul.f32 %v2390, %v2509
        %v2693 = vmul.f32 %v2390, %v2513
        %v2694 = vmul.f32 %v2394, %v2469
        %v2695 = vmul.f32 %v2394, %v2473
        %v2696 = vmul.f32 %v2394, %v2477
        %v2697 = vmul.f32 %v2394, %v2481
        %v2698 = vmul.f32 %v2394, %v2485
        %v2699 = vmul.f32 %v2394, %v2489
        %v2700 = vmul.f32 %v2394, %v2493
        %v2701 = vmul.f32 %v2394, %v2497
        %v2702 = vmul.f32 %v2394, %v2501
        %v2703 = vmul.f32 %v2394, %v2505
        %v2704 = vmul.f32 %v2394, %v2509
        %v2705 = vmul.f32 %v2394, %v2513
        %v2706 = vmul.f32 %v2398, %v2469
        %v2707 = vmul.f32 %v2398, %v2473
        %v2708 = vmul.f32 %v2398, %v2477
        %v2709 = vmul.f32 %v2398, %v2481
        %v2710 = vmul.f32 %v2398, %v2485
        %v2711 = vmul.f32 %v2398, %v2489
        %v2712 = vmul.f32 %v2398, %v2493
        %v2713 = vmul.f32 %v2398, %v2497
        %v2714 = vmul.f32 %v2398, %v2501
        %v2715 = vmul.f32 %v2398, %v2505
        %v2716 = vmul.f32 %v2398, %v2509
        %v2717 = vmul.f32 %v2398, %v2513
        %v2718 = vmul.f32 %v2402, %v2469
        %v2719 = vmul.f32 %v2402, %v2473
        %v2720 = vmul.f32 %v2402, %v2477
        %v2721 = vmul.f32 %v2402, %v2481
        %v2722 = vmul.f32 %v2402, %v2485
        %v2723 = vmul.f32 %v2402, %v2489
        %v2724 = vmul.f32 %v2402, %v2493
        %v2725 = vmul.f32 %v2402, %v2497
        %v2726 = vmul.f32 %v2402, %v2501
        %v2727 = vmul.f32 %v2402, %v2505
        %v2728 = vmul.f32 %v2402, %v2509
        %v2729 = vmul.f32 %v2402, %v2513
        %v2730 = vmul.f32 %v2406, %v2469
        %v2731 = vmul.f32 %v2406, %v2473
        %v2732 = vmul.f32 %v2406, %v2477
        %v2733 = vmul.f32 %v2406, %v2481
        %v2734 = vmul.f32 %v2406, %v2485
        %v2735 = vmul.f32 %v2406, %v2489
        %v2736 = vmul.f32 %v2406, %v2493
        %v2737 = vmul.f32 %v2406, %v2497
        %v2738 = vmul.f32 %v2406, %v2501
        %v2739 = vmul.f32 %v2406, %v2505
        %v2740 = vmul.f32 %v2406, %v2509
        %v2741 = vmul.f32 %v2406, %v2513
        %v2742 = vmul.f32 %v2410, %v2469
        %v2743 = vmul.f32 %v2410, %v2473
        %v2744 = vmul.f32 %v2410, %v2477
        %v2745 = vmul.f32 %v2410, %v2481
        %v2746 = vmul.f32 %v2410, %v2485
        %v2747 = vmul.f32 %v2410, %v2489
        %v2748 = vmul.f32 %v2410, %v2493
        %v2749 = vmul.f32 %v2410, %v2497
        %v2750 = vmul.f32 %v2410, %v2501
        %v2751 = vmul.f32 %v2410, %v2505
        %v2752 = vmul.f32 %v2410, %v2509
        %v2753 = vmul.f32 %v2410, %v2513
        %v2754 = vmul.f32 %v2414, %v2469
        %v2755 = vmul.f32 %v2414, %v2473
        %v2756 = vmul.f32 %v2414, %v2477
        %v2757 = vmul.f32 %v2414, %v2481
        %v2758 = vmul.f32 %v2414, %v2485
        %v2759 = vmul.f32 %v2414, %v2489
        %v2760 = vmul.f32 %v2414, %v2493
        %v2761 = vmul.f32 %v2414, %v2497
        %v2762 = vmul.f32 %v2414, %v2501
        %v2763 = vmul.f32 %v2414, %v2505
        %v2764 = vmul.f32 %v2414, %v2509
        %v2765 = vmul.f32 %v2414, %v2513
        %v2766 = vmul.f32 %v2418, %v2469
        %v2767 = vmul.f32 %v2418, %v2473
        %v2768 = vmul.f32 %v2418, %v2477
        %v2769 = vmul.f32 %v2418, %v2481
        %v2770 = vmul.f32 %v2418, %v2485
        %v2771 = vmul.f32 %v2418, %v2489
        %v2772 = vmul.f32 %v2418, %v2493
        %v2773 = vmul.f32 %v2418, %v2497
        %v2774 = vmul.f32 %v2418, %v2501
        %v2775 = vmul.f32 %v2418, %v2505
        %v2776 = vmul.f32 %v2418, %v2509
        %v2777 = vmul.f32 %v2418, %v2513
        %v2778 = vmul.f32 %v2422, %v2469
        %v2779 = vmul.f32 %v2422, %v2473
        %v2780 = vmul.f32 %v2422, %v2477
        %v2781 = vmul.f32 %v2422, %v2481
        %v2782 = vmul.f32 %v2422, %v2485
        %v2783 = vmul.f32 %v2422, %v2489
        %v2784 = vmul.f32 %v2422, %v2493
        %v2785 = vmul.f32 %v2422, %v2497
        %v2786 = vmul.f32 %v2422, %v2501
        %v2787 = vmul.f32 %v2422, %v2505
        %v2788 = vmul.f32 %v2422, %v2509
        %v2789 = vmul.f32 %v2422, %v2513
        %v2790 = vmul.f32 %v2426, %v2469
        %v2791 = vmul.f32 %v2426, %v2473
        %v2792 = vmul.f32 %v2426, %v2477
        %v2793 = vmul.f32 %v2426, %v2481
        %v2794 = vmul.f32 %v2426, %v2485
        %v2795 = vmul.f32 %v2426, %v2489
        %v2796 = vmul.f32 %v2426, %v2493
        %v2797 = vmul.f32 %v2426, %v2497
        %v2798 = vmul.f32 %v2426, %v2501
        %v2799 = vmul.f32 %v2426, %v2505
        %v2800 = vmul.f32 %v2426, %v2509
        %v2801 = vmul.f32 %v2426, %v2513
        %v2802 = vmul.f32 %v2430, %v2469
        %v2803 = vmul.f32 %v2430, %v2473
        %v2804 = vmul.f32 %v2430, %v2477
        %v2805 = vmul.f32 %v2430, %v2481
        %v2806 = vmul.f32 %v2430, %v2485
        %v2807 = vmul.f32 %v2430, %v2489
        %v2808 = vmul.f32 %v2430, %v2493
        %v2809 = vmul.f32 %v2430, %v2497
        %v2810 = vmul.f32 %v2430, %v2501
        %v2811 = vmul.f32 %v2430, %v2505
        %v2812 = vmul.f32 %v2430, %v2509
        %v2813 = vmul.f32 %v2430, %v2513
        %v2814 = vmul.f32 %v2434, %v2469
        %v2815 = vmul.f32 %v2434, %v2473
        %v2816 = vmul.f32 %v2434, %v2477
        %v2817 = vmul.f32 %v2434, %v2481
        %v2818 = vmul.f32 %v2434, %v2485
        %v2819 = vmul.f32 %v2434, %v2489
        %v2820 = vmul.f32 %v2434, %v2493
        %v2821 = vmul.f32 %v2434, %v2497
        %v2822 = vmul.f32 %v2434, %v2501
        %v2823 = vmul.f32 %v2434, %v2505
        %v2824 = vmul.f32 %v2434, %v2509
        %v2825 = vmul.f32 %v2434, %v2513
        %v2826 = vmul.f32 %v2438, %v2469
        %v2827 = vmul.f32 %v2438, %v2473
        %v2828 = vmul.f32 %v2438, %v2477
        %v2829 = vmul.f32 %v2438, %v2481
        %v2830 = vmul.f32 %v2438, %v2485
        %v2831 = vmul.f32 %v2438, %v2489
        %v2832 = vmul.f32 %v2438, %v2493
        %v2833 = vmul.f32 %v2438, %v2497
        %v2834 = vmul.f32 %v2438, %v2501
        %v2835 = vmul.f32 %v2438, %v2505
        %v2836 = vmul.f32 %v2438, %v2509
        %v2837 = vmul.f32 %v2438, %v2513
        %v2838 = vmul.f32 %v2442, %v2469
        %v2839 = vmul.f32 %v2442, %v2473
        %v2840 = vmul.f32 %v2442, %v2477
        %v2841 = vmul.f32 %v2442, %v2481
        %v2842 = vmul.f32 %v2442, %v2485
        %v2843 = vmul.f32 %v2442, %v2489
        %v2844 = vmul.f32 %v2442, %v2493
        %v2845 = vmul.f32 %v2442, %v2497
        %v2846 = vmul.f32 %v2442, %v2501
        %v2847 = vmul.f32 %v2442, %v2505
        %v2848 = vmul.f32 %v2442, %v2509
        %v2849 = vmul.f32 %v2442, %v2513
        %v2850 = vmul.f32 %v2446, %v2469
        %v2851 = vmul.f32 %v2446, %v2473
        %v2852 = vmul.f32 %v2446, %v2477
        %v2853 = vmul.f32 %v2446, %v2481
        %v2854 = vmul.f32 %v2446, %v2485
        %v2855 = vmul.f32 %v2446, %v2489
        %v2856 = vmul.f32 %v2446, %v2493
        %v2857 = vmul.f32 %v2446, %v2497
        %v2858 = vmul.f32 %v2446, %v2501
        %v2859 = vmul.f32 %v2446, %v2505
        %v2860 = vmul.f32 %v2446, %v2509
        %v2861 = vmul.f32 %v2446, %v2513
        %v2862 = vmul.f32 %v2450, %v2469
        %v2863 = vmul.f32 %v2450, %v2473
        %v2864 = vmul.f32 %v2450, %v2477
        %v2865 = vmul.f32 %v2450, %v2481
        %v2866 = vmul.f32 %v2450, %v2485
        %v2867 = vmul.f32 %v2450, %v2489
        %v2868 = vmul.f32 %v2450, %v2493
        %v2869 = vmul.f32 %v2450, %v2497
        %v2870 = vmul.f32 %v2450, %v2501
        %v2871 = vmul.f32 %v2450, %v2505
        %v2872 = vmul.f32 %v2450, %v2509
        %v2873 = vmul.f32 %v2450, %v2513
        %v2874 = vmul.f32 %v2454, %v2469
        %v2875 = vmul.f32 %v2454, %v2473
        %v2876 = vmul.f32 %v2454, %v2477
        %v2877 = vmul.f32 %v2454, %v2481
        %v2878 = vmul.f32 %v2454, %v2485
        %v2879 = vmul.f32 %v2454, %v2489
        %v2880 = vmul.f32 %v2454, %v2493
        %v2881 = vmul.f32 %v2454, %v2497
        %v2882 = vmul.f32 %v2454, %v2501
        %v2883 = vmul.f32 %v2454, %v2505
        %v2884 = vmul.f32 %v2454, %v2509
        %v2885 = vmul.f32 %v2454, %v2513
        %v2886 = vmul.f32 %v2458, %v2469
        %v2887 = vmul.f32 %v2458, %v2473
        %v2888 = vmul.f32 %v2458, %v2477
        %v2889 = vmul.f32 %v2458, %v2481
        %v2890 = vmul.f32 %v2458, %v2485
        %v2891 = vmul.f32 %v2458, %v2489
        %v2892 = vmul.f32 %v2458, %v2493
        %v2893 = vmul.f32 %v2458, %v2497
        %v2894 = vmul.f32 %v2458, %v2501
        %v2895 = vmul.f32 %v2458, %v2505
        %v2896 = vmul.f32 %v2458, %v2509
        %v2897 = vmul.f32 %v2458, %v2513
        %v2898 = vmul.f32 %v2462, %v2469
        %v2899 = vmul.f32 %v2462, %v2473
        %v2900 = vmul.f32 %v2462, %v2477
        %v2901 = vmul.f32 %v2462, %v2481
        %v2902 = vmul.f32 %v2462, %v2485
        %v2903 = vmul.f32 %v2462, %v2489
        %v2904 = vmul.f32 %v2462, %v2493
        %v2905 = vmul.f32 %v2462, %v2497
        %v2906 = vmul.f32 %v2462, %v2501
        %v2907 = vmul.f32 %v2462, %v2505
        %v2908 = vmul.f32 %v2462, %v2509
        %v2909 = vmul.f32 %v2462, %v2513
        %v2910 = vadd.f32 %v1948, %v2526
        %v2911 = vadd.f32 %v1949, %v2527
        %v2912 = vadd.f32 %v1950, %v2528
        %v2913 = vadd.f32 %v1951, %v2529
        %v2914 = vadd.f32 %v1952, %v2530
        %v2915 = vadd.f32 %v1953, %v2531
        %v2916 = vadd.f32 %v1954, %v2532
        %v2917 = vadd.f32 %v1955, %v2533
        %v2918 = vadd.f32 %v1956, %v2534
        %v2919 = vadd.f32 %v1957, %v2535
        %v2920 = vadd.f32 %v1958, %v2536
        %v2921 = vadd.f32 %v1959, %v2537
        %v2922 = vadd.f32 %v1960, %v2538
        %v2923 = vadd.f32 %v1961, %v2539
        %v2924 = vadd.f32 %v1962, %v2540
        %v2925 = vadd.f32 %v1963, %v2541
        %v2926 = vadd.f32 %v1964, %v2542
        %v2927 = vadd.f32 %v1965, %v2543
        %v2928 = vadd.f32 %v1966, %v2544
        %v2929 = vadd.f32 %v1967, %v2545
        %v2930 = vadd.f32 %v1968, %v2546
        %v2931 = vadd.f32 %v1969, %v2547
        %v2932 = vadd.f32 %v1970, %v2548
        %v2933 = vadd.f32 %v1971, %v2549
        %v2934 = vadd.f32 %v1972, %v2550
        %v2935 = vadd.f32 %v1973, %v2551
        %v2936 = vadd.f32 %v1974, %v2552
        %v2937 = vadd.f32 %v1975, %v2553
        %v2938 = vadd.f32 %v1976, %v2554
        %v2939 = vadd.f32 %v1977, %v2555
        %v2940 = vadd.f32 %v1978, %v2556
        %v2941 = vadd.f32 %v1979, %v2557
        %v2942 = vadd.f32 %v1980, %v2558
        %v2943 = vadd.f32 %v1981, %v2559
        %v2944 = vadd.f32 %v1982, %v2560
        %v2945 = vadd.f32 %v1983, %v2561
        %v2946 = vadd.f32 %v1984, %v2562
        %v2947 = vadd.f32 %v1985, %v2563
        %v2948 = vadd.f32 %v1986, %v2564
        %v2949 = vadd.f32 %v1987, %v2565
        %v2950 = vadd.f32 %v1988, %v2566
        %v2951 = vadd.f32 %v1989, %v2567
        %v2952 = vadd.f32 %v1990, %v2568
        %v2953 = vadd.f32 %v1991, %v2569
        %v2954 = vadd.f32 %v1992, %v2570
        %v2955 = vadd.f32 %v1993, %v2571
        %v2956 = vadd.f32 %v1994, %v2572
        %v2957 = vadd.f32 %v1995, %v2573
        %v2958 = vadd.f32 %v1996, %v2574
        %v2959 = vadd.f32 %v1997, %v2575
        %v2960 = vadd.f32 %v1998, %v2576
        %v2961 = vadd.f32 %v1999, %v2577
        %v2962 = vadd.f32 %v2000, %v2578
        %v2963 = vadd.f32 %v2001, %v2579
        %v2964 = vadd.f32 %v2002, %v2580
        %v2965 = vadd.f32 %v2003, %v2581
        %v2966 = vadd.f32 %v2004, %v2582
        %v2967 = vadd.f32 %v2005, %v2583
        %v2968 = vadd.f32 %v2006, %v2584
        %v2969 = vadd.f32 %v2007, %v2585
        %v2970 = vadd.f32 %v2008, %v2586
        %v2971 = vadd.f32 %v2009, %v2587
        %v2972 = vadd.f32 %v2010, %v2588
        %v2973 = vadd.f32 %v2011, %v2589
        %v2974 = vadd.f32 %v2012, %v2590
        %v2975 = vadd.f32 %v2013, %v2591
        %v2976 = vadd.f32 %v2014, %v2592
        %v2977 = vadd.f32 %v2015, %v2593
        %v2978 = vadd.f32 %v2016, %v2594
        %v2979 = vadd.f32 %v2017, %v2595
        %v2980 = vadd.f32 %v2018, %v2596
        %v2981 = vadd.f32 %v2019, %v2597
        %v2982 = vadd.f32 %v2020, %v2598
        %v2983 = vadd.f32 %v2021, %v2599
        %v2984 = vadd.f32 %v2022, %v2600
        %v2985 = vadd.f32 %v2023, %v2601
        %v2986 = vadd.f32 %v2024, %v2602
        %v2987 = vadd.f32 %v2025, %v2603
        %v2988 = vadd.f32 %v2026, %v2604
        %v2989 = vadd.f32 %v2027, %v2605
        %v2990 = vadd.f32 %v2028, %v2606
        %v2991 = vadd.f32 %v2029, %v2607
        %v2992 = vadd.f32 %v2030, %v2608
        %v2993 = vadd.f32 %v2031, %v2609
        %v2994 = vadd.f32 %v2032, %v2610
        %v2995 = vadd.f32 %v2033, %v2611
        %v2996 = vadd.f32 %v2034, %v2612
        %v2997 = vadd.f32 %v2035, %v2613
        %v2998 = vadd.f32 %v2036, %v2614
        %v2999 = vadd.f32 %v2037, %v2615
        %v3000 = vadd.f32 %v2038, %v2616
        %v3001 = vadd.f32 %v2039, %v2617
        %v3002 = vadd.f32 %v2040, %v2618
        %v3003 = vadd.f32 %v2041, %v2619
        %v3004 = vadd.f32 %v2042, %v2620
        %v3005 = vadd.f32 %v2043, %v2621
        %v3006 = vadd.f32 %v2044, %v2622
        %v3007 = vadd.f32 %v2045, %v2623
        %v3008 = vadd.f32 %v2046, %v2624
        %v3009 = vadd.f32 %v2047, %v2625
        %v3010 = vadd.f32 %v2048, %v2626
        %v3011 = vadd.f32 %v2049, %v2627
        %v3012 = vadd.f32 %v2050, %v2628
        %v3013 = vadd.f32 %v2051, %v2629
        %v3014 = vadd.f32 %v2052, %v2630
        %v3015 = vadd.f32 %v2053, %v2631
        %v3016 = vadd.f32 %v2054, %v2632
        %v3017 = vadd.f32 %v2055, %v2633
        %v3018 = vadd.f32 %v2056, %v2634
        %v3019 = vadd.f32 %v2057, %v2635
        %v3020 = vadd.f32 %v2058, %v2636
        %v3021 = vadd.f32 %v2059, %v2637
        %v3022 = vadd.f32 %v2060, %v2638
        %v3023 = vadd.f32 %v2061, %v2639
        %v3024 = vadd.f32 %v2062, %v2640
        %v3025 = vadd.f32 %v2063, %v2641
        %v3026 = vadd.f32 %v2064, %v2642
        %v3027 = vadd.f32 %v2065, %v2643
        %v3028 = vadd.f32 %v2066, %v2644
        %v3029 = vadd.f32 %v2067, %v2645
        %v3030 = vadd.f32 %v2068, %v2646
        %v3031 = vadd.f32 %v2069, %v2647
        %v3032 = vadd.f32 %v2070, %v2648
        %v3033 = vadd.f32 %v2071, %v2649
        %v3034 = vadd.f32 %v2072, %v2650
        %v3035 = vadd.f32 %v2073, %v2651
        %v3036 = vadd.f32 %v2074, %v2652
        %v3037 = vadd.f32 %v2075, %v2653
        %v3038 = vadd.f32 %v2076, %v2654
        %v3039 = vadd.f32 %v2077, %v2655
        %v3040 = vadd.f32 %v2078, %v2656
        %v3041 = vadd.f32 %v2079, %v2657
        %v3042 = vadd.f32 %v2080, %v2658
        %v3043 = vadd.f32 %v2081, %v2659
        %v3044 = vadd.f32 %v2082, %v2660
        %v3045 = vadd.f32 %v2083, %v2661
        %v3046 = vadd.f32 %v2084, %v2662
        %v3047 = vadd.f32 %v2085, %v2663
        %v3048 = vadd.f32 %v2086, %v2664
        %v3049 = vadd.f32 %v2087, %v2665
        %v3050 = vadd.f32 %v2088, %v2666
        %v3051 = vadd.f32 %v2089, %v2667
        %v3052 = vadd.f32 %v2090, %v2668
        %v3053 = vadd.f32 %v2091, %v2669
        %v3054 = vadd.f32 %v2092, %v2670
        %v3055 = vadd.f32 %v2093, %v2671
        %v3056 = vadd.f32 %v2094, %v2672
        %v3057 = vadd.f32 %v2095, %v2673
        %v3058 = vadd.f32 %v2096, %v2674
        %v3059 = vadd.f32 %v2097, %v2675
        %v3060 = vadd.f32 %v2098, %v2676
        %v3061 = vadd.f32 %v2099, %v2677
        %v3062 = vadd.f32 %v2100, %v2678
        %v3063 = vadd.f32 %v2101, %v2679
        %v3064 = vadd.f32 %v2102, %v2680
        %v3065 = vadd.f32 %v2103, %v2681
        %v3066 = vadd.f32 %v2104, %v2682
        %v3067 = vadd.f32 %v2105, %v2683
        %v3068 = vadd.f32 %v2106, %v2684
        %v3069 = vadd.f32 %v2107, %v2685
        %v3070 = vadd.f32 %v2108, %v2686
        %v3071 = vadd.f32 %v2109, %v2687
        %v3072 = vadd.f32 %v2110, %v2688
        %v3073 = vadd.f32 %v2111, %v2689
        %v3074 = vadd.f32 %v2112, %v2690
        %v3075 = vadd.f32 %v2113, %v2691
        %v3076 = vadd.f32 %v2114, %v2692
        %v3077 = vadd.f32 %v2115, %v2693
        %v3078 = vadd.f32 %v2116, %v2694
        %v3079 = vadd.f32 %v2117, %v2695
        %v3080 = vadd.f32 %v2118, %v2696
        %v3081 = vadd.f32 %v2119, %v2697
        %v3082 = vadd.f32 %v2120, %v2698
        %v3083 = vadd.f32 %v2121, %v2699
        %v3084 = vadd.f32 %v2122, %v2700
        %v3085 = vadd.f32 %v2123, %v2701
        %v3086 = vadd.f32 %v2124, %v2702
        %v3087 = vadd.f32 %v2125, %v2703
        %v3088 = vadd.f32 %v2126, %v2704
        %v3089 = vadd.f32 %v2127, %v2705
        %v3090 = vadd.f32 %v2128, %v2706
        %v3091 = vadd.f32 %v2129, %v2707
        %v3092 = vadd.f32 %v2130, %v2708
        %v3093 = vadd.f32 %v2131, %v2709
        %v3094 = vadd.f32 %v2132, %v2710
        %v3095 = vadd.f32 %v2133, %v2711
        %v3096 = vadd.f32 %v2134, %v2712
        %v3097 = vadd.f32 %v2135, %v2713
        %v3098 = vadd.f32 %v2136, %v2714
        %v3099 = vadd.f32 %v2137, %v2715
        %v3100 = vadd.f32 %v2138, %v2716
        %v3101 = vadd.f32 %v2139, %v2717
        %v3102 = vadd.f32 %v2140, %v2718
        %v3103 = vadd.f32 %v2141, %v2719
        %v3104 = vadd.f32 %v2142, %v2720
        %v3105 = vadd.f32 %v2143, %v2721
        %v3106 = vadd.f32 %v2144, %v2722
        %v3107 = vadd.f32 %v2145, %v2723
        %v3108 = vadd.f32 %v2146, %v2724
        %v3109 = vadd.f32 %v2147, %v2725
        %v3110 = vadd.f32 %v2148, %v2726
        %v3111 = vadd.f32 %v2149, %v2727
        %v3112 = vadd.f32 %v2150, %v2728
        %v3113 = vadd.f32 %v2151, %v2729
        %v3114 = vadd.f32 %v2152, %v2730
        %v3115 = vadd.f32 %v2153, %v2731
        %v3116 = vadd.f32 %v2154, %v2732
        %v3117 = vadd.f32 %v2155, %v2733
        %v3118 = vadd.f32 %v2156, %v2734
        %v3119 = vadd.f32 %v2157, %v2735
        %v3120 = vadd.f32 %v2158, %v2736
        %v3121 = vadd.f32 %v2159, %v2737
        %v3122 = vadd.f32 %v2160, %v2738
        %v3123 = vadd.f32 %v2161, %v2739
        %v3124 = vadd.f32 %v2162, %v2740
        %v3125 = vadd.f32 %v2163, %v2741
        %v3126 = vadd.f32 %v2164, %v2742
        %v3127 = vadd.f32 %v2165, %v2743
        %v3128 = vadd.f32 %v2166, %v2744
        %v3129 = vadd.f32 %v2167, %v2745
        %v3130 = vadd.f32 %v2168, %v2746
        %v3131 = vadd.f32 %v2169, %v2747
        %v3132 = vadd.f32 %v2170, %v2748
        %v3133 = vadd.f32 %v2171, %v2749
        %v3134 = vadd.f32 %v2172, %v2750
        %v3135 = vadd.f32 %v2173, %v2751
        %v3136 = vadd.f32 %v2174, %v2752
        %v3137 = vadd.f32 %v2175, %v2753
        %v3138 = vadd.f32 %v2176, %v2754
        %v3139 = vadd.f32 %v2177, %v2755
        %v3140 = vadd.f32 %v2178, %v2756
        %v3141 = vadd.f32 %v2179, %v2757
        %v3142 = vadd.f32 %v2180, %v2758
        %v3143 = vadd.f32 %v2181, %v2759
        %v3144 = vadd.f32 %v2182, %v2760
        %v3145 = vadd.f32 %v2183, %v2761
        %v3146 = vadd.f32 %v2184, %v2762
        %v3147 = vadd.f32 %v2185, %v2763
        %v3148 = vadd.f32 %v2186, %v2764
        %v3149 = vadd.f32 %v2187, %v2765
        %v3150 = vadd.f32 %v2188, %v2766
        %v3151 = vadd.f32 %v2189, %v2767
        %v3152 = vadd.f32 %v2190, %v2768
        %v3153 = vadd.f32 %v2191, %v2769
        %v3154 = vadd.f32 %v2192, %v2770
        %v3155 = vadd.f32 %v2193, %v2771
        %v3156 = vadd.f32 %v2194, %v2772
        %v3157 = vadd.f32 %v2195, %v2773
        %v3158 = vadd.f32 %v2196, %v2774
        %v3159 = vadd.f32 %v2197, %v2775
        %v3160 = vadd.f32 %v2198, %v2776
        %v3161 = vadd.f32 %v2199, %v2777
        %v3162 = vadd.f32 %v2200, %v2778
        %v3163 = vadd.f32 %v2201, %v2779
        %v3164 = vadd.f32 %v2202, %v2780
        %v3165 = vadd.f32 %v2203, %v2781
        %v3166 = vadd.f32 %v2204, %v2782
        %v3167 = vadd.f32 %v2205, %v2783
        %v3168 = vadd.f32 %v2206, %v2784
        %v3169 = vadd.f32 %v2207, %v2785
        %v3170 = vadd.f32 %v2208, %v2786
        %v3171 = vadd.f32 %v2209, %v2787
        %v3172 = vadd.f32 %v2210, %v2788
        %v3173 = vadd.f32 %v2211, %v2789
        %v3174 = vadd.f32 %v2212, %v2790
        %v3175 = vadd.f32 %v2213, %v2791
        %v3176 = vadd.f32 %v2214, %v2792
        %v3177 = vadd.f32 %v2215, %v2793
        %v3178 = vadd.f32 %v2216, %v2794
        %v3179 = vadd.f32 %v2217, %v2795
        %v3180 = vadd.f32 %v2218, %v2796
        %v3181 = vadd.f32 %v2219, %v2797
        %v3182 = vadd.f32 %v2220, %v2798
        %v3183 = vadd.f32 %v2221, %v2799
        %v3184 = vadd.f32 %v2222, %v2800
        %v3185 = vadd.f32 %v2223, %v2801
        %v3186 = vadd.f32 %v2224, %v2802
        %v3187 = vadd.f32 %v2225, %v2803
        %v3188 = vadd.f32 %v2226, %v2804
        %v3189 = vadd.f32 %v2227, %v2805
        %v3190 = vadd.f32 %v2228, %v2806
        %v3191 = vadd.f32 %v2229, %v2807
        %v3192 = vadd.f32 %v2230, %v2808
        %v3193 = vadd.f32 %v2231, %v2809
        %v3194 = vadd.f32 %v2232, %v2810
        %v3195 = vadd.f32 %v2233, %v2811
        %v3196 = vadd.f32 %v2234, %v2812
        %v3197 = vadd.f32 %v2235, %v2813
        %v3198 = vadd.f32 %v2236, %v2814
        %v3199 = vadd.f32 %v2237, %v2815
        %v3200 = vadd.f32 %v2238, %v2816
        %v3201 = vadd.f32 %v2239, %v2817
        %v3202 = vadd.f32 %v2240, %v2818
        %v3203 = vadd.f32 %v2241, %v2819
        %v3204 = vadd.f32 %v2242, %v2820
        %v3205 = vadd.f32 %v2243, %v2821
        %v3206 = vadd.f32 %v2244, %v2822
        %v3207 = vadd.f32 %v2245, %v2823
        %v3208 = vadd.f32 %v2246, %v2824
        %v3209 = vadd.f32 %v2247, %v2825
        %v3210 = vadd.f32 %v2248, %v2826
        %v3211 = vadd.f32 %v2249, %v2827
        %v3212 = vadd.f32 %v2250, %v2828
        %v3213 = vadd.f32 %v2251, %v2829
        %v3214 = vadd.f32 %v2252, %v2830
        %v3215 = vadd.f32 %v2253, %v2831
        %v3216 = vadd.f32 %v2254, %v2832
        %v3217 = vadd.f32 %v2255, %v2833
        %v3218 = vadd.f32 %v2256, %v2834
        %v3219 = vadd.f32 %v2257, %v2835
        %v3220 = vadd.f32 %v2258, %v2836
        %v3221 = vadd.f32 %v2259, %v2837
        %v3222 = vadd.f32 %v2260, %v2838
        %v3223 = vadd.f32 %v2261, %v2839
        %v3224 = vadd.f32 %v2262, %v2840
        %v3225 = vadd.f32 %v2263, %v2841
        %v3226 = vadd.f32 %v2264, %v2842
        %v3227 = vadd.f32 %v2265, %v2843
        %v3228 = vadd.f32 %v2266, %v2844
        %v3229 = vadd.f32 %v2267, %v2845
        %v3230 = vadd.f32 %v2268, %v2846
        %v3231 = vadd.f32 %v2269, %v2847
        %v3232 = vadd.f32 %v2270, %v2848
        %v3233 = vadd.f32 %v2271, %v2849
        %v3234 = vadd.f32 %v2272, %v2850
        %v3235 = vadd.f32 %v2273, %v2851
        %v3236 = vadd.f32 %v2274, %v2852
        %v3237 = vadd.f32 %v2275, %v2853
        %v3238 = vadd.f32 %v2276, %v2854
        %v3239 = vadd.f32 %v2277, %v2855
        %v3240 = vadd.f32 %v2278, %v2856
        %v3241 = vadd.f32 %v2279, %v2857
        %v3242 = vadd.f32 %v2280, %v2858
        %v3243 = vadd.f32 %v2281, %v2859
        %v3244 = vadd.f32 %v2282, %v2860
        %v3245 = vadd.f32 %v2283, %v2861
        %v3246 = vadd.f32 %v2284, %v2862
        %v3247 = vadd.f32 %v2285, %v2863
        %v3248 = vadd.f32 %v2286, %v2864
        %v3249 = vadd.f32 %v2287, %v2865
        %v3250 = vadd.f32 %v2288, %v2866
        %v3251 = vadd.f32 %v2289, %v2867
        %v3252 = vadd.f32 %v2290, %v2868
        %v3253 = vadd.f32 %v2291, %v2869
        %v3254 = vadd.f32 %v2292, %v2870
        %v3255 = vadd.f32 %v2293, %v2871
        %v3256 = vadd.f32 %v2294, %v2872
        %v3257 = vadd.f32 %v2295, %v2873
        %v3258 = vadd.f32 %v2296, %v2874
        %v3259 = vadd.f32 %v2297, %v2875
        %v3260 = vadd.f32 %v2298, %v2876
        %v3261 = vadd.f32 %v2299, %v2877
        %v3262 = vadd.f32 %v2300, %v2878
        %v3263 = vadd.f32 %v2301, %v2879
        %v3264 = vadd.f32 %v2302, %v2880
        %v3265 = vadd.f32 %v2303, %v2881
        %v3266 = vadd.f32 %v2304, %v2882
        %v3267 = vadd.f32 %v2305, %v2883
        %v3268 = vadd.f32 %v2306, %v2884
        %v3269 = vadd.f32 %v2307, %v2885
        %v3270 = vadd.f32 %v2308, %v2886
        %v3271 = vadd.f32 %v2309, %v2887
        %v3272 = vadd.f32 %v2310, %v2888
        %v3273 = vadd.f32 %v2311, %v2889
        %v3274 = vadd.f32 %v2312, %v2890
        %v3275 = vadd.f32 %v2313, %v2891
        %v3276 = vadd.f32 %v2314, %v2892
        %v3277 = vadd.f32 %v2315, %v2893
        %v3278 = vadd.f32 %v2316, %v2894
        %v3279 = vadd.f32 %v2317, %v2895
        %v3280 = vadd.f32 %v2318, %v2896
        %v3281 = vadd.f32 %v2319, %v2897
        %v3282 = vadd.f32 %v2320, %v2898
        %v3283 = vadd.f32 %v2321, %v2899
        %v3284 = vadd.f32 %v2322, %v2900
        %v3285 = vadd.f32 %v2323, %v2901
        %v3286 = vadd.f32 %v2324, %v2902
        %v3287 = vadd.f32 %v2325, %v2903
        %v3288 = vadd.f32 %v2326, %v2904
        %v3289 = vadd.f32 %v2327, %v2905
        %v3290 = vadd.f32 %v2328, %v2906
        %v3291 = vadd.f32 %v2329, %v2907
        %v3292 = vadd.f32 %v2330, %v2908
        %v3293 = vadd.f32 %v2331, %v2909
        %s3294 = scalar_lea.vmem %s1, 3
        %v3295 = vld [vmem:[%s3294] ss:$4 sm:$0xff]
        %s3296 = scalar_lea.vmem %s1, 35
        %v3297 = vld [vmem:[%s3296] ss:$4 sm:$0xf]
        %3298 = vset.pattern.permute.xlu0 3
        %3299 = vperm.xlu0 %3298, %v281
        %v3300 = vpop.permute.xlu0 %3299
        %3302 = vset.pattern.permute.xlu0 3
        %3303 = vperm.xlu0 %3302, %v282
        %v3304 = vpop.permute.xlu0 %3303
        %3306 = vset.pattern.permute.xlu0 3
        %3307 = vperm.xlu0 %3306, %v283
        %v3308 = vpop.permute.xlu0 %3307
        %3310 = vset.pattern.permute.xlu0 3
        %3311 = vperm.xlu0 %3310, %v284
        %v3312 = vpop.permute.xlu0 %3311
        %3314 = vset.pattern.permute.xlu0 3
        %3315 = vperm.xlu0 %3314, %v285
        %v3316 = vpop.permute.xlu0 %3315
        %3318 = vset.pattern.permute.xlu0 3
        %3319 = vperm.xlu0 %3318, %v286
        %v3320 = vpop.permute.xlu0 %3319
        %3322 = vset.pattern.permute.xlu0 3
        %3323 = vperm.xlu0 %3322, %v287
        %v3324 = vpop.permute.xlu0 %3323
        %3326 = vset.pattern.permute.xlu0 3
        %3327 = vperm.xlu0 %3326, %v288
        %v3328 = vpop.permute.xlu0 %3327
        %3330 = vset.pattern.permute.xlu0 3
        %3331 = vperm.xlu0 %3330, %v289
        %v3332 = vpop.permute.xlu0 %3331
        %3334 = vset.pattern.permute.xlu0 3
        %3335 = vperm.xlu0 %3334, %v290
        %v3336 = vpop.permute.xlu0 %3335
        %3338 = vset.pattern.permute.xlu0 3
        %3339 = vperm.xlu0 %3338, %v291
        %v3340 = vpop.permute.xlu0 %3339
        %3342 = vset.pattern.permute.xlu0 3
        %3343 = vperm.xlu0 %3342, %v292
        %v3344 = vpop.permute.xlu0 %3343
        %3346 = vset.pattern.permute.xlu0 3
        %3347 = vperm.xlu0 %3346, %v293
        %v3348 = vpop.permute.xlu0 %3347
        %3350 = vset.pattern.permute.xlu0 3
        %3351 = vperm.xlu0 %3350, %v294
        %v3352 = vpop.permute.xlu0 %3351
        %3354 = vset.pattern.permute.xlu0 3
        %3355 = vperm.xlu0 %3354, %v295
        %v3356 = vpop.permute.xlu0 %3355
        %3358 = vset.pattern.permute.xlu0 3
        %3359 = vperm.xlu0 %3358, %v296
        %v3360 = vpop.permute.xlu0 %3359
        %3362 = vset.pattern.permute.xlu0 3
        %3363 = vperm.xlu0 %3362, %v297
        %v3364 = vpop.permute.xlu0 %3363
        %3366 = vset.pattern.permute.xlu0 3
        %3367 = vperm.xlu0 %3366, %v298
        %v3368 = vpop.permute.xlu0 %3367
        %3370 = vset.pattern.permute.xlu0 3
        %3371 = vperm.xlu0 %3370, %v299
        %v3372 = vpop.permute.xlu0 %3371
        %3374 = vset.pattern.permute.xlu0 3
        %3375 = vperm.xlu0 %3374, %v300
        %v3376 = vpop.permute.xlu0 %3375
        %3378 = vset.pattern.permute.xlu0 3
        %3379 = vperm.xlu0 %3378, %v301
        %v3380 = vpop.permute.xlu0 %3379
        %3382 = vset.pattern.permute.xlu0 3
        %3383 = vperm.xlu0 %3382, %v302
        %v3384 = vpop.permute.xlu0 %3383
        %3386 = vset.pattern.permute.xlu0 3
        %3387 = vperm.xlu0 %3386, %v303
        %v3388 = vpop.permute.xlu0 %3387
        %3390 = vset.pattern.permute.xlu0 3
        %3391 = vperm.xlu0 %3390, %v304
        %v3392 = vpop.permute.xlu0 %3391
        %3394 = vset.pattern.permute.xlu0 3
        %3395 = vperm.xlu0 %3394, %v305
        %v3396 = vpop.permute.xlu0 %3395
        %3398 = vset.pattern.permute.xlu0 3
        %3399 = vperm.xlu0 %3398, %v306
        %v3400 = vpop.permute.xlu0 %3399
        %3402 = vset.pattern.permute.xlu0 3
        %3403 = vperm.xlu0 %3402, %v307
        %v3404 = vpop.permute.xlu0 %3403
        %3406 = vset.pattern.permute.xlu0 3
        %3407 = vperm.xlu0 %3406, %v308
        %v3408 = vpop.permute.xlu0 %3407
        %3410 = vset.pattern.permute.xlu0 3
        %3411 = vperm.xlu0 %3410, %v309
        %v3412 = vpop.permute.xlu0 %3411
        %3414 = vset.pattern.permute.xlu0 3
        %3415 = vperm.xlu0 %3414, %v310
        %v3416 = vpop.permute.xlu0 %3415
        %3418 = vset.pattern.permute.xlu0 3
        %3419 = vperm.xlu0 %3418, %v311
        %v3420 = vpop.permute.xlu0 %3419
        %3422 = vset.pattern.permute.xlu0 3
        %3423 = vperm.xlu0 %3422, %v312
        %v3424 = vpop.permute.xlu0 %3423
        %v3428 = vlaneseq
        %v3429 = vshrl.u32 %v3428, 7
        %v3430 = vsub.s32 0, %v3429
        %v3431 = vrot.slane %v3295, %v3430
        %v3432 = vlaneseq
        %v3433 = vshrl.u32 %v3432, 7
        %v3434 = vsub.s32 1, %v3433
        %v3435 = vrot.slane %v3295, %v3434
        %v3436 = vlaneseq
        %v3437 = vshrl.u32 %v3436, 7
        %v3438 = vsub.s32 2, %v3437
        %v3439 = vrot.slane %v3295, %v3438
        %v3440 = vlaneseq
        %v3441 = vshrl.u32 %v3440, 7
        %v3442 = vsub.s32 3, %v3441
        %v3443 = vrot.slane %v3295, %v3442
        %v3444 = vlaneseq
        %v3445 = vshrl.u32 %v3444, 7
        %v3446 = vsub.s32 4, %v3445
        %v3447 = vrot.slane %v3295, %v3446
        %v3448 = vlaneseq
        %v3449 = vshrl.u32 %v3448, 7
        %v3450 = vsub.s32 5, %v3449
        %v3451 = vrot.slane %v3295, %v3450
        %v3452 = vlaneseq
        %v3453 = vshrl.u32 %v3452, 7
        %v3454 = vsub.s32 6, %v3453
        %v3455 = vrot.slane %v3295, %v3454
        %v3456 = vlaneseq
        %v3457 = vshrl.u32 %v3456, 7
        %v3458 = vsub.s32 7, %v3457
        %v3459 = vrot.slane %v3295, %v3458
        %v3460 = vlaneseq
        %v3461 = vshrl.u32 %v3460, 7
        %v3462 = vsub.s32 0, %v3461
        %v3463 = vrot.slane %v3297, %v3462
        %v3464 = vlaneseq
        %v3465 = vshrl.u32 %v3464, 7
        %v3466 = vsub.s32 1, %v3465
        %v3467 = vrot.slane %v3297, %v3466
        %v3468 = vlaneseq
        %v3469 = vshrl.u32 %v3468, 7
        %v3470 = vsub.s32 2, %v3469
        %v3471 = vrot.slane %v3297, %v3470
        %v3472 = vlaneseq
        %v3473 = vshrl.u32 %v3472, 7
        %v3474 = vsub.s32 3, %v3473
        %v3475 = vrot.slane %v3297, %v3474
        %v3488 = vmul.f32 %v3300, %v3431
        %v3489 = vmul.f32 %v3300, %v3435
        %v3490 = vmul.f32 %v3300, %v3439
        %v3491 = vmul.f32 %v3300, %v3443
        %v3492 = vmul.f32 %v3300, %v3447
        %v3493 = vmul.f32 %v3300, %v3451
        %v3494 = vmul.f32 %v3300, %v3455
        %v3495 = vmul.f32 %v3300, %v3459
        %v3496 = vmul.f32 %v3300, %v3463
        %v3497 = vmul.f32 %v3300, %v3467
        %v3498 = vmul.f32 %v3300, %v3471
        %v3499 = vmul.f32 %v3300, %v3475
        %v3500 = vmul.f32 %v3304, %v3431
        %v3501 = vmul.f32 %v3304, %v3435
        %v3502 = vmul.f32 %v3304, %v3439
        %v3503 = vmul.f32 %v3304, %v3443
        %v3504 = vmul.f32 %v3304, %v3447
        %v3505 = vmul.f32 %v3304, %v3451
        %v3506 = vmul.f32 %v3304, %v3455
        %v3507 = vmul.f32 %v3304, %v3459
        %v3508 = vmul.f32 %v3304, %v3463
        %v3509 = vmul.f32 %v3304, %v3467
        %v3510 = vmul.f32 %v3304, %v3471
        %v3511 = vmul.f32 %v3304, %v3475
        %v3512 = vmul.f32 %v3308, %v3431
        %v3513 = vmul.f32 %v3308, %v3435
        %v3514 = vmul.f32 %v3308, %v3439
        %v3515 = vmul.f32 %v3308, %v3443
        %v3516 = vmul.f32 %v3308, %v3447
        %v3517 = vmul.f32 %v3308, %v3451
        %v3518 = vmul.f32 %v3308, %v3455
        %v3519 = vmul.f32 %v3308, %v3459
        %v3520 = vmul.f32 %v3308, %v3463
        %v3521 = vmul.f32 %v3308, %v3467
        %v3522 = vmul.f32 %v3308, %v3471
        %v3523 = vmul.f32 %v3308, %v3475
        %v3524 = vmul.f32 %v3312, %v3431
        %v3525 = vmul.f32 %v3312, %v3435
        %v3526 = vmul.f32 %v3312, %v3439
        %v3527 = vmul.f32 %v3312, %v3443
        %v3528 = vmul.f32 %v3312, %v3447
        %v3529 = vmul.f32 %v3312, %v3451
        %v3530 = vmul.f32 %v3312, %v3455
        %v3531 = vmul.f32 %v3312, %v3459
        %v3532 = vmul.f32 %v3312, %v3463
        %v3533 = vmul.f32 %v3312, %v3467
        %v3534 = vmul.f32 %v3312, %v3471
        %v3535 = vmul.f32 %v3312, %v3475
        %v3536 = vmul.f32 %v3316, %v3431
        %v3537 = vmul.f32 %v3316, %v3435
        %v3538 = vmul.f32 %v3316, %v3439
        %v3539 = vmul.f32 %v3316, %v3443
        %v3540 = vmul.f32 %v3316, %v3447
        %v3541 = vmul.f32 %v3316, %v3451
        %v3542 = vmul.f32 %v3316, %v3455
        %v3543 = vmul.f32 %v3316, %v3459
        %v3544 = vmul.f32 %v3316, %v3463
        %v3545 = vmul.f32 %v3316, %v3467
        %v3546 = vmul.f32 %v3316, %v3471
        %v3547 = vmul.f32 %v3316, %v3475
        %v3548 = vmul.f32 %v3320, %v3431
        %v3549 = vmul.f32 %v3320, %v3435
        %v3550 = vmul.f32 %v3320, %v3439
        %v3551 = vmul.f32 %v3320, %v3443
        %v3552 = vmul.f32 %v3320, %v3447
        %v3553 = vmul.f32 %v3320, %v3451
        %v3554 = vmul.f32 %v3320, %v3455
        %v3555 = vmul.f32 %v3320, %v3459
        %v3556 = vmul.f32 %v3320, %v3463
        %v3557 = vmul.f32 %v3320, %v3467
        %v3558 = vmul.f32 %v3320, %v3471
        %v3559 = vmul.f32 %v3320, %v3475
        %v3560 = vmul.f32 %v3324, %v3431
        %v3561 = vmul.f32 %v3324, %v3435
        %v3562 = vmul.f32 %v3324, %v3439
        %v3563 = vmul.f32 %v3324, %v3443
        %v3564 = vmul.f32 %v3324, %v3447
        %v3565 = vmul.f32 %v3324, %v3451
        %v3566 = vmul.f32 %v3324, %v3455
        %v3567 = vmul.f32 %v3324, %v3459
        %v3568 = vmul.f32 %v3324, %v3463
        %v3569 = vmul.f32 %v3324, %v3467
        %v3570 = vmul.f32 %v3324, %v3471
        %v3571 = vmul.f32 %v3324, %v3475
        %v3572 = vmul.f32 %v3328, %v3431
        %v3573 = vmul.f32 %v3328, %v3435
        %v3574 = vmul.f32 %v3328, %v3439
        %v3575 = vmul.f32 %v3328, %v3443
        %v3576 = vmul.f32 %v3328, %v3447
        %v3577 = vmul.f32 %v3328, %v3451
        %v3578 = vmul.f32 %v3328, %v3455
        %v3579 = vmul.f32 %v3328, %v3459
        %v3580 = vmul.f32 %v3328, %v3463
        %v3581 = vmul.f32 %v3328, %v3467
        %v3582 = vmul.f32 %v3328, %v3471
        %v3583 = vmul.f32 %v3328, %v3475
        %v3584 = vmul.f32 %v3332, %v3431
        %v3585 = vmul.f32 %v3332, %v3435
        %v3586 = vmul.f32 %v3332, %v3439
        %v3587 = vmul.f32 %v3332, %v3443
        %v3588 = vmul.f32 %v3332, %v3447
        %v3589 = vmul.f32 %v3332, %v3451
        %v3590 = vmul.f32 %v3332, %v3455
        %v3591 = vmul.f32 %v3332, %v3459
        %v3592 = vmul.f32 %v3332, %v3463
        %v3593 = vmul.f32 %v3332, %v3467
        %v3594 = vmul.f32 %v3332, %v3471
        %v3595 = vmul.f32 %v3332, %v3475
        %v3596 = vmul.f32 %v3336, %v3431
        %v3597 = vmul.f32 %v3336, %v3435
        %v3598 = vmul.f32 %v3336, %v3439
        %v3599 = vmul.f32 %v3336, %v3443
        %v3600 = vmul.f32 %v3336, %v3447
        %v3601 = vmul.f32 %v3336, %v3451
        %v3602 = vmul.f32 %v3336, %v3455
        %v3603 = vmul.f32 %v3336, %v3459
        %v3604 = vmul.f32 %v3336, %v3463
        %v3605 = vmul.f32 %v3336, %v3467
        %v3606 = vmul.f32 %v3336, %v3471
        %v3607 = vmul.f32 %v3336, %v3475
        %v3608 = vmul.f32 %v3340, %v3431
        %v3609 = vmul.f32 %v3340, %v3435
        %v3610 = vmul.f32 %v3340, %v3439
        %v3611 = vmul.f32 %v3340, %v3443
        %v3612 = vmul.f32 %v3340, %v3447
        %v3613 = vmul.f32 %v3340, %v3451
        %v3614 = vmul.f32 %v3340, %v3455
        %v3615 = vmul.f32 %v3340, %v3459
        %v3616 = vmul.f32 %v3340, %v3463
        %v3617 = vmul.f32 %v3340, %v3467
        %v3618 = vmul.f32 %v3340, %v3471
        %v3619 = vmul.f32 %v3340, %v3475
        %v3620 = vmul.f32 %v3344, %v3431
        %v3621 = vmul.f32 %v3344, %v3435
        %v3622 = vmul.f32 %v3344, %v3439
        %v3623 = vmul.f32 %v3344, %v3443
        %v3624 = vmul.f32 %v3344, %v3447
        %v3625 = vmul.f32 %v3344, %v3451
        %v3626 = vmul.f32 %v3344, %v3455
        %v3627 = vmul.f32 %v3344, %v3459
        %v3628 = vmul.f32 %v3344, %v3463
        %v3629 = vmul.f32 %v3344, %v3467
        %v3630 = vmul.f32 %v3344, %v3471
        %v3631 = vmul.f32 %v3344, %v3475
        %v3632 = vmul.f32 %v3348, %v3431
        %v3633 = vmul.f32 %v3348, %v3435
        %v3634 = vmul.f32 %v3348, %v3439
        %v3635 = vmul.f32 %v3348, %v3443
        %v3636 = vmul.f32 %v3348, %v3447
        %v3637 = vmul.f32 %v3348, %v3451
        %v3638 = vmul.f32 %v3348, %v3455
        %v3639 = vmul.f32 %v3348, %v3459
        %v3640 = vmul.f32 %v3348, %v3463
        %v3641 = vmul.f32 %v3348, %v3467
        %v3642 = vmul.f32 %v3348, %v3471
        %v3643 = vmul.f32 %v3348, %v3475
        %v3644 = vmul.f32 %v3352, %v3431
        %v3645 = vmul.f32 %v3352, %v3435
        %v3646 = vmul.f32 %v3352, %v3439
        %v3647 = vmul.f32 %v3352, %v3443
        %v3648 = vmul.f32 %v3352, %v3447
        %v3649 = vmul.f32 %v3352, %v3451
        %v3650 = vmul.f32 %v3352, %v3455
        %v3651 = vmul.f32 %v3352, %v3459
        %v3652 = vmul.f32 %v3352, %v3463
        %v3653 = vmul.f32 %v3352, %v3467
        %v3654 = vmul.f32 %v3352, %v3471
        %v3655 = vmul.f32 %v3352, %v3475
        %v3656 = vmul.f32 %v3356, %v3431
        %v3657 = vmul.f32 %v3356, %v3435
        %v3658 = vmul.f32 %v3356, %v3439
        %v3659 = vmul.f32 %v3356, %v3443
        %v3660 = vmul.f32 %v3356, %v3447
        %v3661 = vmul.f32 %v3356, %v3451
        %v3662 = vmul.f32 %v3356, %v3455
        %v3663 = vmul.f32 %v3356, %v3459
        %v3664 = vmul.f32 %v3356, %v3463
        %v3665 = vmul.f32 %v3356, %v3467
        %v3666 = vmul.f32 %v3356, %v3471
        %v3667 = vmul.f32 %v3356, %v3475
        %v3668 = vmul.f32 %v3360, %v3431
        %v3669 = vmul.f32 %v3360, %v3435
        %v3670 = vmul.f32 %v3360, %v3439
        %v3671 = vmul.f32 %v3360, %v3443
        %v3672 = vmul.f32 %v3360, %v3447
        %v3673 = vmul.f32 %v3360, %v3451
        %v3674 = vmul.f32 %v3360, %v3455
        %v3675 = vmul.f32 %v3360, %v3459
        %v3676 = vmul.f32 %v3360, %v3463
        %v3677 = vmul.f32 %v3360, %v3467
        %v3678 = vmul.f32 %v3360, %v3471
        %v3679 = vmul.f32 %v3360, %v3475
        %v3680 = vmul.f32 %v3364, %v3431
        %v3681 = vmul.f32 %v3364, %v3435
        %v3682 = vmul.f32 %v3364, %v3439
        %v3683 = vmul.f32 %v3364, %v3443
        %v3684 = vmul.f32 %v3364, %v3447
        %v3685 = vmul.f32 %v3364, %v3451
        %v3686 = vmul.f32 %v3364, %v3455
        %v3687 = vmul.f32 %v3364, %v3459
        %v3688 = vmul.f32 %v3364, %v3463
        %v3689 = vmul.f32 %v3364, %v3467
        %v3690 = vmul.f32 %v3364, %v3471
        %v3691 = vmul.f32 %v3364, %v3475
        %v3692 = vmul.f32 %v3368, %v3431
        %v3693 = vmul.f32 %v3368, %v3435
        %v3694 = vmul.f32 %v3368, %v3439
        %v3695 = vmul.f32 %v3368, %v3443
        %v3696 = vmul.f32 %v3368, %v3447
        %v3697 = vmul.f32 %v3368, %v3451
        %v3698 = vmul.f32 %v3368, %v3455
        %v3699 = vmul.f32 %v3368, %v3459
        %v3700 = vmul.f32 %v3368, %v3463
        %v3701 = vmul.f32 %v3368, %v3467
        %v3702 = vmul.f32 %v3368, %v3471
        %v3703 = vmul.f32 %v3368, %v3475
        %v3704 = vmul.f32 %v3372, %v3431
        %v3705 = vmul.f32 %v3372, %v3435
        %v3706 = vmul.f32 %v3372, %v3439
        %v3707 = vmul.f32 %v3372, %v3443
        %v3708 = vmul.f32 %v3372, %v3447
        %v3709 = vmul.f32 %v3372, %v3451
        %v3710 = vmul.f32 %v3372, %v3455
        %v3711 = vmul.f32 %v3372, %v3459
        %v3712 = vmul.f32 %v3372, %v3463
        %v3713 = vmul.f32 %v3372, %v3467
        %v3714 = vmul.f32 %v3372, %v3471
        %v3715 = vmul.f32 %v3372, %v3475
        %v3716 = vmul.f32 %v3376, %v3431
        %v3717 = vmul.f32 %v3376, %v3435
        %v3718 = vmul.f32 %v3376, %v3439
        %v3719 = vmul.f32 %v3376, %v3443
        %v3720 = vmul.f32 %v3376, %v3447
        %v3721 = vmul.f32 %v3376, %v3451
        %v3722 = vmul.f32 %v3376, %v3455
        %v3723 = vmul.f32 %v3376, %v3459
        %v3724 = vmul.f32 %v3376, %v3463
        %v3725 = vmul.f32 %v3376, %v3467
        %v3726 = vmul.f32 %v3376, %v3471
        %v3727 = vmul.f32 %v3376, %v3475
        %v3728 = vmul.f32 %v3380, %v3431
        %v3729 = vmul.f32 %v3380, %v3435
        %v3730 = vmul.f32 %v3380, %v3439
        %v3731 = vmul.f32 %v3380, %v3443
        %v3732 = vmul.f32 %v3380, %v3447
        %v3733 = vmul.f32 %v3380, %v3451
        %v3734 = vmul.f32 %v3380, %v3455
        %v3735 = vmul.f32 %v3380, %v3459
        %v3736 = vmul.f32 %v3380, %v3463
        %v3737 = vmul.f32 %v3380, %v3467
        %v3738 = vmul.f32 %v3380, %v3471
        %v3739 = vmul.f32 %v3380, %v3475
        %v3740 = vmul.f32 %v3384, %v3431
        %v3741 = vmul.f32 %v3384, %v3435
        %v3742 = vmul.f32 %v3384, %v3439
        %v3743 = vmul.f32 %v3384, %v3443
        %v3744 = vmul.f32 %v3384, %v3447
        %v3745 = vmul.f32 %v3384, %v3451
        %v3746 = vmul.f32 %v3384, %v3455
        %v3747 = vmul.f32 %v3384, %v3459
        %v3748 = vmul.f32 %v3384, %v3463
        %v3749 = vmul.f32 %v3384, %v3467
        %v3750 = vmul.f32 %v3384, %v3471
        %v3751 = vmul.f32 %v3384, %v3475
        %v3752 = vmul.f32 %v3388, %v3431
        %v3753 = vmul.f32 %v3388, %v3435
        %v3754 = vmul.f32 %v3388, %v3439
        %v3755 = vmul.f32 %v3388, %v3443
        %v3756 = vmul.f32 %v3388, %v3447
        %v3757 = vmul.f32 %v3388, %v3451
        %v3758 = vmul.f32 %v3388, %v3455
        %v3759 = vmul.f32 %v3388, %v3459
        %v3760 = vmul.f32 %v3388, %v3463
        %v3761 = vmul.f32 %v3388, %v3467
        %v3762 = vmul.f32 %v3388, %v3471
        %v3763 = vmul.f32 %v3388, %v3475
        %v3764 = vmul.f32 %v3392, %v3431
        %v3765 = vmul.f32 %v3392, %v3435
        %v3766 = vmul.f32 %v3392, %v3439
        %v3767 = vmul.f32 %v3392, %v3443
        %v3768 = vmul.f32 %v3392, %v3447
        %v3769 = vmul.f32 %v3392, %v3451
        %v3770 = vmul.f32 %v3392, %v3455
        %v3771 = vmul.f32 %v3392, %v3459
        %v3772 = vmul.f32 %v3392, %v3463
        %v3773 = vmul.f32 %v3392, %v3467
        %v3774 = vmul.f32 %v3392, %v3471
        %v3775 = vmul.f32 %v3392, %v3475
        %v3776 = vmul.f32 %v3396, %v3431
        %v3777 = vmul.f32 %v3396, %v3435
        %v3778 = vmul.f32 %v3396, %v3439
        %v3779 = vmul.f32 %v3396, %v3443
        %v3780 = vmul.f32 %v3396, %v3447
        %v3781 = vmul.f32 %v3396, %v3451
        %v3782 = vmul.f32 %v3396, %v3455
        %v3783 = vmul.f32 %v3396, %v3459
        %v3784 = vmul.f32 %v3396, %v3463
        %v3785 = vmul.f32 %v3396, %v3467
        %v3786 = vmul.f32 %v3396, %v3471
        %v3787 = vmul.f32 %v3396, %v3475
        %v3788 = vmul.f32 %v3400, %v3431
        %v3789 = vmul.f32 %v3400, %v3435
        %v3790 = vmul.f32 %v3400, %v3439
        %v3791 = vmul.f32 %v3400, %v3443
        %v3792 = vmul.f32 %v3400, %v3447
        %v3793 = vmul.f32 %v3400, %v3451
        %v3794 = vmul.f32 %v3400, %v3455
        %v3795 = vmul.f32 %v3400, %v3459
        %v3796 = vmul.f32 %v3400, %v3463
        %v3797 = vmul.f32 %v3400, %v3467
        %v3798 = vmul.f32 %v3400, %v3471
        %v3799 = vmul.f32 %v3400, %v3475
        %v3800 = vmul.f32 %v3404, %v3431
        %v3801 = vmul.f32 %v3404, %v3435
        %v3802 = vmul.f32 %v3404, %v3439
        %v3803 = vmul.f32 %v3404, %v3443
        %v3804 = vmul.f32 %v3404, %v3447
        %v3805 = vmul.f32 %v3404, %v3451
        %v3806 = vmul.f32 %v3404, %v3455
        %v3807 = vmul.f32 %v3404, %v3459
        %v3808 = vmul.f32 %v3404, %v3463
        %v3809 = vmul.f32 %v3404, %v3467
        %v3810 = vmul.f32 %v3404, %v3471
        %v3811 = vmul.f32 %v3404, %v3475
        %v3812 = vmul.f32 %v3408, %v3431
        %v3813 = vmul.f32 %v3408, %v3435
        %v3814 = vmul.f32 %v3408, %v3439
        %v3815 = vmul.f32 %v3408, %v3443
        %v3816 = vmul.f32 %v3408, %v3447
        %v3817 = vmul.f32 %v3408, %v3451
        %v3818 = vmul.f32 %v3408, %v3455
        %v3819 = vmul.f32 %v3408, %v3459
        %v3820 = vmul.f32 %v3408, %v3463
        %v3821 = vmul.f32 %v3408, %v3467
        %v3822 = vmul.f32 %v3408, %v3471
        %v3823 = vmul.f32 %v3408, %v3475
        %v3824 = vmul.f32 %v3412, %v3431
        %v3825 = vmul.f32 %v3412, %v3435
        %v3826 = vmul.f32 %v3412, %v3439
        %v3827 = vmul.f32 %v3412, %v3443
        %v3828 = vmul.f32 %v3412, %v3447
        %v3829 = vmul.f32 %v3412, %v3451
        %v3830 = vmul.f32 %v3412, %v3455
        %v3831 = vmul.f32 %v3412, %v3459
        %v3832 = vmul.f32 %v3412, %v3463
        %v3833 = vmul.f32 %v3412, %v3467
        %v3834 = vmul.f32 %v3412, %v3471
        %v3835 = vmul.f32 %v3412, %v3475
        %v3836 = vmul.f32 %v3416, %v3431
        %v3837 = vmul.f32 %v3416, %v3435
        %v3838 = vmul.f32 %v3416, %v3439
        %v3839 = vmul.f32 %v3416, %v3443
        %v3840 = vmul.f32 %v3416, %v3447
        %v3841 = vmul.f32 %v3416, %v3451
        %v3842 = vmul.f32 %v3416, %v3455
        %v3843 = vmul.f32 %v3416, %v3459
        %v3844 = vmul.f32 %v3416, %v3463
        %v3845 = vmul.f32 %v3416, %v3467
        %v3846 = vmul.f32 %v3416, %v3471
        %v3847 = vmul.f32 %v3416, %v3475
        %v3848 = vmul.f32 %v3420, %v3431
        %v3849 = vmul.f32 %v3420, %v3435
        %v3850 = vmul.f32 %v3420, %v3439
        %v3851 = vmul.f32 %v3420, %v3443
        %v3852 = vmul.f32 %v3420, %v3447
        %v3853 = vmul.f32 %v3420, %v3451
        %v3854 = vmul.f32 %v3420, %v3455
        %v3855 = vmul.f32 %v3420, %v3459
        %v3856 = vmul.f32 %v3420, %v3463
        %v3857 = vmul.f32 %v3420, %v3467
        %v3858 = vmul.f32 %v3420, %v3471
        %v3859 = vmul.f32 %v3420, %v3475
        %v3860 = vmul.f32 %v3424, %v3431
        %v3861 = vmul.f32 %v3424, %v3435
        %v3862 = vmul.f32 %v3424, %v3439
        %v3863 = vmul.f32 %v3424, %v3443
        %v3864 = vmul.f32 %v3424, %v3447
        %v3865 = vmul.f32 %v3424, %v3451
        %v3866 = vmul.f32 %v3424, %v3455
        %v3867 = vmul.f32 %v3424, %v3459
        %v3868 = vmul.f32 %v3424, %v3463
        %v3869 = vmul.f32 %v3424, %v3467
        %v3870 = vmul.f32 %v3424, %v3471
        %v3871 = vmul.f32 %v3424, %v3475
        %v3872 = vadd.f32 %v2910, %v3488
        %v3873 = vadd.f32 %v2911, %v3489
        %v3874 = vadd.f32 %v2912, %v3490
        %v3875 = vadd.f32 %v2913, %v3491
        %v3876 = vadd.f32 %v2914, %v3492
        %v3877 = vadd.f32 %v2915, %v3493
        %v3878 = vadd.f32 %v2916, %v3494
        %v3879 = vadd.f32 %v2917, %v3495
        %v3880 = vadd.f32 %v2918, %v3496
        %v3881 = vadd.f32 %v2919, %v3497
        %v3882 = vadd.f32 %v2920, %v3498
        %v3883 = vadd.f32 %v2921, %v3499
        %v3884 = vadd.f32 %v2922, %v3500
        %v3885 = vadd.f32 %v2923, %v3501
        %v3886 = vadd.f32 %v2924, %v3502
        %v3887 = vadd.f32 %v2925, %v3503
        %v3888 = vadd.f32 %v2926, %v3504
        %v3889 = vadd.f32 %v2927, %v3505
        %v3890 = vadd.f32 %v2928, %v3506
        %v3891 = vadd.f32 %v2929, %v3507
        %v3892 = vadd.f32 %v2930, %v3508
        %v3893 = vadd.f32 %v2931, %v3509
        %v3894 = vadd.f32 %v2932, %v3510
        %v3895 = vadd.f32 %v2933, %v3511
        %v3896 = vadd.f32 %v2934, %v3512
        %v3897 = vadd.f32 %v2935, %v3513
        %v3898 = vadd.f32 %v2936, %v3514
        %v3899 = vadd.f32 %v2937, %v3515
        %v3900 = vadd.f32 %v2938, %v3516
        %v3901 = vadd.f32 %v2939, %v3517
        %v3902 = vadd.f32 %v2940, %v3518
        %v3903 = vadd.f32 %v2941, %v3519
        %v3904 = vadd.f32 %v2942, %v3520
        %v3905 = vadd.f32 %v2943, %v3521
        %v3906 = vadd.f32 %v2944, %v3522
        %v3907 = vadd.f32 %v2945, %v3523
        %v3908 = vadd.f32 %v2946, %v3524
        %v3909 = vadd.f32 %v2947, %v3525
        %v3910 = vadd.f32 %v2948, %v3526
        %v3911 = vadd.f32 %v2949, %v3527
        %v3912 = vadd.f32 %v2950, %v3528
        %v3913 = vadd.f32 %v2951, %v3529
        %v3914 = vadd.f32 %v2952, %v3530
        %v3915 = vadd.f32 %v2953, %v3531
        %v3916 = vadd.f32 %v2954, %v3532
        %v3917 = vadd.f32 %v2955, %v3533
        %v3918 = vadd.f32 %v2956, %v3534
        %v3919 = vadd.f32 %v2957, %v3535
        %v3920 = vadd.f32 %v2958, %v3536
        %v3921 = vadd.f32 %v2959, %v3537
        %v3922 = vadd.f32 %v2960, %v3538
        %v3923 = vadd.f32 %v2961, %v3539
        %v3924 = vadd.f32 %v2962, %v3540
        %v3925 = vadd.f32 %v2963, %v3541
        %v3926 = vadd.f32 %v2964, %v3542
        %v3927 = vadd.f32 %v2965, %v3543
        %v3928 = vadd.f32 %v2966, %v3544
        %v3929 = vadd.f32 %v2967, %v3545
        %v3930 = vadd.f32 %v2968, %v3546
        %v3931 = vadd.f32 %v2969, %v3547
        %v3932 = vadd.f32 %v2970, %v3548
        %v3933 = vadd.f32 %v2971, %v3549
        %v3934 = vadd.f32 %v2972, %v3550
        %v3935 = vadd.f32 %v2973, %v3551
        %v3936 = vadd.f32 %v2974, %v3552
        %v3937 = vadd.f32 %v2975, %v3553
        %v3938 = vadd.f32 %v2976, %v3554
        %v3939 = vadd.f32 %v2977, %v3555
        %v3940 = vadd.f32 %v2978, %v3556
        %v3941 = vadd.f32 %v2979, %v3557
        %v3942 = vadd.f32 %v2980, %v3558
        %v3943 = vadd.f32 %v2981, %v3559
        %v3944 = vadd.f32 %v2982, %v3560
        %v3945 = vadd.f32 %v2983, %v3561
        %v3946 = vadd.f32 %v2984, %v3562
        %v3947 = vadd.f32 %v2985, %v3563
        %v3948 = vadd.f32 %v2986, %v3564
        %v3949 = vadd.f32 %v2987, %v3565
        %v3950 = vadd.f32 %v2988, %v3566
        %v3951 = vadd.f32 %v2989, %v3567
        %v3952 = vadd.f32 %v2990, %v3568
        %v3953 = vadd.f32 %v2991, %v3569
        %v3954 = vadd.f32 %v2992, %v3570
        %v3955 = vadd.f32 %v2993, %v3571
        %v3956 = vadd.f32 %v2994, %v3572
        %v3957 = vadd.f32 %v2995, %v3573
        %v3958 = vadd.f32 %v2996, %v3574
        %v3959 = vadd.f32 %v2997, %v3575
        %v3960 = vadd.f32 %v2998, %v3576
        %v3961 = vadd.f32 %v2999, %v3577
        %v3962 = vadd.f32 %v3000, %v3578
        %v3963 = vadd.f32 %v3001, %v3579
        %v3964 = vadd.f32 %v3002, %v3580
        %v3965 = vadd.f32 %v3003, %v3581
        %v3966 = vadd.f32 %v3004, %v3582
        %v3967 = vadd.f32 %v3005, %v3583
        %v3968 = vadd.f32 %v3006, %v3584
        %v3969 = vadd.f32 %v3007, %v3585
        %v3970 = vadd.f32 %v3008, %v3586
        %v3971 = vadd.f32 %v3009, %v3587
        %v3972 = vadd.f32 %v3010, %v3588
        %v3973 = vadd.f32 %v3011, %v3589
        %v3974 = vadd.f32 %v3012, %v3590
        %v3975 = vadd.f32 %v3013, %v3591
        %v3976 = vadd.f32 %v3014, %v3592
        %v3977 = vadd.f32 %v3015, %v3593
        %v3978 = vadd.f32 %v3016, %v3594
        %v3979 = vadd.f32 %v3017, %v3595
        %v3980 = vadd.f32 %v3018, %v3596
        %v3981 = vadd.f32 %v3019, %v3597
        %v3982 = vadd.f32 %v3020, %v3598
        %v3983 = vadd.f32 %v3021, %v3599
        %v3984 = vadd.f32 %v3022, %v3600
        %v3985 = vadd.f32 %v3023, %v3601
        %v3986 = vadd.f32 %v3024, %v3602
        %v3987 = vadd.f32 %v3025, %v3603
        %v3988 = vadd.f32 %v3026, %v3604
        %v3989 = vadd.f32 %v3027, %v3605
        %v3990 = vadd.f32 %v3028, %v3606
        %v3991 = vadd.f32 %v3029, %v3607
        %v3992 = vadd.f32 %v3030, %v3608
        %v3993 = vadd.f32 %v3031, %v3609
        %v3994 = vadd.f32 %v3032, %v3610
        %v3995 = vadd.f32 %v3033, %v3611
        %v3996 = vadd.f32 %v3034, %v3612
        %v3997 = vadd.f32 %v3035, %v3613
        %v3998 = vadd.f32 %v3036, %v3614
        %v3999 = vadd.f32 %v3037, %v3615
        %v4000 = vadd.f32 %v3038, %v3616
        %v4001 = vadd.f32 %v3039, %v3617
        %v4002 = vadd.f32 %v3040, %v3618
        %v4003 = vadd.f32 %v3041, %v3619
        %v4004 = vadd.f32 %v3042, %v3620
        %v4005 = vadd.f32 %v3043, %v3621
        %v4006 = vadd.f32 %v3044, %v3622
        %v4007 = vadd.f32 %v3045, %v3623
        %v4008 = vadd.f32 %v3046, %v3624
        %v4009 = vadd.f32 %v3047, %v3625
        %v4010 = vadd.f32 %v3048, %v3626
        %v4011 = vadd.f32 %v3049, %v3627
        %v4012 = vadd.f32 %v3050, %v3628
        %v4013 = vadd.f32 %v3051, %v3629
        %v4014 = vadd.f32 %v3052, %v3630
        %v4015 = vadd.f32 %v3053, %v3631
        %v4016 = vadd.f32 %v3054, %v3632
        %v4017 = vadd.f32 %v3055, %v3633
        %v4018 = vadd.f32 %v3056, %v3634
        %v4019 = vadd.f32 %v3057, %v3635
        %v4020 = vadd.f32 %v3058, %v3636
        %v4021 = vadd.f32 %v3059, %v3637
        %v4022 = vadd.f32 %v3060, %v3638
        %v4023 = vadd.f32 %v3061, %v3639
        %v4024 = vadd.f32 %v3062, %v3640
        %v4025 = vadd.f32 %v3063, %v3641
        %v4026 = vadd.f32 %v3064, %v3642
        %v4027 = vadd.f32 %v3065, %v3643
        %v4028 = vadd.f32 %v3066, %v3644
        %v4029 = vadd.f32 %v3067, %v3645
        %v4030 = vadd.f32 %v3068, %v3646
        %v4031 = vadd.f32 %v3069, %v3647
        %v4032 = vadd.f32 %v3070, %v3648
        %v4033 = vadd.f32 %v3071, %v3649
        %v4034 = vadd.f32 %v3072, %v3650
        %v4035 = vadd.f32 %v3073, %v3651
        %v4036 = vadd.f32 %v3074, %v3652
        %v4037 = vadd.f32 %v3075, %v3653
        %v4038 = vadd.f32 %v3076, %v3654
        %v4039 = vadd.f32 %v3077, %v3655
        %v4040 = vadd.f32 %v3078, %v3656
        %v4041 = vadd.f32 %v3079, %v3657
        %v4042 = vadd.f32 %v3080, %v3658
        %v4043 = vadd.f32 %v3081, %v3659
        %v4044 = vadd.f32 %v3082, %v3660
        %v4045 = vadd.f32 %v3083, %v3661
        %v4046 = vadd.f32 %v3084, %v3662
        %v4047 = vadd.f32 %v3085, %v3663
        %v4048 = vadd.f32 %v3086, %v3664
        %v4049 = vadd.f32 %v3087, %v3665
        %v4050 = vadd.f32 %v3088, %v3666
        %v4051 = vadd.f32 %v3089, %v3667
        %v4052 = vadd.f32 %v3090, %v3668
        %v4053 = vadd.f32 %v3091, %v3669
        %v4054 = vadd.f32 %v3092, %v3670
        %v4055 = vadd.f32 %v3093, %v3671
        %v4056 = vadd.f32 %v3094, %v3672
        %v4057 = vadd.f32 %v3095, %v3673
        %v4058 = vadd.f32 %v3096, %v3674
        %v4059 = vadd.f32 %v3097, %v3675
        %v4060 = vadd.f32 %v3098, %v3676
        %v4061 = vadd.f32 %v3099, %v3677
        %v4062 = vadd.f32 %v3100, %v3678
        %v4063 = vadd.f32 %v3101, %v3679
        %v4064 = vadd.f32 %v3102, %v3680
        %v4065 = vadd.f32 %v3103, %v3681
        %v4066 = vadd.f32 %v3104, %v3682
        %v4067 = vadd.f32 %v3105, %v3683
        %v4068 = vadd.f32 %v3106, %v3684
        %v4069 = vadd.f32 %v3107, %v3685
        %v4070 = vadd.f32 %v3108, %v3686
        %v4071 = vadd.f32 %v3109, %v3687
        %v4072 = vadd.f32 %v3110, %v3688
        %v4073 = vadd.f32 %v3111, %v3689
        %v4074 = vadd.f32 %v3112, %v3690
        %v4075 = vadd.f32 %v3113, %v3691
        %v4076 = vadd.f32 %v3114, %v3692
        %v4077 = vadd.f32 %v3115, %v3693
        %v4078 = vadd.f32 %v3116, %v3694
        %v4079 = vadd.f32 %v3117, %v3695
        %v4080 = vadd.f32 %v3118, %v3696
        %v4081 = vadd.f32 %v3119, %v3697
        %v4082 = vadd.f32 %v3120, %v3698
        %v4083 = vadd.f32 %v3121, %v3699
        %v4084 = vadd.f32 %v3122, %v3700
        %v4085 = vadd.f32 %v3123, %v3701
        %v4086 = vadd.f32 %v3124, %v3702
        %v4087 = vadd.f32 %v3125, %v3703
        %v4088 = vadd.f32 %v3126, %v3704
        %v4089 = vadd.f32 %v3127, %v3705
        %v4090 = vadd.f32 %v3128, %v3706
        %v4091 = vadd.f32 %v3129, %v3707
        %v4092 = vadd.f32 %v3130, %v3708
        %v4093 = vadd.f32 %v3131, %v3709
        %v4094 = vadd.f32 %v3132, %v3710
        %v4095 = vadd.f32 %v3133, %v3711
        %v4096 = vadd.f32 %v3134, %v3712
        %v4097 = vadd.f32 %v3135, %v3713
        %v4098 = vadd.f32 %v3136, %v3714
        %v4099 = vadd.f32 %v3137, %v3715
        %v4100 = vadd.f32 %v3138, %v3716
        %v4101 = vadd.f32 %v3139, %v3717
        %v4102 = vadd.f32 %v3140, %v3718
        %v4103 = vadd.f32 %v3141, %v3719
        %v4104 = vadd.f32 %v3142, %v3720
        %v4105 = vadd.f32 %v3143, %v3721
        %v4106 = vadd.f32 %v3144, %v3722
        %v4107 = vadd.f32 %v3145, %v3723
        %v4108 = vadd.f32 %v3146, %v3724
        %v4109 = vadd.f32 %v3147, %v3725
        %v4110 = vadd.f32 %v3148, %v3726
        %v4111 = vadd.f32 %v3149, %v3727
        %v4112 = vadd.f32 %v3150, %v3728
        %v4113 = vadd.f32 %v3151, %v3729
        %v4114 = vadd.f32 %v3152, %v3730
        %v4115 = vadd.f32 %v3153, %v3731
        %v4116 = vadd.f32 %v3154, %v3732
        %v4117 = vadd.f32 %v3155, %v3733
        %v4118 = vadd.f32 %v3156, %v3734
        %v4119 = vadd.f32 %v3157, %v3735
        %v4120 = vadd.f32 %v3158, %v3736
        %v4121 = vadd.f32 %v3159, %v3737
        %v4122 = vadd.f32 %v3160, %v3738
        %v4123 = vadd.f32 %v3161, %v3739
        %v4124 = vadd.f32 %v3162, %v3740
        %v4125 = vadd.f32 %v3163, %v3741
        %v4126 = vadd.f32 %v3164, %v3742
        %v4127 = vadd.f32 %v3165, %v3743
        %v4128 = vadd.f32 %v3166, %v3744
        %v4129 = vadd.f32 %v3167, %v3745
        %v4130 = vadd.f32 %v3168, %v3746
        %v4131 = vadd.f32 %v3169, %v3747
        %v4132 = vadd.f32 %v3170, %v3748
        %v4133 = vadd.f32 %v3171, %v3749
        %v4134 = vadd.f32 %v3172, %v3750
        %v4135 = vadd.f32 %v3173, %v3751
        %v4136 = vadd.f32 %v3174, %v3752
        %v4137 = vadd.f32 %v3175, %v3753
        %v4138 = vadd.f32 %v3176, %v3754
        %v4139 = vadd.f32 %v3177, %v3755
        %v4140 = vadd.f32 %v3178, %v3756
        %v4141 = vadd.f32 %v3179, %v3757
        %v4142 = vadd.f32 %v3180, %v3758
        %v4143 = vadd.f32 %v3181, %v3759
        %v4144 = vadd.f32 %v3182, %v3760
        %v4145 = vadd.f32 %v3183, %v3761
        %v4146 = vadd.f32 %v3184, %v3762
        %v4147 = vadd.f32 %v3185, %v3763
        %v4148 = vadd.f32 %v3186, %v3764
        %v4149 = vadd.f32 %v3187, %v3765
        %v4150 = vadd.f32 %v3188, %v3766
        %v4151 = vadd.f32 %v3189, %v3767
        %v4152 = vadd.f32 %v3190, %v3768
        %v4153 = vadd.f32 %v3191, %v3769
        %v4154 = vadd.f32 %v3192, %v3770
        %v4155 = vadd.f32 %v3193, %v3771
        %v4156 = vadd.f32 %v3194, %v3772
        %v4157 = vadd.f32 %v3195, %v3773
        %v4158 = vadd.f32 %v3196, %v3774
        %v4159 = vadd.f32 %v3197, %v3775
        %v4160 = vadd.f32 %v3198, %v3776
        %v4161 = vadd.f32 %v3199, %v3777
        %v4162 = vadd.f32 %v3200, %v3778
        %v4163 = vadd.f32 %v3201, %v3779
        %v4164 = vadd.f32 %v3202, %v3780
        %v4165 = vadd.f32 %v3203, %v3781
        %v4166 = vadd.f32 %v3204, %v3782
        %v4167 = vadd.f32 %v3205, %v3783
        %v4168 = vadd.f32 %v3206, %v3784
        %v4169 = vadd.f32 %v3207, %v3785
        %v4170 = vadd.f32 %v3208, %v3786
        %v4171 = vadd.f32 %v3209, %v3787
        %v4172 = vadd.f32 %v3210, %v3788
        %v4173 = vadd.f32 %v3211, %v3789
        %v4174 = vadd.f32 %v3212, %v3790
        %v4175 = vadd.f32 %v3213, %v3791
        %v4176 = vadd.f32 %v3214, %v3792
        %v4177 = vadd.f32 %v3215, %v3793
        %v4178 = vadd.f32 %v3216, %v3794
        %v4179 = vadd.f32 %v3217, %v3795
        %v4180 = vadd.f32 %v3218, %v3796
        %v4181 = vadd.f32 %v3219, %v3797
        %v4182 = vadd.f32 %v3220, %v3798
        %v4183 = vadd.f32 %v3221, %v3799
        %v4184 = vadd.f32 %v3222, %v3800
        %v4185 = vadd.f32 %v3223, %v3801
        %v4186 = vadd.f32 %v3224, %v3802
        %v4187 = vadd.f32 %v3225, %v3803
        %v4188 = vadd.f32 %v3226, %v3804
        %v4189 = vadd.f32 %v3227, %v3805
        %v4190 = vadd.f32 %v3228, %v3806
        %v4191 = vadd.f32 %v3229, %v3807
        %v4192 = vadd.f32 %v3230, %v3808
        %v4193 = vadd.f32 %v3231, %v3809
        %v4194 = vadd.f32 %v3232, %v3810
        %v4195 = vadd.f32 %v3233, %v3811
        %v4196 = vadd.f32 %v3234, %v3812
        %v4197 = vadd.f32 %v3235, %v3813
        %v4198 = vadd.f32 %v3236, %v3814
        %v4199 = vadd.f32 %v3237, %v3815
        %v4200 = vadd.f32 %v3238, %v3816
        %v4201 = vadd.f32 %v3239, %v3817
        %v4202 = vadd.f32 %v3240, %v3818
        %v4203 = vadd.f32 %v3241, %v3819
        %v4204 = vadd.f32 %v3242, %v3820
        %v4205 = vadd.f32 %v3243, %v3821
        %v4206 = vadd.f32 %v3244, %v3822
        %v4207 = vadd.f32 %v3245, %v3823
        %v4208 = vadd.f32 %v3246, %v3824
        %v4209 = vadd.f32 %v3247, %v3825
        %v4210 = vadd.f32 %v3248, %v3826
        %v4211 = vadd.f32 %v3249, %v3827
        %v4212 = vadd.f32 %v3250, %v3828
        %v4213 = vadd.f32 %v3251, %v3829
        %v4214 = vadd.f32 %v3252, %v3830
        %v4215 = vadd.f32 %v3253, %v3831
        %v4216 = vadd.f32 %v3254, %v3832
        %v4217 = vadd.f32 %v3255, %v3833
        %v4218 = vadd.f32 %v3256, %v3834
        %v4219 = vadd.f32 %v3257, %v3835
        %v4220 = vadd.f32 %v3258, %v3836
        %v4221 = vadd.f32 %v3259, %v3837
        %v4222 = vadd.f32 %v3260, %v3838
        %v4223 = vadd.f32 %v3261, %v3839
        %v4224 = vadd.f32 %v3262, %v3840
        %v4225 = vadd.f32 %v3263, %v3841
        %v4226 = vadd.f32 %v3264, %v3842
        %v4227 = vadd.f32 %v3265, %v3843
        %v4228 = vadd.f32 %v3266, %v3844
        %v4229 = vadd.f32 %v3267, %v3845
        %v4230 = vadd.f32 %v3268, %v3846
        %v4231 = vadd.f32 %v3269, %v3847
        %v4232 = vadd.f32 %v3270, %v3848
        %v4233 = vadd.f32 %v3271, %v3849
        %v4234 = vadd.f32 %v3272, %v3850
        %v4235 = vadd.f32 %v3273, %v3851
        %v4236 = vadd.f32 %v3274, %v3852
        %v4237 = vadd.f32 %v3275, %v3853
        %v4238 = vadd.f32 %v3276, %v3854
        %v4239 = vadd.f32 %v3277, %v3855
        %v4240 = vadd.f32 %v3278, %v3856
        %v4241 = vadd.f32 %v3279, %v3857
        %v4242 = vadd.f32 %v3280, %v3858
        %v4243 = vadd.f32 %v3281, %v3859
        %v4244 = vadd.f32 %v3282, %v3860
        %v4245 = vadd.f32 %v3283, %v3861
        %v4246 = vadd.f32 %v3284, %v3862
        %v4247 = vadd.f32 %v3285, %v3863
        %v4248 = vadd.f32 %v3286, %v3864
        %v4249 = vadd.f32 %v3287, %v3865
        %v4250 = vadd.f32 %v3288, %v3866
        %v4251 = vadd.f32 %v3289, %v3867
        %v4252 = vadd.f32 %v3290, %v3868
        %v4253 = vadd.f32 %v3291, %v3869
        %v4254 = vadd.f32 %v3292, %v3870
        %v4255 = vadd.f32 %v3293, %v3871
        %v4256 = vmax.f32 %v3872, 0.0
        %v4257 = vmax.f32 %v3873, 0.0
        %v4258 = vmax.f32 %v3874, 0.0
        %v4259 = vmax.f32 %v3875, 0.0
        %v4260 = vmax.f32 %v3876, 0.0
        %v4261 = vmax.f32 %v3877, 0.0
        %v4262 = vmax.f32 %v3878, 0.0
        %v4263 = vmax.f32 %v3879, 0.0
        %v4264 = vmax.f32 %v3880, 0.0
        %v4265 = vmax.f32 %v3881, 0.0
        %v4266 = vmax.f32 %v3882, 0.0
        %v4267 = vmax.f32 %v3883, 0.0
        %v4268 = vmax.f32 %v3884, 0.0
        %v4269 = vmax.f32 %v3885, 0.0
        %v4270 = vmax.f32 %v3886, 0.0
        %v4271 = vmax.f32 %v3887, 0.0
        %v4272 = vmax.f32 %v3888, 0.0
        %v4273 = vmax.f32 %v3889, 0.0
        %v4274 = vmax.f32 %v3890, 0.0
        %v4275 = vmax.f32 %v3891, 0.0
        %v4276 = vmax.f32 %v3892, 0.0
        %v4277 = vmax.f32 %v3893, 0.0
        %v4278 = vmax.f32 %v3894, 0.0
        %v4279 = vmax.f32 %v3895, 0.0
        %v4280 = vmax.f32 %v3896, 0.0
        %v4281 = vmax.f32 %v3897, 0.0
        %v4282 = vmax.f32 %v3898, 0.0
        %v4283 = vmax.f32 %v3899, 0.0
        %v4284 = vmax.f32 %v3900, 0.0
        %v4285 = vmax.f32 %v3901, 0.0
        %v4286 = vmax.f32 %v3902, 0.0
        %v4287 = vmax.f32 %v3903, 0.0
        %v4288 = vmax.f32 %v3904, 0.0
        %v4289 = vmax.f32 %v3905, 0.0
        %v4290 = vmax.f32 %v3906, 0.0
        %v4291 = vmax.f32 %v3907, 0.0
        %v4292 = vmax.f32 %v3908, 0.0
        %v4293 = vmax.f32 %v3909, 0.0
        %v4294 = vmax.f32 %v3910, 0.0
        %v4295 = vmax.f32 %v3911, 0.0
        %v4296 = vmax.f32 %v3912, 0.0
        %v4297 = vmax.f32 %v3913, 0.0
        %v4298 = vmax.f32 %v3914, 0.0
        %v4299 = vmax.f32 %v3915, 0.0
        %v4300 = vmax.f32 %v3916, 0.0
        %v4301 = vmax.f32 %v3917, 0.0
        %v4302 = vmax.f32 %v3918, 0.0
        %v4303 = vmax.f32 %v3919, 0.0
        %v4304 = vmax.f32 %v3920, 0.0
        %v4305 = vmax.f32 %v3921, 0.0
        %v4306 = vmax.f32 %v3922, 0.0
        %v4307 = vmax.f32 %v3923, 0.0
        %v4308 = vmax.f32 %v3924, 0.0
        %v4309 = vmax.f32 %v3925, 0.0
        %v4310 = vmax.f32 %v3926, 0.0
        %v4311 = vmax.f32 %v3927, 0.0
        %v4312 = vmax.f32 %v3928, 0.0
        %v4313 = vmax.f32 %v3929, 0.0
        %v4314 = vmax.f32 %v3930, 0.0
        %v4315 = vmax.f32 %v3931, 0.0
        %v4316 = vmax.f32 %v3932, 0.0
        %v4317 = vmax.f32 %v3933, 0.0
        %v4318 = vmax.f32 %v3934, 0.0
        %v4319 = vmax.f32 %v3935, 0.0
        %v4320 = vmax.f32 %v3936, 0.0
        %v4321 = vmax.f32 %v3937, 0.0
        %v4322 = vmax.f32 %v3938, 0.0
        %v4323 = vmax.f32 %v3939, 0.0
        %v4324 = vmax.f32 %v3940, 0.0
        %v4325 = vmax.f32 %v3941, 0.0
        %v4326 = vmax.f32 %v3942, 0.0
        %v4327 = vmax.f32 %v3943, 0.0
        %v4328 = vmax.f32 %v3944, 0.0
        %v4329 = vmax.f32 %v3945, 0.0
        %v4330 = vmax.f32 %v3946, 0.0
        %v4331 = vmax.f32 %v3947, 0.0
        %v4332 = vmax.f32 %v3948, 0.0
        %v4333 = vmax.f32 %v3949, 0.0
        %v4334 = vmax.f32 %v3950, 0.0
        %v4335 = vmax.f32 %v3951, 0.0
        %v4336 = vmax.f32 %v3952, 0.0
        %v4337 = vmax.f32 %v3953, 0.0
        %v4338 = vmax.f32 %v3954, 0.0
        %v4339 = vmax.f32 %v3955, 0.0
        %v4340 = vmax.f32 %v3956, 0.0
        %v4341 = vmax.f32 %v3957, 0.0
        %v4342 = vmax.f32 %v3958, 0.0
        %v4343 = vmax.f32 %v3959, 0.0
        %v4344 = vmax.f32 %v3960, 0.0
        %v4345 = vmax.f32 %v3961, 0.0
        %v4346 = vmax.f32 %v3962, 0.0
        %v4347 = vmax.f32 %v3963, 0.0
        %v4348 = vmax.f32 %v3964, 0.0
        %v4349 = vmax.f32 %v3965, 0.0
        %v4350 = vmax.f32 %v3966, 0.0
        %v4351 = vmax.f32 %v3967, 0.0
        %v4352 = vmax.f32 %v3968, 0.0
        %v4353 = vmax.f32 %v3969, 0.0
        %v4354 = vmax.f32 %v3970, 0.0
        %v4355 = vmax.f32 %v3971, 0.0
        %v4356 = vmax.f32 %v3972, 0.0
        %v4357 = vmax.f32 %v3973, 0.0
        %v4358 = vmax.f32 %v3974, 0.0
        %v4359 = vmax.f32 %v3975, 0.0
        %v4360 = vmax.f32 %v3976, 0.0
        %v4361 = vmax.f32 %v3977, 0.0
        %v4362 = vmax.f32 %v3978, 0.0
        %v4363 = vmax.f32 %v3979, 0.0
        %v4364 = vmax.f32 %v3980, 0.0
        %v4365 = vmax.f32 %v3981, 0.0
        %v4366 = vmax.f32 %v3982, 0.0
        %v4367 = vmax.f32 %v3983, 0.0
        %v4368 = vmax.f32 %v3984, 0.0
        %v4369 = vmax.f32 %v3985, 0.0
        %v4370 = vmax.f32 %v3986, 0.0
        %v4371 = vmax.f32 %v3987, 0.0
        %v4372 = vmax.f32 %v3988, 0.0
        %v4373 = vmax.f32 %v3989, 0.0
        %v4374 = vmax.f32 %v3990, 0.0
        %v4375 = vmax.f32 %v3991, 0.0
        %v4376 = vmax.f32 %v3992, 0.0
        %v4377 = vmax.f32 %v3993, 0.0
        %v4378 = vmax.f32 %v3994, 0.0
        %v4379 = vmax.f32 %v3995, 0.0
        %v4380 = vmax.f32 %v3996, 0.0
        %v4381 = vmax.f32 %v3997, 0.0
        %v4382 = vmax.f32 %v3998, 0.0
        %v4383 = vmax.f32 %v3999, 0.0
        %v4384 = vmax.f32 %v4000, 0.0
        %v4385 = vmax.f32 %v4001, 0.0
        %v4386 = vmax.f32 %v4002, 0.0
        %v4387 = vmax.f32 %v4003, 0.0
        %v4388 = vmax.f32 %v4004, 0.0
        %v4389 = vmax.f32 %v4005, 0.0
        %v4390 = vmax.f32 %v4006, 0.0
        %v4391 = vmax.f32 %v4007, 0.0
        %v4392 = vmax.f32 %v4008, 0.0
        %v4393 = vmax.f32 %v4009, 0.0
        %v4394 = vmax.f32 %v4010, 0.0
        %v4395 = vmax.f32 %v4011, 0.0
        %v4396 = vmax.f32 %v4012, 0.0
        %v4397 = vmax.f32 %v4013, 0.0
        %v4398 = vmax.f32 %v4014, 0.0
        %v4399 = vmax.f32 %v4015, 0.0
        %v4400 = vmax.f32 %v4016, 0.0
        %v4401 = vmax.f32 %v4017, 0.0
        %v4402 = vmax.f32 %v4018, 0.0
        %v4403 = vmax.f32 %v4019, 0.0
        %v4404 = vmax.f32 %v4020, 0.0
        %v4405 = vmax.f32 %v4021, 0.0
        %v4406 = vmax.f32 %v4022, 0.0
        %v4407 = vmax.f32 %v4023, 0.0
        %v4408 = vmax.f32 %v4024, 0.0
        %v4409 = vmax.f32 %v4025, 0.0
        %v4410 = vmax.f32 %v4026, 0.0
        %v4411 = vmax.f32 %v4027, 0.0
        %v4412 = vmax.f32 %v4028, 0.0
        %v4413 = vmax.f32 %v4029, 0.0
        %v4414 = vmax.f32 %v4030, 0.0
        %v4415 = vmax.f32 %v4031, 0.0
        %v4416 = vmax.f32 %v4032, 0.0
        %v4417 = vmax.f32 %v4033, 0.0
        %v4418 = vmax.f32 %v4034, 0.0
        %v4419 = vmax.f32 %v4035, 0.0
        %v4420 = vmax.f32 %v4036, 0.0
        %v4421 = vmax.f32 %v4037, 0.0
        %v4422 = vmax.f32 %v4038, 0.0
        %v4423 = vmax.f32 %v4039, 0.0
        %v4424 = vmax.f32 %v4040, 0.0
        %v4425 = vmax.f32 %v4041, 0.0
        %v4426 = vmax.f32 %v4042, 0.0
        %v4427 = vmax.f32 %v4043, 0.0
        %v4428 = vmax.f32 %v4044, 0.0
        %v4429 = vmax.f32 %v4045, 0.0
        %v4430 = vmax.f32 %v4046, 0.0
        %v4431 = vmax.f32 %v4047, 0.0
        %v4432 = vmax.f32 %v4048, 0.0
        %v4433 = vmax.f32 %v4049, 0.0
        %v4434 = vmax.f32 %v4050, 0.0
        %v4435 = vmax.f32 %v4051, 0.0
        %v4436 = vmax.f32 %v4052, 0.0
        %v4437 = vmax.f32 %v4053, 0.0
        %v4438 = vmax.f32 %v4054, 0.0
        %v4439 = vmax.f32 %v4055, 0.0
        %v4440 = vmax.f32 %v4056, 0.0
        %v4441 = vmax.f32 %v4057, 0.0
        %v4442 = vmax.f32 %v4058, 0.0
        %v4443 = vmax.f32 %v4059, 0.0
        %v4444 = vmax.f32 %v4060, 0.0
        %v4445 = vmax.f32 %v4061, 0.0
        %v4446 = vmax.f32 %v4062, 0.0
        %v4447 = vmax.f32 %v4063, 0.0
        %v4448 = vmax.f32 %v4064, 0.0
        %v4449 = vmax.f32 %v4065, 0.0
        %v4450 = vmax.f32 %v4066, 0.0
        %v4451 = vmax.f32 %v4067, 0.0
        %v4452 = vmax.f32 %v4068, 0.0
        %v4453 = vmax.f32 %v4069, 0.0
        %v4454 = vmax.f32 %v4070, 0.0
        %v4455 = vmax.f32 %v4071, 0.0
        %v4456 = vmax.f32 %v4072, 0.0
        %v4457 = vmax.f32 %v4073, 0.0
        %v4458 = vmax.f32 %v4074, 0.0
        %v4459 = vmax.f32 %v4075, 0.0
        %v4460 = vmax.f32 %v4076, 0.0
        %v4461 = vmax.f32 %v4077, 0.0
        %v4462 = vmax.f32 %v4078, 0.0
        %v4463 = vmax.f32 %v4079, 0.0
        %v4464 = vmax.f32 %v4080, 0.0
        %v4465 = vmax.f32 %v4081, 0.0
        %v4466 = vmax.f32 %v4082, 0.0
        %v4467 = vmax.f32 %v4083, 0.0
        %v4468 = vmax.f32 %v4084, 0.0
        %v4469 = vmax.f32 %v4085, 0.0
        %v4470 = vmax.f32 %v4086, 0.0
        %v4471 = vmax.f32 %v4087, 0.0
        %v4472 = vmax.f32 %v4088, 0.0
        %v4473 = vmax.f32 %v4089, 0.0
        %v4474 = vmax.f32 %v4090, 0.0
        %v4475 = vmax.f32 %v4091, 0.0
        %v4476 = vmax.f32 %v4092, 0.0
        %v4477 = vmax.f32 %v4093, 0.0
        %v4478 = vmax.f32 %v4094, 0.0
        %v4479 = vmax.f32 %v4095, 0.0
        %v4480 = vmax.f32 %v4096, 0.0
        %v4481 = vmax.f32 %v4097, 0.0
        %v4482 = vmax.f32 %v4098, 0.0
        %v4483 = vmax.f32 %v4099, 0.0
        %v4484 = vmax.f32 %v4100, 0.0
        %v4485 = vmax.f32 %v4101, 0.0
        %v4486 = vmax.f32 %v4102, 0.0
        %v4487 = vmax.f32 %v4103, 0.0
        %v4488 = vmax.f32 %v4104, 0.0
        %v4489 = vmax.f32 %v4105, 0.0
        %v4490 = vmax.f32 %v4106, 0.0
        %v4491 = vmax.f32 %v4107, 0.0
        %v4492 = vmax.f32 %v4108, 0.0
        %v4493 = vmax.f32 %v4109, 0.0
        %v4494 = vmax.f32 %v4110, 0.0
        %v4495 = vmax.f32 %v4111, 0.0
        %v4496 = vmax.f32 %v4112, 0.0
        %v4497 = vmax.f32 %v4113, 0.0
        %v4498 = vmax.f32 %v4114, 0.0
        %v4499 = vmax.f32 %v4115, 0.0
        %v4500 = vmax.f32 %v4116, 0.0
        %v4501 = vmax.f32 %v4117, 0.0
        %v4502 = vmax.f32 %v4118, 0.0
        %v4503 = vmax.f32 %v4119, 0.0
        %v4504 = vmax.f32 %v4120, 0.0
        %v4505 = vmax.f32 %v4121, 0.0
        %v4506 = vmax.f32 %v4122, 0.0
        %v4507 = vmax.f32 %v4123, 0.0
        %v4508 = vmax.f32 %v4124, 0.0
        %v4509 = vmax.f32 %v4125, 0.0
        %v4510 = vmax.f32 %v4126, 0.0
        %v4511 = vmax.f32 %v4127, 0.0
        %v4512 = vmax.f32 %v4128, 0.0
        %v4513 = vmax.f32 %v4129, 0.0
        %v4514 = vmax.f32 %v4130, 0.0
        %v4515 = vmax.f32 %v4131, 0.0
        %v4516 = vmax.f32 %v4132, 0.0
        %v4517 = vmax.f32 %v4133, 0.0
        %v4518 = vmax.f32 %v4134, 0.0
        %v4519 = vmax.f32 %v4135, 0.0
        %v4520 = vmax.f32 %v4136, 0.0
        %v4521 = vmax.f32 %v4137, 0.0
        %v4522 = vmax.f32 %v4138, 0.0
        %v4523 = vmax.f32 %v4139, 0.0
        %v4524 = vmax.f32 %v4140, 0.0
        %v4525 = vmax.f32 %v4141, 0.0
        %v4526 = vmax.f32 %v4142, 0.0
        %v4527 = vmax.f32 %v4143, 0.0
        %v4528 = vmax.f32 %v4144, 0.0
        %v4529 = vmax.f32 %v4145, 0.0
        %v4530 = vmax.f32 %v4146, 0.0
        %v4531 = vmax.f32 %v4147, 0.0
        %v4532 = vmax.f32 %v4148, 0.0
        %v4533 = vmax.f32 %v4149, 0.0
        %v4534 = vmax.f32 %v4150, 0.0
        %v4535 = vmax.f32 %v4151, 0.0
        %v4536 = vmax.f32 %v4152, 0.0
        %v4537 = vmax.f32 %v4153, 0.0
        %v4538 = vmax.f32 %v4154, 0.0
        %v4539 = vmax.f32 %v4155, 0.0
        %v4540 = vmax.f32 %v4156, 0.0
        %v4541 = vmax.f32 %v4157, 0.0
        %v4542 = vmax.f32 %v4158, 0.0
        %v4543 = vmax.f32 %v4159, 0.0
        %v4544 = vmax.f32 %v4160, 0.0
        %v4545 = vmax.f32 %v4161, 0.0
        %v4546 = vmax.f32 %v4162, 0.0
        %v4547 = vmax.f32 %v4163, 0.0
        %v4548 = vmax.f32 %v4164, 0.0
        %v4549 = vmax.f32 %v4165, 0.0
        %v4550 = vmax.f32 %v4166, 0.0
        %v4551 = vmax.f32 %v4167, 0.0
        %v4552 = vmax.f32 %v4168, 0.0
        %v4553 = vmax.f32 %v4169, 0.0
        %v4554 = vmax.f32 %v4170, 0.0
        %v4555 = vmax.f32 %v4171, 0.0
        %v4556 = vmax.f32 %v4172, 0.0
        %v4557 = vmax.f32 %v4173, 0.0
        %v4558 = vmax.f32 %v4174, 0.0
        %v4559 = vmax.f32 %v4175, 0.0
        %v4560 = vmax.f32 %v4176, 0.0
        %v4561 = vmax.f32 %v4177, 0.0
        %v4562 = vmax.f32 %v4178, 0.0
        %v4563 = vmax.f32 %v4179, 0.0
        %v4564 = vmax.f32 %v4180, 0.0
        %v4565 = vmax.f32 %v4181, 0.0
        %v4566 = vmax.f32 %v4182, 0.0
        %v4567 = vmax.f32 %v4183, 0.0
        %v4568 = vmax.f32 %v4184, 0.0
        %v4569 = vmax.f32 %v4185, 0.0
        %v4570 = vmax.f32 %v4186, 0.0
        %v4571 = vmax.f32 %v4187, 0.0
        %v4572 = vmax.f32 %v4188, 0.0
        %v4573 = vmax.f32 %v4189, 0.0
        %v4574 = vmax.f32 %v4190, 0.0
        %v4575 = vmax.f32 %v4191, 0.0
        %v4576 = vmax.f32 %v4192, 0.0
        %v4577 = vmax.f32 %v4193, 0.0
        %v4578 = vmax.f32 %v4194, 0.0
        %v4579 = vmax.f32 %v4195, 0.0
        %v4580 = vmax.f32 %v4196, 0.0
        %v4581 = vmax.f32 %v4197, 0.0
        %v4582 = vmax.f32 %v4198, 0.0
        %v4583 = vmax.f32 %v4199, 0.0
        %v4584 = vmax.f32 %v4200, 0.0
        %v4585 = vmax.f32 %v4201, 0.0
        %v4586 = vmax.f32 %v4202, 0.0
        %v4587 = vmax.f32 %v4203, 0.0
        %v4588 = vmax.f32 %v4204, 0.0
        %v4589 = vmax.f32 %v4205, 0.0
        %v4590 = vmax.f32 %v4206, 0.0
        %v4591 = vmax.f32 %v4207, 0.0
        %v4592 = vmax.f32 %v4208, 0.0
        %v4593 = vmax.f32 %v4209, 0.0
        %v4594 = vmax.f32 %v4210, 0.0
        %v4595 = vmax.f32 %v4211, 0.0
        %v4596 = vmax.f32 %v4212, 0.0
        %v4597 = vmax.f32 %v4213, 0.0
        %v4598 = vmax.f32 %v4214, 0.0
        %v4599 = vmax.f32 %v4215, 0.0
        %v4600 = vmax.f32 %v4216, 0.0
        %v4601 = vmax.f32 %v4217, 0.0
        %v4602 = vmax.f32 %v4218, 0.0
        %v4603 = vmax.f32 %v4219, 0.0
        %v4604 = vmax.f32 %v4220, 0.0
        %v4605 = vmax.f32 %v4221, 0.0
        %v4606 = vmax.f32 %v4222, 0.0
        %v4607 = vmax.f32 %v4223, 0.0
        %v4608 = vmax.f32 %v4224, 0.0
        %v4609 = vmax.f32 %v4225, 0.0
        %v4610 = vmax.f32 %v4226, 0.0
        %v4611 = vmax.f32 %v4227, 0.0
        %v4612 = vmax.f32 %v4228, 0.0
        %v4613 = vmax.f32 %v4229, 0.0
        %v4614 = vmax.f32 %v4230, 0.0
        %v4615 = vmax.f32 %v4231, 0.0
        %v4616 = vmax.f32 %v4232, 0.0
        %v4617 = vmax.f32 %v4233, 0.0
        %v4618 = vmax.f32 %v4234, 0.0
        %v4619 = vmax.f32 %v4235, 0.0
        %v4620 = vmax.f32 %v4236, 0.0
        %v4621 = vmax.f32 %v4237, 0.0
        %v4622 = vmax.f32 %v4238, 0.0
        %v4623 = vmax.f32 %v4239, 0.0
        %v4624 = vmax.f32 %v4240, 0.0
        %v4625 = vmax.f32 %v4241, 0.0
        %v4626 = vmax.f32 %v4242, 0.0
        %v4627 = vmax.f32 %v4243, 0.0
        %v4628 = vmax.f32 %v4244, 0.0
        %v4629 = vmax.f32 %v4245, 0.0
        %v4630 = vmax.f32 %v4246, 0.0
        %v4631 = vmax.f32 %v4247, 0.0
        %v4632 = vmax.f32 %v4248, 0.0
        %v4633 = vmax.f32 %v4249, 0.0
        %v4634 = vmax.f32 %v4250, 0.0
        %v4635 = vmax.f32 %v4251, 0.0
        %v4636 = vmax.f32 %v4252, 0.0
        %v4637 = vmax.f32 %v4253, 0.0
        %v4638 = vmax.f32 %v4254, 0.0
        %v4639 = vmax.f32 %v4255, 0.0
        %v4640 = vld [vmem:[#allocation2] sm:$0xff]
        %v4641 = vld [vmem:[#allocation2 + $0x8] sm:$0xff]
        %v4642 = vld [vmem:[#allocation2 + $0x10] sm:$0xff]
        %v4643 = vld [vmem:[#allocation2 + $0x18] sm:$0xff]
        %v4644 = vld [vmem:[#allocation2 + $0x20] sm:$0xff]
        %v4645 = vld [vmem:[#allocation2 + $0x28] sm:$0xff]
        %v4646 = vld [vmem:[#allocation2 + $0x30] sm:$0xff]
        %v4647 = vld [vmem:[#allocation2 + $0x38] sm:$0xff]
        %v4648 = vld [vmem:[#allocation2 + $0x40] sm:$0xff]
        %v4649 = vld [vmem:[#allocation2 + $0x48] sm:$0xff]
        %v4650 = vld [vmem:[#allocation2 + $0x50] sm:$0xff]
        %v4651 = vld [vmem:[#allocation2 + $0x58] sm:$0xff]
        %v4652 = vadd.f32 %v4256, %v4268
        %v4653 = vadd.f32 %v4652, %v4280
        %v4654 = vadd.f32 %v4653, %v4292
        %v4655 = vadd.f32 %v4654, %v4304
        %v4656 = vadd.f32 %v4655, %v4316
        %v4657 = vadd.f32 %v4656, %v4328
        %v4658 = vadd.f32 %v4657, %v4340
        %v4659 = vadd.f32 %v4658, %v4352
        %v4660 = vadd.f32 %v4659, %v4364
        %v4661 = vadd.f32 %v4660, %v4376
        %v4662 = vadd.f32 %v4661, %v4388
        %v4663 = vadd.f32 %v4662, %v4400
        %v4664 = vadd.f32 %v4663, %v4412
        %v4665 = vadd.f32 %v4664, %v4424
        %v4666 = vadd.f32 %v4665, %v4436
        %v4667 = vadd.f32 %v4666, %v4448
        %v4668 = vadd.f32 %v4667, %v4460
        %v4669 = vadd.f32 %v4668, %v4472
        %v4670 = vadd.f32 %v4669, %v4484
        %v4671 = vadd.f32 %v4670, %v4496
        %v4672 = vadd.f32 %v4671, %v4508
        %v4673 = vadd.f32 %v4672, %v4520
        %v4674 = vadd.f32 %v4673, %v4532
        %v4675 = vadd.f32 %v4674, %v4544
        %v4676 = vadd.f32 %v4675, %v4556
        %v4677 = vadd.f32 %v4676, %v4568
        %v4678 = vadd.f32 %v4677, %v4580
        %v4679 = vadd.f32 %v4678, %v4592
        %v4680 = vadd.f32 %v4679, %v4604
        %v4681 = vadd.f32 %v4680, %v4616
        %v4682 = vadd.f32 %v4681, %v4628
        %v4683 = vadd.f32 %v4257, %v4269
        %v4684 = vadd.f32 %v4683, %v4281
        %v4685 = vadd.f32 %v4684, %v4293
        %v4686 = vadd.f32 %v4685, %v4305
        %v4687 = vadd.f32 %v4686, %v4317
        %v4688 = vadd.f32 %v4687, %v4329
        %v4689 = vadd.f32 %v4688, %v4341
        %v4690 = vadd.f32 %v4689, %v4353
        %v4691 = vadd.f32 %v4690, %v4365
        %v4692 = vadd.f32 %v4691, %v4377
        %v4693 = vadd.f32 %v4692, %v4389
        %v4694 = vadd.f32 %v4693, %v4401
        %v4695 = vadd.f32 %v4694, %v4413
        %v4696 = vadd.f32 %v4695, %v4425
        %v4697 = vadd.f32 %v4696, %v4437
        %v4698 = vadd.f32 %v4697, %v4449
        %v4699 = vadd.f32 %v4698, %v4461
        %v4700 = vadd.f32 %v4699, %v4473
        %v4701 = vadd.f32 %v4700, %v4485
        %v4702 = vadd.f32 %v4701, %v4497
        %v4703 = vadd.f32 %v4702, %v4509
        %v4704 = vadd.f32 %v4703, %v4521
        %v4705 = vadd.f32 %v4704, %v4533
        %v4706 = vadd.f32 %v4705, %v4545
        %v4707 = vadd.f32 %v4706, %v4557
        %v4708 = vadd.f32 %v4707, %v4569
        %v4709 = vadd.f32 %v4708, %v4581
        %v4710 = vadd.f32 %v4709, %v4593
        %v4711 = vadd.f32 %v4710, %v4605
        %v4712 = vadd.f32 %v4711, %v4617
        %v4713 = vadd.f32 %v4712, %v4629
        %v4714 = vadd.f32 %v4258, %v4270
        %v4715 = vadd.f32 %v4714, %v4282
        %v4716 = vadd.f32 %v4715, %v4294
        %v4717 = vadd.f32 %v4716, %v4306
        %v4718 = vadd.f32 %v4717, %v4318
        %v4719 = vadd.f32 %v4718, %v4330
        %v4720 = vadd.f32 %v4719, %v4342
        %v4721 = vadd.f32 %v4720, %v4354
        %v4722 = vadd.f32 %v4721, %v4366
        %v4723 = vadd.f32 %v4722, %v4378
        %v4724 = vadd.f32 %v4723, %v4390
        %v4725 = vadd.f32 %v4724, %v4402
        %v4726 = vadd.f32 %v4725, %v4414
        %v4727 = vadd.f32 %v4726, %v4426
        %v4728 = vadd.f32 %v4727, %v4438
        %v4729 = vadd.f32 %v4728, %v4450
        %v4730 = vadd.f32 %v4729, %v4462
        %v4731 = vadd.f32 %v4730, %v4474
        %v4732 = vadd.f32 %v4731, %v4486
        %v4733 = vadd.f32 %v4732, %v4498
        %v4734 = vadd.f32 %v4733, %v4510
        %v4735 = vadd.f32 %v4734, %v4522
        %v4736 = vadd.f32 %v4735, %v4534
        %v4737 = vadd.f32 %v4736, %v4546
        %v4738 = vadd.f32 %v4737, %v4558
        %v4739 = vadd.f32 %v4738, %v4570
        %v4740 = vadd.f32 %v4739, %v4582
        %v4741 = vadd.f32 %v4740, %v4594
        %v4742 = vadd.f32 %v4741, %v4606
        %v4743 = vadd.f32 %v4742, %v4618
        %v4744 = vadd.f32 %v4743, %v4630
        %v4745 = vadd.f32 %v4259, %v4271
        %v4746 = vadd.f32 %v4745, %v4283
        %v4747 = vadd.f32 %v4746, %v4295
        %v4748 = vadd.f32 %v4747, %v4307
        %v4749 = vadd.f32 %v4748, %v4319
        %v4750 = vadd.f32 %v4749, %v4331
        %v4751 = vadd.f32 %v4750, %v4343
        %v4752 = vadd.f32 %v4751, %v4355
        %v4753 = vadd.f32 %v4752, %v4367
        %v4754 = vadd.f32 %v4753, %v4379
        %v4755 = vadd.f32 %v4754, %v4391
        %v4756 = vadd.f32 %v4755, %v4403
        %v4757 = vadd.f32 %v4756, %v4415
        %v4758 = vadd.f32 %v4757, %v4427
        %v4759 = vadd.f32 %v4758, %v4439
        %v4760 = vadd.f32 %v4759, %v4451
        %v4761 = vadd.f32 %v4760, %v4463
        %v4762 = vadd.f32 %v4761, %v4475
        %v4763 = vadd.f32 %v4762, %v4487
        %v4764 = vadd.f32 %v4763, %v4499
        %v4765 = vadd.f32 %v4764, %v4511
        %v4766 = vadd.f32 %v4765, %v4523
        %v4767 = vadd.f32 %v4766, %v4535
        %v4768 = vadd.f32 %v4767, %v4547
        %v4769 = vadd.f32 %v4768, %v4559
        %v4770 = vadd.f32 %v4769, %v4571
        %v4771 = vadd.f32 %v4770, %v4583
        %v4772 = vadd.f32 %v4771, %v4595
        %v4773 = vadd.f32 %v4772, %v4607
        %v4774 = vadd.f32 %v4773, %v4619
        %v4775 = vadd.f32 %v4774, %v4631
        %v4776 = vadd.f32 %v4260, %v4272
        %v4777 = vadd.f32 %v4776, %v4284
        %v4778 = vadd.f32 %v4777, %v4296
        %v4779 = vadd.f32 %v4778, %v4308
        %v4780 = vadd.f32 %v4779, %v4320
        %v4781 = vadd.f32 %v4780, %v4332
        %v4782 = vadd.f32 %v4781, %v4344
        %v4783 = vadd.f32 %v4782, %v4356
        %v4784 = vadd.f32 %v4783, %v4368
        %v4785 = vadd.f32 %v4784, %v4380
        %v4786 = vadd.f32 %v4785, %v4392
        %v4787 = vadd.f32 %v4786, %v4404
        %v4788 = vadd.f32 %v4787, %v4416
        %v4789 = vadd.f32 %v4788, %v4428
        %v4790 = vadd.f32 %v4789, %v4440
        %v4791 = vadd.f32 %v4790, %v4452
        %v4792 = vadd.f32 %v4791, %v4464
        %v4793 = vadd.f32 %v4792, %v4476
        %v4794 = vadd.f32 %v4793, %v4488
        %v4795 = vadd.f32 %v4794, %v4500
        %v4796 = vadd.f32 %v4795, %v4512
        %v4797 = vadd.f32 %v4796, %v4524
        %v4798 = vadd.f32 %v4797, %v4536
        %v4799 = vadd.f32 %v4798, %v4548
        %v4800 = vadd.f32 %v4799, %v4560
        %v4801 = vadd.f32 %v4800, %v4572
        %v4802 = vadd.f32 %v4801, %v4584
        %v4803 = vadd.f32 %v4802, %v4596
        %v4804 = vadd.f32 %v4803, %v4608
        %v4805 = vadd.f32 %v4804, %v4620
        %v4806 = vadd.f32 %v4805, %v4632
        %v4807 = vadd.f32 %v4261, %v4273
        %v4808 = vadd.f32 %v4807, %v4285
        %v4809 = vadd.f32 %v4808, %v4297
        %v4810 = vadd.f32 %v4809, %v4309
        %v4811 = vadd.f32 %v4810, %v4321
        %v4812 = vadd.f32 %v4811, %v4333
        %v4813 = vadd.f32 %v4812, %v4345
        %v4814 = vadd.f32 %v4813, %v4357
        %v4815 = vadd.f32 %v4814, %v4369
        %v4816 = vadd.f32 %v4815, %v4381
        %v4817 = vadd.f32 %v4816, %v4393
        %v4818 = vadd.f32 %v4817, %v4405
        %v4819 = vadd.f32 %v4818, %v4417
        %v4820 = vadd.f32 %v4819, %v4429
        %v4821 = vadd.f32 %v4820, %v4441
        %v4822 = vadd.f32 %v4821, %v4453
        %v4823 = vadd.f32 %v4822, %v4465
        %v4824 = vadd.f32 %v4823, %v4477
        %v4825 = vadd.f32 %v4824, %v4489
        %v4826 = vadd.f32 %v4825, %v4501
        %v4827 = vadd.f32 %v4826, %v4513
        %v4828 = vadd.f32 %v4827, %v4525
        %v4829 = vadd.f32 %v4828, %v4537
        %v4830 = vadd.f32 %v4829, %v4549
        %v4831 = vadd.f32 %v4830, %v4561
        %v4832 = vadd.f32 %v4831, %v4573
        %v4833 = vadd.f32 %v4832, %v4585
        %v4834 = vadd.f32 %v4833, %v4597
        %v4835 = vadd.f32 %v4834, %v4609
        %v4836 = vadd.f32 %v4835, %v4621
        %v4837 = vadd.f32 %v4836, %v4633
        %v4838 = vadd.f32 %v4262, %v4274
        %v4839 = vadd.f32 %v4838, %v4286
        %v4840 = vadd.f32 %v4839, %v4298
        %v4841 = vadd.f32 %v4840, %v4310
        %v4842 = vadd.f32 %v4841, %v4322
        %v4843 = vadd.f32 %v4842, %v4334
        %v4844 = vadd.f32 %v4843, %v4346
        %v4845 = vadd.f32 %v4844, %v4358
        %v4846 = vadd.f32 %v4845, %v4370
        %v4847 = vadd.f32 %v4846, %v4382
        %v4848 = vadd.f32 %v4847, %v4394
        %v4849 = vadd.f32 %v4848, %v4406
        %v4850 = vadd.f32 %v4849, %v4418
        %v4851 = vadd.f32 %v4850, %v4430
        %v4852 = vadd.f32 %v4851, %v4442
        %v4853 = vadd.f32 %v4852, %v4454
        %v4854 = vadd.f32 %v4853, %v4466
        %v4855 = vadd.f32 %v4854, %v4478
        %v4856 = vadd.f32 %v4855, %v4490
        %v4857 = vadd.f32 %v4856, %v4502
        %v4858 = vadd.f32 %v4857, %v4514
        %v4859 = vadd.f32 %v4858, %v4526
        %v4860 = vadd.f32 %v4859, %v4538
        %v4861 = vadd.f32 %v4860, %v4550
        %v4862 = vadd.f32 %v4861, %v4562
        %v4863 = vadd.f32 %v4862, %v4574
        %v4864 = vadd.f32 %v4863, %v4586
        %v4865 = vadd.f32 %v4864, %v4598
        %v4866 = vadd.f32 %v4865, %v4610
        %v4867 = vadd.f32 %v4866, %v4622
        %v4868 = vadd.f32 %v4867, %v4634
        %v4869 = vadd.f32 %v4263, %v4275
        %v4870 = vadd.f32 %v4869, %v4287
        %v4871 = vadd.f32 %v4870, %v4299
        %v4872 = vadd.f32 %v4871, %v4311
        %v4873 = vadd.f32 %v4872, %v4323
        %v4874 = vadd.f32 %v4873, %v4335
        %v4875 = vadd.f32 %v4874, %v4347
        %v4876 = vadd.f32 %v4875, %v4359
        %v4877 = vadd.f32 %v4876, %v4371
        %v4878 = vadd.f32 %v4877, %v4383
        %v4879 = vadd.f32 %v4878, %v4395
        %v4880 = vadd.f32 %v4879, %v4407
        %v4881 = vadd.f32 %v4880, %v4419
        %v4882 = vadd.f32 %v4881, %v4431
        %v4883 = vadd.f32 %v4882, %v4443
        %v4884 = vadd.f32 %v4883, %v4455
        %v4885 = vadd.f32 %v4884, %v4467
        %v4886 = vadd.f32 %v4885, %v4479
        %v4887 = vadd.f32 %v4886, %v4491
        %v4888 = vadd.f32 %v4887, %v4503
        %v4889 = vadd.f32 %v4888, %v4515
        %v4890 = vadd.f32 %v4889, %v4527
        %v4891 = vadd.f32 %v4890, %v4539
        %v4892 = vadd.f32 %v4891, %v4551
        %v4893 = vadd.f32 %v4892, %v4563
        %v4894 = vadd.f32 %v4893, %v4575
        %v4895 = vadd.f32 %v4894, %v4587
        %v4896 = vadd.f32 %v4895, %v4599
        %v4897 = vadd.f32 %v4896, %v4611
        %v4898 = vadd.f32 %v4897, %v4623
        %v4899 = vadd.f32 %v4898, %v4635
        %v4900 = vadd.f32 %v4264, %v4276
        %v4901 = vadd.f32 %v4900, %v4288
        %v4902 = vadd.f32 %v4901, %v4300
        %v4903 = vadd.f32 %v4902, %v4312
        %v4904 = vadd.f32 %v4903, %v4324
        %v4905 = vadd.f32 %v4904, %v4336
        %v4906 = vadd.f32 %v4905, %v4348
        %v4907 = vadd.f32 %v4906, %v4360
        %v4908 = vadd.f32 %v4907, %v4372
        %v4909 = vadd.f32 %v4908, %v4384
        %v4910 = vadd.f32 %v4909, %v4396
        %v4911 = vadd.f32 %v4910, %v4408
        %v4912 = vadd.f32 %v4911, %v4420
        %v4913 = vadd.f32 %v4912, %v4432
        %v4914 = vadd.f32 %v4913, %v4444
        %v4915 = vadd.f32 %v4914, %v4456
        %v4916 = vadd.f32 %v4915, %v4468
        %v4917 = vadd.f32 %v4916, %v4480
        %v4918 = vadd.f32 %v4917, %v4492
        %v4919 = vadd.f32 %v4918, %v4504
        %v4920 = vadd.f32 %v4919, %v4516
        %v4921 = vadd.f32 %v4920, %v4528
        %v4922 = vadd.f32 %v4921, %v4540
        %v4923 = vadd.f32 %v4922, %v4552
        %v4924 = vadd.f32 %v4923, %v4564
        %v4925 = vadd.f32 %v4924, %v4576
        %v4926 = vadd.f32 %v4925, %v4588
        %v4927 = vadd.f32 %v4926, %v4600
        %v4928 = vadd.f32 %v4927, %v4612
        %v4929 = vadd.f32 %v4928, %v4624
        %v4930 = vadd.f32 %v4929, %v4636
        %v4931 = vadd.f32 %v4265, %v4277
        %v4932 = vadd.f32 %v4931, %v4289
        %v4933 = vadd.f32 %v4932, %v4301
        %v4934 = vadd.f32 %v4933, %v4313
        %v4935 = vadd.f32 %v4934, %v4325
        %v4936 = vadd.f32 %v4935, %v4337
        %v4937 = vadd.f32 %v4936, %v4349
        %v4938 = vadd.f32 %v4937, %v4361
        %v4939 = vadd.f32 %v4938, %v4373
        %v4940 = vadd.f32 %v4939, %v4385
        %v4941 = vadd.f32 %v4940, %v4397
        %v4942 = vadd.f32 %v4941, %v4409
        %v4943 = vadd.f32 %v4942, %v4421
        %v4944 = vadd.f32 %v4943, %v4433
        %v4945 = vadd.f32 %v4944, %v4445
        %v4946 = vadd.f32 %v4945, %v4457
        %v4947 = vadd.f32 %v4946, %v4469
        %v4948 = vadd.f32 %v4947, %v4481
        %v4949 = vadd.f32 %v4948, %v4493
        %v4950 = vadd.f32 %v4949, %v4505
        %v4951 = vadd.f32 %v4950, %v4517
        %v4952 = vadd.f32 %v4951, %v4529
        %v4953 = vadd.f32 %v4952, %v4541
        %v4954 = vadd.f32 %v4953, %v4553
        %v4955 = vadd.f32 %v4954, %v4565
        %v4956 = vadd.f32 %v4955, %v4577
        %v4957 = vadd.f32 %v4956, %v4589
        %v4958 = vadd.f32 %v4957, %v4601
        %v4959 = vadd.f32 %v4958, %v4613
        %v4960 = vadd.f32 %v4959, %v4625
        %v4961 = vadd.f32 %v4960, %v4637
        %v4962 = vadd.f32 %v4266, %v4278
        %v4963 = vadd.f32 %v4962, %v4290
        %v4964 = vadd.f32 %v4963, %v4302
        %v4965 = vadd.f32 %v4964, %v4314
        %v4966 = vadd.f32 %v4965, %v4326
        %v4967 = vadd.f32 %v4966, %v4338
        %v4968 = vadd.f32 %v4967, %v4350
        %v4969 = vadd.f32 %v4968, %v4362
        %v4970 = vadd.f32 %v4969, %v4374
        %v4971 = vadd.f32 %v4970, %v4386
        %v4972 = vadd.f32 %v4971, %v4398
        %v4973 = vadd.f32 %v4972, %v4410
        %v4974 = vadd.f32 %v4973, %v4422
        %v4975 = vadd.f32 %v4974, %v4434
        %v4976 = vadd.f32 %v4975, %v4446
        %v4977 = vadd.f32 %v4976, %v4458
        %v4978 = vadd.f32 %v4977, %v4470
        %v4979 = vadd.f32 %v4978, %v4482
        %v4980 = vadd.f32 %v4979, %v4494
        %v4981 = vadd.f32 %v4980, %v4506
        %v4982 = vadd.f32 %v4981, %v4518
        %v4983 = vadd.f32 %v4982, %v4530
        %v4984 = vadd.f32 %v4983, %v4542
        %v4985 = vadd.f32 %v4984, %v4554
        %v4986 = vadd.f32 %v4985, %v4566
        %v4987 = vadd.f32 %v4986, %v4578
        %v4988 = vadd.f32 %v4987, %v4590
        %v4989 = vadd.f32 %v4988, %v4602
        %v4990 = vadd.f32 %v4989, %v4614
        %v4991 = vadd.f32 %v4990, %v4626
        %v4992 = vadd.f32 %v4991, %v4638
        %v4993 = vadd.f32 %v4267, %v4279
        %v4994 = vadd.f32 %v4993, %v4291
        %v4995 = vadd.f32 %v4994, %v4303
        %v4996 = vadd.f32 %v4995, %v4315
        %v4997 = vadd.f32 %v4996, %v4327
        %v4998 = vadd.f32 %v4997, %v4339
        %v4999 = vadd.f32 %v4998, %v4351
        %v5000 = vadd.f32 %v4999, %v4363
        %v5001 = vadd.f32 %v5000, %v4375
        %v5002 = vadd.f32 %v5001, %v4387
        %v5003 = vadd.f32 %v5002, %v4399
        %v5004 = vadd.f32 %v5003, %v4411
        %v5005 = vadd.f32 %v5004, %v4423
        %v5006 = vadd.f32 %v5005, %v4435
        %v5007 = vadd.f32 %v5006, %v4447
        %v5008 = vadd.f32 %v5007, %v4459
        %v5009 = vadd.f32 %v5008, %v4471
        %v5010 = vadd.f32 %v5009, %v4483
        %v5011 = vadd.f32 %v5010, %v4495
        %v5012 = vadd.f32 %v5011, %v4507
        %v5013 = vadd.f32 %v5012, %v4519
        %v5014 = vadd.f32 %v5013, %v4531
        %v5015 = vadd.f32 %v5014, %v4543
        %v5016 = vadd.f32 %v5015, %v4555
        %v5017 = vadd.f32 %v5016, %v4567
        %v5018 = vadd.f32 %v5017, %v4579
        %v5019 = vadd.f32 %v5018, %v4591
        %v5020 = vadd.f32 %v5019, %v4603
        %v5021 = vadd.f32 %v5020, %v4615
        %v5022 = vadd.f32 %v5021, %v4627
        %v5023 = vadd.f32 %v5022, %v4639
        %v5024 = vadd.f32 %v4640, %v4682
        %v5025 = vadd.f32 %v4641, %v4713
        %v5026 = vadd.f32 %v4642, %v4744
        %v5027 = vadd.f32 %v4643, %v4775
        %v5028 = vadd.f32 %v4644, %v4806
        %v5029 = vadd.f32 %v4645, %v4837
        %v5030 = vadd.f32 %v4646, %v4868
        %v5031 = vadd.f32 %v4647, %v4899
        %v5032 = vadd.f32 %v4648, %v4930
        %v5033 = vadd.f32 %v4649, %v4961
        %v5034 = vadd.f32 %v4650, %v4992
        %v5035 = vadd.f32 %v4651, %v5023
        %5036 = vst [vmem:[#allocation2] sm:$0xff] %v5024
        %5037 = vst [vmem:[#allocation2 + $0x8] sm:$0xff] %v5025
        %5038 = vst [vmem:[#allocation2 + $0x10] sm:$0xff] %v5026
        %5039 = vst [vmem:[#allocation2 + $0x18] sm:$0xff] %v5027
        %5040 = vst [vmem:[#allocation2 + $0x20] sm:$0xff] %v5028
        %5041 = vst [vmem:[#allocation2 + $0x28] sm:$0xff] %v5029
        %5042 = vst [vmem:[#allocation2 + $0x30] sm:$0xff] %v5030
        %5043 = vst [vmem:[#allocation2 + $0x38] sm:$0xff] %v5031
        %5044 = vst [vmem:[#allocation2 + $0x40] sm:$0xff] %v5032
        %5045 = vst [vmem:[#allocation2 + $0x48] sm:$0xff] %v5033
        %5046 = vst [vmem:[#allocation2 + $0x50] sm:$0xff] %v5034
        %5047 = vst [vmem:[#allocation2 + $0x58] sm:$0xff] %v5035
        // Predicated region
        $region49: #{tpu_custom_call.1} parent=39 // pred_check
          %p5048 = pneg %p265
        $region50: #{tpu_custom_call.1} parent=39 // pred_check_branch
          %5050 = sbr.rel (%p5048) target = $region52
        $region51: #{tpu_custom_call.1} parent=39 // pred_region
          %v5051 = vld [vmem:[#allocation2] sm:$0xff]
          %v5052 = vld [vmem:[#allocation2 + $0x8] sm:$0xff]
          %v5053 = vld [vmem:[#allocation2 + $0x10] sm:$0xff]
          %v5054 = vld [vmem:[#allocation2 + $0x18] sm:$0xff]
          %v5055 = vld [vmem:[#allocation2 + $0x20] sm:$0xff]
          %v5056 = vld [vmem:[#allocation2 + $0x28] sm:$0xff]
          %v5057 = vld [vmem:[#allocation2 + $0x30] sm:$0xff]
          %v5058 = vld [vmem:[#allocation2 + $0x38] sm:$0xff]
          %v5059 = vld [vmem:[#allocation2 + $0x40] sm:$0xff]
          %v5060 = vld [vmem:[#allocation2 + $0x48] sm:$0xff]
          %v5061 = vld [vmem:[#allocation2 + $0x50] sm:$0xff]
          %v5062 = vld [vmem:[#allocation2 + $0x58] sm:$0xff]
          %v5063 = vrot.slane %v5051, 4
          %v5064 = vadd.f32 %v5051, %v5063
          %v5065 = vrot.slane %v5064, 2
          %v5066 = vadd.f32 %v5064, %v5065
          %v5067 = vrot.slane %v5066, 1
          %v5068 = vadd.f32 %v5066, %v5067
          %v5069 = vrot.slane %v5052, 4
          %v5070 = vadd.f32 %v5052, %v5069
          %v5071 = vrot.slane %v5070, 2
          %v5072 = vadd.f32 %v5070, %v5071
          %v5073 = vrot.slane %v5072, 1
          %v5074 = vadd.f32 %v5072, %v5073
          %v5075 = vrot.slane %v5053, 4
          %v5076 = vadd.f32 %v5053, %v5075
          %v5077 = vrot.slane %v5076, 2
          %v5078 = vadd.f32 %v5076, %v5077
          %v5079 = vrot.slane %v5078, 1
          %v5080 = vadd.f32 %v5078, %v5079
          %v5081 = vrot.slane %v5054, 4
          %v5082 = vadd.f32 %v5054, %v5081
          %v5083 = vrot.slane %v5082, 2
          %v5084 = vadd.f32 %v5082, %v5083
          %v5085 = vrot.slane %v5084, 1
          %v5086 = vadd.f32 %v5084, %v5085
          %v5087 = vrot.slane %v5055, 4
          %v5088 = vadd.f32 %v5055, %v5087
          %v5089 = vrot.slane %v5088, 2
          %v5090 = vadd.f32 %v5088, %v5089
          %v5091 = vrot.slane %v5090, 1
          %v5092 = vadd.f32 %v5090, %v5091
          %v5093 = vrot.slane %v5056, 4
          %v5094 = vadd.f32 %v5056, %v5093
          %v5095 = vrot.slane %v5094, 2
          %v5096 = vadd.f32 %v5094, %v5095
          %v5097 = vrot.slane %v5096, 1
          %v5098 = vadd.f32 %v5096, %v5097
          %v5099 = vrot.slane %v5057, 4
          %v5100 = vadd.f32 %v5057, %v5099
          %v5101 = vrot.slane %v5100, 2
          %v5102 = vadd.f32 %v5100, %v5101
          %v5103 = vrot.slane %v5102, 1
          %v5104 = vadd.f32 %v5102, %v5103
          %v5105 = vrot.slane %v5058, 4
          %v5106 = vadd.f32 %v5058, %v5105
          %v5107 = vrot.slane %v5106, 2
          %v5108 = vadd.f32 %v5106, %v5107
          %v5109 = vrot.slane %v5108, 1
          %v5110 = vadd.f32 %v5108, %v5109
          %v5111 = vrot.slane %v5059, 4
          %v5112 = vadd.f32 %v5059, %v5111
          %v5113 = vrot.slane %v5112, 2
          %v5114 = vadd.f32 %v5112, %v5113
          %v5115 = vrot.slane %v5114, 1
          %v5116 = vadd.f32 %v5114, %v5115
          %v5117 = vrot.slane %v5060, 4
          %v5118 = vadd.f32 %v5060, %v5117
          %v5119 = vrot.slane %v5118, 2
          %v5120 = vadd.f32 %v5118, %v5119
          %v5121 = vrot.slane %v5120, 1
          %v5122 = vadd.f32 %v5120, %v5121
          %v5123 = vrot.slane %v5061, 4
          %v5124 = vadd.f32 %v5061, %v5123
          %v5125 = vrot.slane %v5124, 2
          %v5126 = vadd.f32 %v5124, %v5125
          %v5127 = vrot.slane %v5126, 1
          %v5128 = vadd.f32 %v5126, %v5127
          %v5129 = vrot.slane %v5062, 4
          %v5130 = vadd.f32 %v5062, %v5129
          %v5131 = vrot.slane %v5130, 2
          %v5132 = vadd.f32 %v5130, %v5131
          %v5133 = vrot.slane %v5132, 1
          %v5134 = vadd.f32 %v5132, %v5133
          %v5135 = vmul.f32 %v5068, 0.00390625
          %v5136 = vmul.f32 %v5074, 0.00390625
          %v5137 = vmul.f32 %v5080, 0.00390625
          %v5138 = vmul.f32 %v5086, 0.00390625
          %v5139 = vmul.f32 %v5092, 0.00390625
          %v5140 = vmul.f32 %v5098, 0.00390625
          %v5141 = vmul.f32 %v5104, 0.00390625
          %v5142 = vmul.f32 %v5110, 0.00390625
          %v5143 = vmul.f32 %v5116, 0.00390625
          %v5144 = vmul.f32 %v5122, 0.00390625
          %v5145 = vmul.f32 %v5128, 0.00390625
          %v5146 = vmul.f32 %v5134, 0.00390625
          %v5147 = vld [vmem:[#allocation3] sm:$0xff]
          %v5148 = vld [vmem:[#allocation3 + $0x8] sm:$0xff]
          %v5149 = vld [vmem:[#allocation3 + $0x10] sm:$0xff]
          %v5150 = vld [vmem:[#allocation3 + $0x18] sm:$0xff]
          %v5151 = vld [vmem:[#allocation3 + $0x20] sm:$0xff]
          %v5152 = vld [vmem:[#allocation3 + $0x28] sm:$0xff]
          %v5153 = vld [vmem:[#allocation3 + $0x30] sm:$0xff]
          %v5154 = vld [vmem:[#allocation3 + $0x38] sm:$0xff]
          %v5155 = vld [vmem:[#allocation3 + $0x40] sm:$0xff]
          %v5156 = vld [vmem:[#allocation3 + $0x48] sm:$0xff]
          %v5157 = vld [vmem:[#allocation3 + $0x50] sm:$0xff]
          %v5158 = vld [vmem:[#allocation3 + $0x58] sm:$0xff]
          %v5159 = vld [vmem:[#allocation3 + $0x60] sm:$0xff]
          %v5160 = vld [vmem:[#allocation3 + $0x68] sm:$0xff]
          %v5161 = vld [vmem:[#allocation3 + $0x70] sm:$0xff]
          %v5162 = vld [vmem:[#allocation3 + $0x78] sm:$0xff]
          %v5163 = vld [vmem:[#allocation3 + $0x80] sm:$0xff]
          %v5164 = vld [vmem:[#allocation3 + $0x88] sm:$0xff]
          %v5165 = vld [vmem:[#allocation3 + $0x90] sm:$0xff]
          %v5166 = vld [vmem:[#allocation3 + $0x98] sm:$0xff]
          %v5167 = vld [vmem:[#allocation3 + $0xa0] sm:$0xff]
          %v5168 = vld [vmem:[#allocation3 + $0xa8] sm:$0xff]
          %v5169 = vld [vmem:[#allocation3 + $0xb0] sm:$0xff]
          %v5170 = vld [vmem:[#allocation3 + $0xb8] sm:$0xff]
          %v5171 = vld [vmem:[#allocation3 + $0xc0] sm:$0xff]
          %v5172 = vld [vmem:[#allocation3 + $0xc8] sm:$0xff]
          %v5173 = vld [vmem:[#allocation3 + $0xd0] sm:$0xff]
          %v5174 = vld [vmem:[#allocation3 + $0xd8] sm:$0xff]
          %v5175 = vld [vmem:[#allocation3 + $0xe0] sm:$0xff]
          %v5176 = vld [vmem:[#allocation3 + $0xe8] sm:$0xff]
          %v5177 = vld [vmem:[#allocation3 + $0xf0] sm:$0xff]
          %v5178 = vld [vmem:[#allocation3 + $0xf8] sm:$0xff]
          %v5179 = vld [vmem:[#allocation3 + $0x100] sm:$0xff]
          %v5180 = vld [vmem:[#allocation3 + $0x108] sm:$0xff]
          %v5181 = vld [vmem:[#allocation3 + $0x110] sm:$0xff]
          %v5182 = vld [vmem:[#allocation3 + $0x118] sm:$0xff]
          %v5183 = vld [vmem:[#allocation3 + $0x120] sm:$0xff]
          %v5184 = vld [vmem:[#allocation3 + $0x128] sm:$0xff]
          %v5185 = vld [vmem:[#allocation3 + $0x130] sm:$0xff]
          %v5186 = vld [vmem:[#allocation3 + $0x138] sm:$0xff]
          %v5187 = vld [vmem:[#allocation3 + $0x140] sm:$0xff]
          %v5188 = vld [vmem:[#allocation3 + $0x148] sm:$0xff]
          %v5189 = vld [vmem:[#allocation3 + $0x150] sm:$0xff]
          %v5190 = vld [vmem:[#allocation3 + $0x158] sm:$0xff]
          %v5191 = vld [vmem:[#allocation3 + $0x160] sm:$0xff]
          %v5192 = vld [vmem:[#allocation3 + $0x168] sm:$0xff]
          %v5193 = vld [vmem:[#allocation3 + $0x170] sm:$0xff]
          %v5194 = vld [vmem:[#allocation3 + $0x178] sm:$0xff]
          %v5195 = vld [vmem:[#allocation3 + $0x180] sm:$0xff]
          %v5196 = vld [vmem:[#allocation3 + $0x188] sm:$0xff]
          %v5197 = vld [vmem:[#allocation3 + $0x190] sm:$0xff]
          %v5198 = vld [vmem:[#allocation3 + $0x198] sm:$0xff]
          %v5199 = vld [vmem:[#allocation3 + $0x1a0] sm:$0xff]
          %v5200 = vld [vmem:[#allocation3 + $0x1a8] sm:$0xff]
          %v5201 = vld [vmem:[#allocation3 + $0x1b0] sm:$0xff]
          %v5202 = vld [vmem:[#allocation3 + $0x1b8] sm:$0xff]
          %v5203 = vld [vmem:[#allocation3 + $0x1c0] sm:$0xff]
          %v5204 = vld [vmem:[#allocation3 + $0x1c8] sm:$0xff]
          %v5205 = vld [vmem:[#allocation3 + $0x1d0] sm:$0xff]
          %v5206 = vld [vmem:[#allocation3 + $0x1d8] sm:$0xff]
          %v5207 = vld [vmem:[#allocation3 + $0x1e0] sm:$0xff]
          %v5208 = vld [vmem:[#allocation3 + $0x1e8] sm:$0xff]
          %v5209 = vld [vmem:[#allocation3 + $0x1f0] sm:$0xff]
          %v5210 = vld [vmem:[#allocation3 + $0x1f8] sm:$0xff]
          %v5211 = vld [vmem:[#allocation3 + $0x200] sm:$0xff]
          %v5212 = vld [vmem:[#allocation3 + $0x208] sm:$0xff]
          %v5213 = vld [vmem:[#allocation3 + $0x210] sm:$0xff]
          %v5214 = vld [vmem:[#allocation3 + $0x218] sm:$0xff]
          %v5215 = vld [vmem:[#allocation3 + $0x220] sm:$0xff]
          %v5216 = vld [vmem:[#allocation3 + $0x228] sm:$0xff]
          %v5217 = vld [vmem:[#allocation3 + $0x230] sm:$0xff]
          %v5218 = vld [vmem:[#allocation3 + $0x238] sm:$0xff]
          %v5219 = vld [vmem:[#allocation3 + $0x240] sm:$0xff]
          %v5220 = vld [vmem:[#allocation3 + $0x248] sm:$0xff]
          %v5221 = vld [vmem:[#allocation3 + $0x250] sm:$0xff]
          %v5222 = vld [vmem:[#allocation3 + $0x258] sm:$0xff]
          %v5223 = vld [vmem:[#allocation3 + $0x260] sm:$0xff]
          %v5224 = vld [vmem:[#allocation3 + $0x268] sm:$0xff]
          %v5225 = vld [vmem:[#allocation3 + $0x270] sm:$0xff]
          %v5226 = vld [vmem:[#allocation3 + $0x278] sm:$0xff]
          %v5227 = vld [vmem:[#allocation3 + $0x280] sm:$0xff]
          %v5228 = vld [vmem:[#allocation3 + $0x288] sm:$0xff]
          %v5229 = vld [vmem:[#allocation3 + $0x290] sm:$0xff]
          %v5230 = vld [vmem:[#allocation3 + $0x298] sm:$0xff]
          %v5231 = vld [vmem:[#allocation3 + $0x2a0] sm:$0xff]
          %v5232 = vld [vmem:[#allocation3 + $0x2a8] sm:$0xff]
          %v5233 = vld [vmem:[#allocation3 + $0x2b0] sm:$0xff]
          %v5234 = vld [vmem:[#allocation3 + $0x2b8] sm:$0xff]
          %v5235 = vld [vmem:[#allocation3 + $0x2c0] sm:$0xff]
          %v5236 = vld [vmem:[#allocation3 + $0x2c8] sm:$0xff]
          %v5237 = vld [vmem:[#allocation3 + $0x2d0] sm:$0xff]
          %v5238 = vld [vmem:[#allocation3 + $0x2d8] sm:$0xff]
          %v5239 = vld [vmem:[#allocation3 + $0x2e0] sm:$0xff]
          %v5240 = vld [vmem:[#allocation3 + $0x2e8] sm:$0xff]
          %v5241 = vld [vmem:[#allocation3 + $0x2f0] sm:$0xff]
          %v5242 = vld [vmem:[#allocation3 + $0x2f8] sm:$0xff]
          %v5243 = vld [vmem:[#allocation3 + $0x300] sm:$0xff]
          %v5244 = vld [vmem:[#allocation3 + $0x308] sm:$0xff]
          %v5245 = vld [vmem:[#allocation3 + $0x310] sm:$0xff]
          %v5246 = vld [vmem:[#allocation3 + $0x318] sm:$0xff]
          %v5247 = vld [vmem:[#allocation3 + $0x320] sm:$0xff]
          %v5248 = vld [vmem:[#allocation3 + $0x328] sm:$0xff]
          %v5249 = vld [vmem:[#allocation3 + $0x330] sm:$0xff]
          %v5250 = vld [vmem:[#allocation3 + $0x338] sm:$0xff]
          %v5251 = vld [vmem:[#allocation3 + $0x340] sm:$0xff]
          %v5252 = vld [vmem:[#allocation3 + $0x348] sm:$0xff]
          %v5253 = vld [vmem:[#allocation3 + $0x350] sm:$0xff]
          %v5254 = vld [vmem:[#allocation3 + $0x358] sm:$0xff]
          %v5255 = vld [vmem:[#allocation3 + $0x360] sm:$0xff]
          %v5256 = vld [vmem:[#allocation3 + $0x368] sm:$0xff]
          %v5257 = vld [vmem:[#allocation3 + $0x370] sm:$0xff]
          %v5258 = vld [vmem:[#allocation3 + $0x378] sm:$0xff]
          %v5259 = vld [vmem:[#allocation3 + $0x380] sm:$0xff]
          %v5260 = vld [vmem:[#allocation3 + $0x388] sm:$0xff]
          %v5261 = vld [vmem:[#allocation3 + $0x390] sm:$0xff]
          %v5262 = vld [vmem:[#allocation3 + $0x398] sm:$0xff]
          %v5263 = vld [vmem:[#allocation3 + $0x3a0] sm:$0xff]
          %v5264 = vld [vmem:[#allocation3 + $0x3a8] sm:$0xff]
          %v5265 = vld [vmem:[#allocation3 + $0x3b0] sm:$0xff]
          %v5266 = vld [vmem:[#allocation3 + $0x3b8] sm:$0xff]
          %v5267 = vld [vmem:[#allocation3 + $0x3c0] sm:$0xff]
          %v5268 = vld [vmem:[#allocation3 + $0x3c8] sm:$0xff]
          %v5269 = vld [vmem:[#allocation3 + $0x3d0] sm:$0xff]
          %v5270 = vld [vmem:[#allocation3 + $0x3d8] sm:$0xff]
          %v5271 = vld [vmem:[#allocation3 + $0x3e0] sm:$0xff]
          %v5272 = vld [vmem:[#allocation3 + $0x3e8] sm:$0xff]
          %v5273 = vld [vmem:[#allocation3 + $0x3f0] sm:$0xff]
          %v5274 = vld [vmem:[#allocation3 + $0x3f8] sm:$0xff]
          %v5275 = vld [vmem:[#allocation3 + $0x400] sm:$0xff]
          %v5276 = vld [vmem:[#allocation3 + $0x408] sm:$0xff]
          %v5277 = vld [vmem:[#allocation3 + $0x410] sm:$0xff]
          %v5278 = vld [vmem:[#allocation3 + $0x418] sm:$0xff]
          %v5279 = vld [vmem:[#allocation3 + $0x420] sm:$0xff]
          %v5280 = vld [vmem:[#allocation3 + $0x428] sm:$0xff]
          %v5281 = vld [vmem:[#allocation3 + $0x430] sm:$0xff]
          %v5282 = vld [vmem:[#allocation3 + $0x438] sm:$0xff]
          %v5283 = vld [vmem:[#allocation3 + $0x440] sm:$0xff]
          %v5284 = vld [vmem:[#allocation3 + $0x448] sm:$0xff]
          %v5285 = vld [vmem:[#allocation3 + $0x450] sm:$0xff]
          %v5286 = vld [vmem:[#allocation3 + $0x458] sm:$0xff]
          %v5287 = vld [vmem:[#allocation3 + $0x460] sm:$0xff]
          %v5288 = vld [vmem:[#allocation3 + $0x468] sm:$0xff]
          %v5289 = vld [vmem:[#allocation3 + $0x470] sm:$0xff]
          %v5290 = vld [vmem:[#allocation3 + $0x478] sm:$0xff]
          %v5291 = vld [vmem:[#allocation3 + $0x480] sm:$0xff]
          %v5292 = vld [vmem:[#allocation3 + $0x488] sm:$0xff]
          %v5293 = vld [vmem:[#allocation3 + $0x490] sm:$0xff]
          %v5294 = vld [vmem:[#allocation3 + $0x498] sm:$0xff]
          %v5295 = vld [vmem:[#allocation3 + $0x4a0] sm:$0xff]
          %v5296 = vld [vmem:[#allocation3 + $0x4a8] sm:$0xff]
          %v5297 = vld [vmem:[#allocation3 + $0x4b0] sm:$0xff]
          %v5298 = vld [vmem:[#allocation3 + $0x4b8] sm:$0xff]
          %v5299 = vld [vmem:[#allocation3 + $0x4c0] sm:$0xff]
          %v5300 = vld [vmem:[#allocation3 + $0x4c8] sm:$0xff]
          %v5301 = vld [vmem:[#allocation3 + $0x4d0] sm:$0xff]
          %v5302 = vld [vmem:[#allocation3 + $0x4d8] sm:$0xff]
          %v5303 = vld [vmem:[#allocation3 + $0x4e0] sm:$0xff]
          %v5304 = vld [vmem:[#allocation3 + $0x4e8] sm:$0xff]
          %v5305 = vld [vmem:[#allocation3 + $0x4f0] sm:$0xff]
          %v5306 = vld [vmem:[#allocation3 + $0x4f8] sm:$0xff]
          %v5307 = vld [vmem:[#allocation3 + $0x500] sm:$0xff]
          %v5308 = vld [vmem:[#allocation3 + $0x508] sm:$0xff]
          %v5309 = vld [vmem:[#allocation3 + $0x510] sm:$0xff]
          %v5310 = vld [vmem:[#allocation3 + $0x518] sm:$0xff]
          %v5311 = vld [vmem:[#allocation3 + $0x520] sm:$0xff]
          %v5312 = vld [vmem:[#allocation3 + $0x528] sm:$0xff]
          %v5313 = vld [vmem:[#allocation3 + $0x530] sm:$0xff]
          %v5314 = vld [vmem:[#allocation3 + $0x538] sm:$0xff]
          %v5315 = vld [vmem:[#allocation3 + $0x540] sm:$0xff]
          %v5316 = vld [vmem:[#allocation3 + $0x548] sm:$0xff]
          %v5317 = vld [vmem:[#allocation3 + $0x550] sm:$0xff]
          %v5318 = vld [vmem:[#allocation3 + $0x558] sm:$0xff]
          %v5319 = vld [vmem:[#allocation3 + $0x560] sm:$0xff]
          %v5320 = vld [vmem:[#allocation3 + $0x568] sm:$0xff]
          %v5321 = vld [vmem:[#allocation3 + $0x570] sm:$0xff]
          %v5322 = vld [vmem:[#allocation3 + $0x578] sm:$0xff]
          %v5323 = vld [vmem:[#allocation3 + $0x580] sm:$0xff]
          %v5324 = vld [vmem:[#allocation3 + $0x588] sm:$0xff]
          %v5325 = vld [vmem:[#allocation3 + $0x590] sm:$0xff]
          %v5326 = vld [vmem:[#allocation3 + $0x598] sm:$0xff]
          %v5327 = vld [vmem:[#allocation3 + $0x5a0] sm:$0xff]
          %v5328 = vld [vmem:[#allocation3 + $0x5a8] sm:$0xff]
          %v5329 = vld [vmem:[#allocation3 + $0x5b0] sm:$0xff]
          %v5330 = vld [vmem:[#allocation3 + $0x5b8] sm:$0xff]
          %v5331 = vld [vmem:[#allocation3 + $0x5c0] sm:$0xff]
          %v5332 = vld [vmem:[#allocation3 + $0x5c8] sm:$0xff]
          %v5333 = vld [vmem:[#allocation3 + $0x5d0] sm:$0xff]
          %v5334 = vld [vmem:[#allocation3 + $0x5d8] sm:$0xff]
          %v5335 = vld [vmem:[#allocation3 + $0x5e0] sm:$0xff]
          %v5336 = vld [vmem:[#allocation3 + $0x5e8] sm:$0xff]
          %v5337 = vld [vmem:[#allocation3 + $0x5f0] sm:$0xff]
          %v5338 = vld [vmem:[#allocation3 + $0x5f8] sm:$0xff]
          %v5339 = vld [vmem:[%s4] sm:$0x1]
          %5340 = vmatprep.subr.mxu0 0.0
          %5341 = vmatpush1.msra.mxu0 %v5147
          %5342 = vmatprep.subr.mxu0 0.0
          %5343 = vmatpush1.msra.mxu0 %v5148
          %5344 = vmatprep.subr.mxu0 0.0
          %5345 = vmatpush1.msra.mxu0 %v5149
          %5346 = vmatprep.subr.mxu0 0.0
          %5347 = vmatpush1.msra.mxu0 %v5150
          %5348 = vmatprep.subr.mxu0 0.0
          %5349 = vmatpush1.msra.mxu0 %v5151
          %5350 = vmatprep.subr.mxu0 0.0
          %5351 = vmatpush1.msra.mxu0 %v5152
          %5352 = vmatprep.subr.mxu0 0.0
          %5353 = vmatpush1.msra.mxu0 %v5153
          %5354 = vmatprep.subr.mxu0 0.0
          %5355 = vmatpush1.msra.mxu0 %v5154
          %5356 = vmatprep.subr.mxu0 0.0
          %5357 = vmatpush1.msra.mxu0 %v5155
          %5358 = vmatprep.subr.mxu0 0.0
          %5359 = vmatpush1.msra.mxu0 %v5156
          %5360 = vmatprep.subr.mxu0 0.0
          %5361 = vmatpush1.msra.mxu0 %v5157
          %5362 = vmatprep.subr.mxu0 0.0
          %5363 = vmatpush1.msra.mxu0 %v5158
          %5364 = vmatprep.subr.mxu0 0.0
          %5365 = vmatpush1.msra.mxu0 %v5159
          %5366 = vmatprep.subr.mxu0 0.0
          %5367 = vmatpush1.msra.mxu0 %v5160
          %5368 = vmatprep.subr.mxu0 0.0
          %5369 = vmatpush1.msra.mxu0 %v5161
          %5370 = vmatprep.subr.mxu0 0.0
          %5371 = vmatpush1.msra.mxu0 %v5162
          %5372 = vmatprep.subr.mxu0 0.0
          %5373 = vmatpush1.msra.mxu0 %v5163
          %5374 = vmatprep.subr.mxu0 0.0
          %5375 = vmatpush1.msra.mxu0 %v5164
          %5376 = vmatprep.subr.mxu0 0.0
          %5377 = vmatpush1.msra.mxu0 %v5165
          %5378 = vmatprep.subr.mxu0 0.0
          %5379 = vmatpush1.msra.mxu0 %v5166
          %5380 = vmatprep.subr.mxu0 0.0
          %5381 = vmatpush1.msra.mxu0 %v5167
          %5382 = vmatprep.subr.mxu0 0.0
          %5383 = vmatpush1.msra.mxu0 %v5168
          %5384 = vmatprep.subr.mxu0 0.0
          %5385 = vmatpush1.msra.mxu0 %v5169
          %5386 = vmatprep.subr.mxu0 0.0
          %5387 = vmatpush1.msra.mxu0 %v5170
          %5388 = vmatprep.subr.mxu0 0.0
          %5389 = vmatpush1.msra.mxu0 %v5171
          %5390 = vmatprep.subr.mxu0 0.0
          %5391 = vmatpush1.msra.mxu0 %v5172
          %5392 = vmatprep.subr.mxu0 0.0
          %5393 = vmatpush1.msra.mxu0 %v5173
          %5394 = vmatprep.subr.mxu0 0.0
          %5395 = vmatpush1.msra.mxu0 %v5174
          %5396 = vmatprep.subr.mxu0 0.0
          %5397 = vmatpush1.msra.mxu0 %v5175
          %5398 = vmatprep.subr.mxu0 0.0
          %5399 = vmatpush1.msra.mxu0 %v5176
          %5400 = vmatprep.subr.mxu0 0.0
          %5401 = vmatpush1.msra.mxu0 %v5177
          %5402 = vmatprep.subr.mxu0 0.0
          %5403 = vmatpush1.msra.mxu0 %v5178
          %5404 = vmatprep.mubr.f32.mxu0 %v5136
          %5405 = vmatmul.mubr.f32.gmra.mrb[0].mxu0 %v5135
          %v5406 = vpop.f32.mrb[0].mxu0
          %v5407 = vadd.f32 %v5339, %v5406
          %v5408 = vpop.f32.mrb[0].mxu0
          %5409 = vdwg.mxu0
          %5410 = vmatprep.subr.mxu0 0.0
          %5411 = vmatpush1.msra.mxu0 %v5179
          %5412 = vmatprep.subr.mxu0 0.0
          %5413 = vmatpush1.msra.mxu0 %v5180
          %5414 = vmatprep.subr.mxu0 0.0
          %5415 = vmatpush1.msra.mxu0 %v5181
          %5416 = vmatprep.subr.mxu0 0.0
          %5417 = vmatpush1.msra.mxu0 %v5182
          %5418 = vmatprep.subr.mxu0 0.0
          %5419 = vmatpush1.msra.mxu0 %v5183
          %5420 = vmatprep.subr.mxu0 0.0
          %5421 = vmatpush1.msra.mxu0 %v5184
          %5422 = vmatprep.subr.mxu0 0.0
          %5423 = vmatpush1.msra.mxu0 %v5185
          %5424 = vmatprep.subr.mxu0 0.0
          %5425 = vmatpush1.msra.mxu0 %v5186
          %5426 = vmatprep.subr.mxu0 0.0
          %5427 = vmatpush1.msra.mxu0 %v5187
          %5428 = vmatprep.subr.mxu0 0.0
          %5429 = vmatpush1.msra.mxu0 %v5188
          %5430 = vmatprep.subr.mxu0 0.0
          %5431 = vmatpush1.msra.mxu0 %v5189
          %5432 = vmatprep.subr.mxu0 0.0
          %5433 = vmatpush1.msra.mxu0 %v5190
          %5434 = vmatprep.subr.mxu0 0.0
          %5435 = vmatpush1.msra.mxu0 %v5191
          %5436 = vmatprep.subr.mxu0 0.0
          %5437 = vmatpush1.msra.mxu0 %v5192
          %5438 = vmatprep.subr.mxu0 0.0
          %5439 = vmatpush1.msra.mxu0 %v5193
          %5440 = vmatprep.subr.mxu0 0.0
          %5441 = vmatpush1.msra.mxu0 %v5194
          %5442 = vmatprep.subr.mxu0 0.0
          %5443 = vmatpush1.msra.mxu0 %v5195
          %5444 = vmatprep.subr.mxu0 0.0
          %5445 = vmatpush1.msra.mxu0 %v5196
          %5446 = vmatprep.subr.mxu0 0.0
          %5447 = vmatpush1.msra.mxu0 %v5197
          %5448 = vmatprep.subr.mxu0 0.0
          %5449 = vmatpush1.msra.mxu0 %v5198
          %5450 = vmatprep.subr.mxu0 0.0
          %5451 = vmatpush1.msra.mxu0 %v5199
          %5452 = vmatprep.subr.mxu0 0.0
          %5453 = vmatpush1.msra.mxu0 %v5200
          %5454 = vmatprep.subr.mxu0 0.0
          %5455 = vmatpush1.msra.mxu0 %v5201
          %5456 = vmatprep.subr.mxu0 0.0
          %5457 = vmatpush1.msra.mxu0 %v5202
          %5458 = vmatprep.subr.mxu0 0.0
          %5459 = vmatpush1.msra.mxu0 %v5203
          %5460 = vmatprep.subr.mxu0 0.0
          %5461 = vmatpush1.msra.mxu0 %v5204
          %5462 = vmatprep.subr.mxu0 0.0
          %5463 = vmatpush1.msra.mxu0 %v5205
          %5464 = vmatprep.subr.mxu0 0.0
          %5465 = vmatpush1.msra.mxu0 %v5206
          %5466 = vmatprep.subr.mxu0 0.0
          %5467 = vmatpush1.msra.mxu0 %v5207
          %5468 = vmatprep.subr.mxu0 0.0
          %5469 = vmatpush1.msra.mxu0 %v5208
          %5470 = vmatprep.subr.mxu0 0.0
          %5471 = vmatpush1.msra.mxu0 %v5209
          %5472 = vmatprep.subr.mxu0 0.0
          %5473 = vmatpush1.msra.mxu0 %v5210
          %5474 = vmatprep.mubr.f32.mxu0 %v5138
          %5475 = vmatmul.mubr.f32.gmra.mrb[0].mxu0 %v5137
          %v5476 = vpop.f32.mrb[0].mxu0
          %v5477 = vadd.f32 %v5407, %v5476
          %v5478 = vpop.f32.mrb[0].mxu0
          %5479 = vdwg.mxu0
          %5480 = vmatprep.subr.mxu0 0.0
          %5481 = vmatpush1.msra.mxu0 %v5211
          %5482 = vmatprep.subr.mxu0 0.0
          %5483 = vmatpush1.msra.mxu0 %v5212
          %5484 = vmatprep.subr.mxu0 0.0
          %5485 = vmatpush1.msra.mxu0 %v5213
          %5486 = vmatprep.subr.mxu0 0.0
          %5487 = vmatpush1.msra.mxu0 %v5214
          %5488 = vmatprep.subr.mxu0 0.0
          %5489 = vmatpush1.msra.mxu0 %v5215
          %5490 = vmatprep.subr.mxu0 0.0
          %5491 = vmatpush1.msra.mxu0 %v5216
          %5492 = vmatprep.subr.mxu0 0.0
          %5493 = vmatpush1.msra.mxu0 %v5217
          %5494 = vmatprep.subr.mxu0 0.0
          %5495 = vmatpush1.msra.mxu0 %v5218
          %5496 = vmatprep.subr.mxu0 0.0
          %5497 = vmatpush1.msra.mxu0 %v5219
          %5498 = vmatprep.subr.mxu0 0.0
          %5499 = vmatpush1.msra.mxu0 %v5220
          %5500 = vmatprep.subr.mxu0 0.0
          %5501 = vmatpush1.msra.mxu0 %v5221
          %5502 = vmatprep.subr.mxu0 0.0
          %5503 = vmatpush1.msra.mxu0 %v5222
          %5504 = vmatprep.subr.mxu0 0.0
          %5505 = vmatpush1.msra.mxu0 %v5223
          %5506 = vmatprep.subr.mxu0 0.0
          %5507 = vmatpush1.msra.mxu0 %v5224
          %5508 = vmatprep.subr.mxu0 0.0
          %5509 = vmatpush1.msra.mxu0 %v5225
          %5510 = vmatprep.subr.mxu0 0.0
          %5511 = vmatpush1.msra.mxu0 %v5226
          %5512 = vmatprep.subr.mxu0 0.0
          %5513 = vmatpush1.msra.mxu0 %v5227
          %5514 = vmatprep.subr.mxu0 0.0
          %5515 = vmatpush1.msra.mxu0 %v5228
          %5516 = vmatprep.subr.mxu0 0.0
          %5517 = vmatpush1.msra.mxu0 %v5229
          %5518 = vmatprep.subr.mxu0 0.0
          %5519 = vmatpush1.msra.mxu0 %v5230
          %5520 = vmatprep.subr.mxu0 0.0
          %5521 = vmatpush1.msra.mxu0 %v5231
          %5522 = vmatprep.subr.mxu0 0.0
          %5523 = vmatpush1.msra.mxu0 %v5232
          %5524 = vmatprep.subr.mxu0 0.0
          %5525 = vmatpush1.msra.mxu0 %v5233
          %5526 = vmatprep.subr.mxu0 0.0
          %5527 = vmatpush1.msra.mxu0 %v5234
          %5528 = vmatprep.subr.mxu0 0.0
          %5529 = vmatpush1.msra.mxu0 %v5235
          %5530 = vmatprep.subr.mxu0 0.0
          %5531 = vmatpush1.msra.mxu0 %v5236
          %5532 = vmatprep.subr.mxu0 0.0
          %5533 = vmatpush1.msra.mxu0 %v5237
          %5534 = vmatprep.subr.mxu0 0.0
          %5535 = vmatpush1.msra.mxu0 %v5238
          %5536 = vmatprep.subr.mxu0 0.0
          %5537 = vmatpush1.msra.mxu0 %v5239
          %5538 = vmatprep.subr.mxu0 0.0
          %5539 = vmatpush1.msra.mxu0 %v5240
          %5540 = vmatprep.subr.mxu0 0.0
          %5541 = vmatpush1.msra.mxu0 %v5241
          %5542 = vmatprep.subr.mxu0 0.0
          %5543 = vmatpush1.msra.mxu0 %v5242
          %5544 = vmatprep.mubr.f32.mxu0 %v5140
          %5545 = vmatmul.mubr.f32.gmra.mrb[0].mxu0 %v5139
          %v5546 = vpop.f32.mrb[0].mxu0
          %v5547 = vadd.f32 %v5477, %v5546
          %v5548 = vpop.f32.mrb[0].mxu0
          %5549 = vdwg.mxu0
          %5550 = vmatprep.subr.mxu0 0.0
          %5551 = vmatpush1.msra.mxu0 %v5243
          %5552 = vmatprep.subr.mxu0 0.0
          %5553 = vmatpush1.msra.mxu0 %v5244
          %5554 = vmatprep.subr.mxu0 0.0
          %5555 = vmatpush1.msra.mxu0 %v5245
          %5556 = vmatprep.subr.mxu0 0.0
          %5557 = vmatpush1.msra.mxu0 %v5246
          %5558 = vmatprep.subr.mxu0 0.0
          %5559 = vmatpush1.msra.mxu0 %v5247
          %5560 = vmatprep.subr.mxu0 0.0
          %5561 = vmatpush1.msra.mxu0 %v5248
          %5562 = vmatprep.subr.mxu0 0.0
          %5563 = vmatpush1.msra.mxu0 %v5249
          %5564 = vmatprep.subr.mxu0 0.0
          %5565 = vmatpush1.msra.mxu0 %v5250
          %5566 = vmatprep.subr.mxu0 0.0
          %5567 = vmatpush1.msra.mxu0 %v5251
          %5568 = vmatprep.subr.mxu0 0.0
          %5569 = vmatpush1.msra.mxu0 %v5252
          %5570 = vmatprep.subr.mxu0 0.0
          %5571 = vmatpush1.msra.mxu0 %v5253
          %5572 = vmatprep.subr.mxu0 0.0
          %5573 = vmatpush1.msra.mxu0 %v5254
          %5574 = vmatprep.subr.mxu0 0.0
          %5575 = vmatpush1.msra.mxu0 %v5255
          %5576 = vmatprep.subr.mxu0 0.0
          %5577 = vmatpush1.msra.mxu0 %v5256
          %5578 = vmatprep.subr.mxu0 0.0
          %5579 = vmatpush1.msra.mxu0 %v5257
          %5580 = vmatprep.subr.mxu0 0.0
          %5581 = vmatpush1.msra.mxu0 %v5258
          %5582 = vmatprep.subr.mxu0 0.0
          %5583 = vmatpush1.msra.mxu0 %v5259
          %5584 = vmatprep.subr.mxu0 0.0
          %5585 = vmatpush1.msra.mxu0 %v5260
          %5586 = vmatprep.subr.mxu0 0.0
          %5587 = vmatpush1.msra.mxu0 %v5261
          %5588 = vmatprep.subr.mxu0 0.0
          %5589 = vmatpush1.msra.mxu0 %v5262
          %5590 = vmatprep.subr.mxu0 0.0
          %5591 = vmatpush1.msra.mxu0 %v5263
          %5592 = vmatprep.subr.mxu0 0.0
          %5593 = vmatpush1.msra.mxu0 %v5264
          %5594 = vmatprep.subr.mxu0 0.0
          %5595 = vmatpush1.msra.mxu0 %v5265
          %5596 = vmatprep.subr.mxu0 0.0
          %5597 = vmatpush1.msra.mxu0 %v5266
          %5598 = vmatprep.subr.mxu0 0.0
          %5599 = vmatpush1.msra.mxu0 %v5267
          %5600 = vmatprep.subr.mxu0 0.0
          %5601 = vmatpush1.msra.mxu0 %v5268
          %5602 = vmatprep.subr.mxu0 0.0
          %5603 = vmatpush1.msra.mxu0 %v5269
          %5604 = vmatprep.subr.mxu0 0.0
          %5605 = vmatpush1.msra.mxu0 %v5270
          %5606 = vmatprep.subr.mxu0 0.0
          %5607 = vmatpush1.msra.mxu0 %v5271
          %5608 = vmatprep.subr.mxu0 0.0
          %5609 = vmatpush1.msra.mxu0 %v5272
          %5610 = vmatprep.subr.mxu0 0.0
          %5611 = vmatpush1.msra.mxu0 %v5273
          %5612 = vmatprep.subr.mxu0 0.0
          %5613 = vmatpush1.msra.mxu0 %v5274
          %5614 = vmatprep.mubr.f32.mxu0 %v5142
          %5615 = vmatmul.mubr.f32.gmra.mrb[0].mxu0 %v5141
          %v5616 = vpop.f32.mrb[0].mxu0
          %v5617 = vadd.f32 %v5547, %v5616
          %v5618 = vpop.f32.mrb[0].mxu0
          %5619 = vdwg.mxu0
          %5620 = vmatprep.subr.mxu0 0.0
          %5621 = vmatpush1.msra.mxu0 %v5275
          %5622 = vmatprep.subr.mxu0 0.0
          %5623 = vmatpush1.msra.mxu0 %v5276
          %5624 = vmatprep.subr.mxu0 0.0
          %5625 = vmatpush1.msra.mxu0 %v5277
          %5626 = vmatprep.subr.mxu0 0.0
          %5627 = vmatpush1.msra.mxu0 %v5278
          %5628 = vmatprep.subr.mxu0 0.0
          %5629 = vmatpush1.msra.mxu0 %v5279
          %5630 = vmatprep.subr.mxu0 0.0
          %5631 = vmatpush1.msra.mxu0 %v5280
          %5632 = vmatprep.subr.mxu0 0.0
          %5633 = vmatpush1.msra.mxu0 %v5281
          %5634 = vmatprep.subr.mxu0 0.0
          %5635 = vmatpush1.msra.mxu0 %v5282
          %5636 = vmatprep.subr.mxu0 0.0
          %5637 = vmatpush1.msra.mxu0 %v5283
          %5638 = vmatprep.subr.mxu0 0.0
          %5639 = vmatpush1.msra.mxu0 %v5284
          %5640 = vmatprep.subr.mxu0 0.0
          %5641 = vmatpush1.msra.mxu0 %v5285
          %5642 = vmatprep.subr.mxu0 0.0
          %5643 = vmatpush1.msra.mxu0 %v5286
          %5644 = vmatprep.subr.mxu0 0.0
          %5645 = vmatpush1.msra.mxu0 %v5287
          %5646 = vmatprep.subr.mxu0 0.0
          %5647 = vmatpush1.msra.mxu0 %v5288
          %5648 = vmatprep.subr.mxu0 0.0
          %5649 = vmatpush1.msra.mxu0 %v5289
          %5650 = vmatprep.subr.mxu0 0.0
          %5651 = vmatpush1.msra.mxu0 %v5290
          %5652 = vmatprep.subr.mxu0 0.0
          %5653 = vmatpush1.msra.mxu0 %v5291
          %5654 = vmatprep.subr.mxu0 0.0
          %5655 = vmatpush1.msra.mxu0 %v5292
          %5656 = vmatprep.subr.mxu0 0.0
          %5657 = vmatpush1.msra.mxu0 %v5293
          %5658 = vmatprep.subr.mxu0 0.0
          %5659 = vmatpush1.msra.mxu0 %v5294
          %5660 = vmatprep.subr.mxu0 0.0
          %5661 = vmatpush1.msra.mxu0 %v5295
          %5662 = vmatprep.subr.mxu0 0.0
          %5663 = vmatpush1.msra.mxu0 %v5296
          %5664 = vmatprep.subr.mxu0 0.0
          %5665 = vmatpush1.msra.mxu0 %v5297
          %5666 = vmatprep.subr.mxu0 0.0
          %5667 = vmatpush1.msra.mxu0 %v5298
          %5668 = vmatprep.subr.mxu0 0.0
          %5669 = vmatpush1.msra.mxu0 %v5299
          %5670 = vmatprep.subr.mxu0 0.0
          %5671 = vmatpush1.msra.mxu0 %v5300
          %5672 = vmatprep.subr.mxu0 0.0
          %5673 = vmatpush1.msra.mxu0 %v5301
          %5674 = vmatprep.subr.mxu0 0.0
          %5675 = vmatpush1.msra.mxu0 %v5302
          %5676 = vmatprep.subr.mxu0 0.0
          %5677 = vmatpush1.msra.mxu0 %v5303
          %5678 = vmatprep.subr.mxu0 0.0
          %5679 = vmatpush1.msra.mxu0 %v5304
          %5680 = vmatprep.subr.mxu0 0.0
          %5681 = vmatpush1.msra.mxu0 %v5305
          %5682 = vmatprep.subr.mxu0 0.0
          %5683 = vmatpush1.msra.mxu0 %v5306
          %5684 = vmatprep.mubr.f32.mxu0 %v5144
          %5685 = vmatmul.mubr.f32.gmra.mrb[0].mxu0 %v5143
          %v5686 = vpop.f32.mrb[0].mxu0
          %v5687 = vadd.f32 %v5617, %v5686
          %v5688 = vpop.f32.mrb[0].mxu0
          %5689 = vdwg.mxu0
          %5690 = vmatprep.subr.mxu0 0.0
          %5691 = vmatpush1.msra.mxu0 %v5307
          %5692 = vmatprep.subr.mxu0 0.0
          %5693 = vmatpush1.msra.mxu0 %v5308
          %5694 = vmatprep.subr.mxu0 0.0
          %5695 = vmatpush1.msra.mxu0 %v5309
          %5696 = vmatprep.subr.mxu0 0.0
          %5697 = vmatpush1.msra.mxu0 %v5310
          %5698 = vmatprep.subr.mxu0 0.0
          %5699 = vmatpush1.msra.mxu0 %v5311
          %5700 = vmatprep.subr.mxu0 0.0
          %5701 = vmatpush1.msra.mxu0 %v5312
          %5702 = vmatprep.subr.mxu0 0.0
          %5703 = vmatpush1.msra.mxu0 %v5313
          %5704 = vmatprep.subr.mxu0 0.0
          %5705 = vmatpush1.msra.mxu0 %v5314
          %5706 = vmatprep.subr.mxu0 0.0
          %5707 = vmatpush1.msra.mxu0 %v5315
          %5708 = vmatprep.subr.mxu0 0.0
          %5709 = vmatpush1.msra.mxu0 %v5316
          %5710 = vmatprep.subr.mxu0 0.0
          %5711 = vmatpush1.msra.mxu0 %v5317
          %5712 = vmatprep.subr.mxu0 0.0
          %5713 = vmatpush1.msra.mxu0 %v5318
          %5714 = vmatprep.subr.mxu0 0.0
          %5715 = vmatpush1.msra.mxu0 %v5319
          %5716 = vmatprep.subr.mxu0 0.0
          %5717 = vmatpush1.msra.mxu0 %v5320
          %5718 = vmatprep.subr.mxu0 0.0
          %5719 = vmatpush1.msra.mxu0 %v5321
          %5720 = vmatprep.subr.mxu0 0.0
          %5721 = vmatpush1.msra.mxu0 %v5322
          %5722 = vmatprep.subr.mxu0 0.0
          %5723 = vmatpush1.msra.mxu0 %v5323
          %5724 = vmatprep.subr.mxu0 0.0
          %5725 = vmatpush1.msra.mxu0 %v5324
          %5726 = vmatprep.subr.mxu0 0.0
          %5727 = vmatpush1.msra.mxu0 %v5325
          %5728 = vmatprep.subr.mxu0 0.0
          %5729 = vmatpush1.msra.mxu0 %v5326
          %5730 = vmatprep.subr.mxu0 0.0
          %5731 = vmatpush1.msra.mxu0 %v5327
          %5732 = vmatprep.subr.mxu0 0.0
          %5733 = vmatpush1.msra.mxu0 %v5328
          %5734 = vmatprep.subr.mxu0 0.0
          %5735 = vmatpush1.msra.mxu0 %v5329
          %5736 = vmatprep.subr.mxu0 0.0
          %5737 = vmatpush1.msra.mxu0 %v5330
          %5738 = vmatprep.subr.mxu0 0.0
          %5739 = vmatpush1.msra.mxu0 %v5331
          %5740 = vmatprep.subr.mxu0 0.0
          %5741 = vmatpush1.msra.mxu0 %v5332
          %5742 = vmatprep.subr.mxu0 0.0
          %5743 = vmatpush1.msra.mxu0 %v5333
          %5744 = vmatprep.subr.mxu0 0.0
          %5745 = vmatpush1.msra.mxu0 %v5334
          %5746 = vmatprep.subr.mxu0 0.0
          %5747 = vmatpush1.msra.mxu0 %v5335
          %5748 = vmatprep.subr.mxu0 0.0
          %5749 = vmatpush1.msra.mxu0 %v5336
          %5750 = vmatprep.subr.mxu0 0.0
          %5751 = vmatpush1.msra.mxu0 %v5337
          %5752 = vmatprep.subr.mxu0 0.0
          %5753 = vmatpush1.msra.mxu0 %v5338
          %5754 = vmatprep.mubr.f32.mxu0 %v5146
          %5755 = vmatmul.mubr.f32.gmra.mrb[0].mxu0 %v5145
          %v5756 = vpop.f32.mrb[0].mxu0
          %v5757 = vadd.f32 %v5687, %v5756
          %v5758 = vpop.f32.mrb[0].mxu0
          %5759 = vdwg.mxu0
          %5760 = vst [vmem:[%s254] sm:$0x1] %v5757
        $region52: #{tpu_custom_call.1} parent=39 // pred_fallthru
          _
        %s5761 = sand.u32 %s152, 1
        %s5762 = scalar_lea.sflag [#allocation5], %s5761
        %s5763 = sand.u32 %s152, 1
        %s5764 = scalar_lea.vmem [#allocation6], %s5763
        // Predicated region
        $region53: #{tpu_custom_call.1} parent=39 // pred_check
          %p5765 = pneg %p162
        $region54: #{tpu_custom_call.1} parent=39 // pred_check_branch
          %5767 = sbr.rel (%p5765) target = $region56
        $region55: #{tpu_custom_call.1} parent=39 // pred_region
          %s5769 = ssub.s32 16, 16
          %5770 = vsyncadd %s5762, %s5769
          %s5771 = smul.addr %s24, 16
          %s5772 = scalar_lea.hbm %s5, %s5771
          %s5774 = sshll.u32 %s5764, 4
          %s5775 = int_to_ptr.vmem [resolvable:$true] %s5774
          %5777 = dma.vmem_to_hbm [thread:$0]  %s5775, 16, %s5772, %s5762
        $region56: #{tpu_custom_call.1} parent=39 // pred_fallthru
          _
      $region40: #{tpu_custom_call.1} parent=5 // pred_fallthru
        _
      %p5778 = scmp.le.s32.totalorder 2, %s15
      // Predicated region
      $region57: #{tpu_custom_call.1} parent=5 // pred_check
        %p5779 = pneg %p5778
      $region58: #{tpu_custom_call.1} parent=5 // pred_check_branch
        %5781 = sbr.rel (%p5779) target = $region60
      $region59: #{tpu_custom_call.1} parent=5 // pred_region
        %s5782 = ssub.s32 %s15, 2
        // Predicated region
        $region61: #{tpu_custom_call.1} parent=59 // pred_check
          %p5783 = pneg %p168
        $region62: #{tpu_custom_call.1} parent=59 // pred_check_branch
          %5785 = sbr.rel (%p5783) target = $region64
        $region63: #{tpu_custom_call.1} parent=59 // pred_region
          %s5786 = sand.u32 %s153, 1
          %s5787 = scalar_lea.sflag [#allocation5], %s5786
          %s5788 = sand.u32 %s153, 1
          %s5789 = scalar_lea.vmem [#allocation6], %s5788
          %5790 = dma.done %s5787, 16
        $region64: #{tpu_custom_call.1} parent=59 // pred_fallthru
          _
      $region60: #{tpu_custom_call.1} parent=5 // pred_fallthru
        _
    $region6: #{tpu_custom_call.1} parent=1 // loop_footer
      %s19 = sadd.s32 1, %s15
    $region7: #{tpu_custom_call.1} parent=1 // loop_footer_branch
      %14 = sbr.rel target = $region3
    $region8: #{tpu_custom_call.1} parent=1 // loop_exit
      _
    %5791 = vsyncpa [#allocation4], 1
    %s5792 = scalar_lea.sflag [#allocation4], 1
    %5793 = vsyncpa %s5792, 1
    %5794 = vsyncpa [#allocation5], 1
    %s5795 = scalar_lea.sflag [#allocation5], 1
    %5796 = vsyncpa %s5795, 1

</llo_original>
